<compile_context>
chip_gen: v7x
topology: tpu7x:2x2x1
jax: 0.10.0
libtpu: 0.0.40
codegen_flags: <defaults>
</compile_context>

<pallas_src>
import jax
import jax.numpy as jnp
from jax.experimental import pallas as pl
from jax.experimental.pallas import tpu as pltpu


def _transformer_block_kernel(
    v_ref, k_ref, q_ref,            # (H, S, D), (H, S, D), (H, TQ, D)  bf16 head views
    wvT_ref, wkT_ref, wqT_ref,      # (D, D) bf16
    woT_ref, bo_ref,                # (E, E) bf16, (1, E) f32
    g1_ref, be1_ref,                # (1, E) f32   LayerNorm1
    w1T_ref, b1_ref,                # (E, F) bf16, (1, F) f32
    w2T_ref, b2_ref,                # (F, E) bf16, (1, E) f32
    g2_ref, be2_ref,                # (1, E) f32   LayerNorm2
    o_ref,                          # (TQ, E) f32
    merge_ref,                      # (TQ, E) f32 scratch (head merge / residual rebuild)
):
    f32, bf16 = jnp.float32, jnp.bfloat16
    H, S, D = v_ref.shape
    TQ = q_ref.shape[1]
    E = H * D

    q_raw = q_ref[...]              # raw (unprojected) query head view, reused for residual

    # --- Shared per-head (D, D) projections; heads folded into rows (one matmul each) ---
    def proj(x, wT_ref, scale=None):
        h, s, d = x.shape
        y = jnp.dot(x.reshape(h * s, d), wT_ref[...], preferred_element_type=f32)
        if scale is not None:
            y = y * scale           # f32 scale (no extra bf16 rounding of the weight)
        return y.reshape(h, s, d).astype(bf16)

    vh = proj(v_ref[...], wvT_ref)                         # (H, S, D)  bf16
    kh = proj(k_ref[...], wkT_ref)                         # (H, S, D)  bf16
    # Module divides scores by sqrt(embed_size) (not head_dim) — intentional.
    qh = proj(q_raw, wqT_ref, scale=1.0 / (E ** 0.5))      # (H, TQ, D) bf16

    # --- Attention: all heads in one batched contraction; softmax stats in f32 ---
    e = jnp.einsum('hqd,hkd->hqk', qh, kh,
                   preferred_element_type=f32)             # (H, TQ, S)
    e = e - jnp.max(e, axis=-1, keepdims=True)
    p = jnp.exp(e)                                         # unnormalized probs
    l = jnp.sum(p, axis=-1, keepdims=True)                 # (H, TQ, 1)
    oh = jnp.einsum('hqk,hkd->hqd', p.astype(bf16), vh,
                    preferred_element_type=f32)            # (H, TQ, D)
    # Deferred normalization on the small output; exact reciprocal (EUP).
    oh = oh * pl.reciprocal(l)

    # --- fc_out: merge heads along lanes, then ONE (TQ,E)x(E,E) MXU matmul.
    #     The head sum happens as K-dim accumulation inside the MXU. ---
    for h in range(H):
        merge_ref[:, h * D:(h + 1) * D] = oh[h]
    attn = jnp.dot(merge_ref[...].astype(bf16), woT_ref[...],
                   preferred_element_type=f32) + bo_ref[...]

    # TODO(synk): nn.Dropout is identity in eval mode; no dropout applied here.

    # --- Residual rebuilt from the already-DMA'd query head view (no 2nd query DMA) ---
    for h in range(H):
        merge_ref[:, h * D:(h + 1) * D] = q_raw[h].astype(f32)
    x = attn + merge_ref[...]

    # --- LayerNorm 1 (f32) ---
    mu = jnp.mean(x, axis=-1, keepdims=True)
    var = jnp.mean((x - mu) ** 2, axis=-1, keepdims=True)
    x = (x - mu) * jax.lax.rsqrt(var + 1e-5) * g1_ref[...] + be1_ref[...]

    # --- Feed-forward: Linear -> ReLU -> Linear (bf16 matmuls, f32 accumulate) ---
    h1 = jnp.dot(x.astype(bf16), w1T_ref[...],
                 preferred_element_type=f32) + b1_ref[...]
    h1 = jnp.maximum(h1, 0.0)
    ff = jnp.dot(h1.astype(bf16), w2T_ref[...],
                 preferred_element_type=f32) + b2_ref[...]

    # --- Residual + LayerNorm 2 (f32) ---
    y = ff + x
    mu2 = jnp.mean(y, axis=-1, keepdims=True)
    var2 = jnp.mean((y - mu2) ** 2, axis=-1, keepdims=True)
    y = (y - mu2) * jax.lax.rsqrt(var2 + 1e-5) * g2_ref[...] + be2_ref[...]

    o_ref[...] = y


def _vmem_limit_bytes():
    """~75% of the chip's VMEM: ≈96 MiB on v5e/v6e (128 MiB), ≈48 MiB on v7x (64 MiB)."""
    try:
        cap = int(pltpu.get_tpu_info().vmem_capacity_bytes)
    except Exception:
        return 64 * 1024 * 1024
    return max(32 * 1024 * 1024, (cap * 3) // 4)


def transformer_block(values, keys, query, params, *, heads, single_buffer_weights=True):
    N, S, E = query.shape
    H = heads
    D = E // H
    F = params["w1T"].shape[1]

    # Query-tile: 256 fills the 256-wide MXU M dim on v6e/v7x and halves grid steps;
    # 128 matches v5e's MXU; otherwise take the full sequence.
    if S % 256 == 0:
        TQ = 256
    elif S % 128 == 0:
        TQ = 128
    else:
        TQ = S
    nq = S // TQ

    # Wrapper-side layout plumbing: bf16 head-major views (halves activation HBM traffic).
    def to_heads(x):
        return x.reshape(N, S, H, D).transpose(0, 2, 1, 3).astype(jnp.bfloat16)

    v_h, k_h, q_h = to_heads(values), to_heads(keys), to_heads(query)

    const_mode = pl.Buffered(1) if single_buffer_weights else None

    def w_spec(shape):
        rank = len(shape)
        index_map = lambda n, i: (0,) * rank
        if const_mode is not None:
            # Constant block index across the whole grid -> single buffer is enough.
            return pl.BlockSpec(shape, index_map, pipeline_mode=const_mode)
        return pl.BlockSpec(shape, index_map)

    in_specs = [
        pl.BlockSpec((None, H, S, D), lambda n, i: (n, 0, 0, 0)),   # values head view
        pl.BlockSpec((None, H, S, D), lambda n, i: (n, 0, 0, 0)),   # keys head view
        pl.BlockSpec((None, H, TQ, D), lambda n, i: (n, 0, i, 0)),  # query head view
        w_spec((D, D)), w_spec((D, D)), w_spec((D, D)),             # WvT, WkT, WqT
        w_spec((E, E)), w_spec((1, E)),                             # WoT, bo
        w_spec((1, E)), w_spec((1, E)),                             # ln1 gamma, beta
        w_spec((E, F)), w_spec((1, F)),                             # W1T, b1
        w_spec((F, E)), w_spec((1, E)),                             # W2T, b2
        w_spec((1, E)), w_spec((1, E)),                             # ln2 gamma, beta
    ]

    flops = N * S * (6 * E * D + 4 * S * E + 2 * E * E + 4 * E * F)
    transcendentals = N * H * S * S + 3 * N * S
    bytes_accessed = (
        3 * N * S * E * 2 + N * S * E * 4                 # bf16 head views + f32 output
        + 2 * (3 * D * D + E * E + 2 * E * F)             # bf16 weights
        + 4 * (6 * E + F)                                 # f32 biases / LN params
    )

    return pl.pallas_call(
        _transformer_block_kernel,
        out_shape=jax.ShapeDtypeStruct((N, S, E), jnp.float32),
        grid_spec=pltpu.PrefetchScalarGridSpec(
            num_scalar_prefetch=0,
            grid=(N, nq),
            in_specs=in_specs,
            out_specs=pl.BlockSpec((None, TQ, E), lambda n, i: (n, i, 0)),
            scratch_shapes=[pltpu.VMEM((TQ, E), jnp.float32)],
        ),
        compiler_params=pltpu.CompilerParams(
            dimension_semantics=("parallel", "parallel"),
            vmem_limit_bytes=_vmem_limit_bytes(),
        ),
        cost_estimate=pl.CostEstimate(
            flops=int(flops),
            transcendentals=int(transcendentals),
            bytes_accessed=int(bytes_accessed),
        ),
    )(
        v_h, k_h, q_h,
        params["wvT"], params["wkT"], params["wqT"],
        params["woT"], params["bo"],
        params["ln1_g"], params["ln1_b"],
        params["w1T"], params["b1"],
        params["w2T"], params["b2"],
        params["ln2_g"], params["ln2_b"],
    )


def _reference(values, keys, query, params, *, heads):
    """Pure-JAX reference mirroring the PyTorch module in eval mode, with matmul
    operands rounded to bf16 (f32 accumulation) at the same points as the kernel."""
    N, S, E = query.shape
    H = heads
    D = E // H
    bf16, f32 = jnp.bfloat16, jnp.float32
    scale = 1.0 / (E ** 0.5)

    def proj(x, wT, s=None):
        xh = x.reshape(N, S, H, D).astype(bf16)
        y = jnp.einsum("nshd,de->nshe", xh, wT, preferred_element_type=f32)
        if s is not None:
            y = y * s
        return y.astype(bf16)

    v = proj(values, params["wvT"])
    k = proj(keys, params["wkT"])
    q = proj(query, params["wqT"], scale)

    e = jnp.einsum("nqhd,nkhd->nhqk", q, k, preferred_element_type=f32)
    e = e - jnp.max(e, axis=3, keepdims=True)
    p = jnp.exp(e)
    l = jnp.sum(p, axis=3, keepdims=True)                     # (N, H, Q, 1)
    out = jnp.einsum("nhqk,nkhd->nqhd", p.astype(bf16), v,
                     preferred_element_type=f32)              # (N, Q, H, D)
    out = out / jnp.swapaxes(l, 1, 2)                         # deferred normalization
    out = out.reshape(N, S, E).astype(bf16)
    out = jnp.einsum("nse,ef->nsf", out, params["woT"],
                     preferred_element_type=f32) + params["bo"][0]

    q_res = query.astype(bf16).astype(f32)                    # kernel residual is bf16-rounded

    def ln(x, g, b):
        mu = jnp.mean(x, axis=-1, keepdims=True)
        var = jnp.mean((x - mu) ** 2, axis=-1, keepdims=True)
        return (x - mu) / jnp.sqrt(var + 1e-5) * g[0] + b[0]

    x = ln(out + q_res, params["ln1_g"], params["ln1_b"])
    h1 = jnp.einsum("nse,ef->nsf", x.astype(bf16), params["w1T"],
                    preferred_element_type=f32) + params["b1"][0]
    h1 = jnp.maximum(h1, 0.0)
    ff = jnp.einsum("nsf,fe->nse", h1.astype(bf16), params["w2T"],
                    preferred_element_type=f32) + params["b2"][0]
    return ln(ff + x, params["ln2_g"], params["ln2_b"])


def make_params(key, embed_size, heads, forward_expansion):
    E, H = embed_size, heads
    D = E // H
    F = forward_expansion * E
    ks = jax.random.split(key, 8)

    def uni(k, shape, fan_in):
        bound = 1.0 / (fan_in ** 0.5)
        return jax.random.uniform(k, shape, jnp.float32, -bound, bound)

    wv = uni(ks[0], (D, D), D)      # nn.Linear(D, D, bias=False) weights
    wk = uni(ks[1], (D, D), D)
    wq = uni(ks[2], (D, D), D)
    wo = uni(ks[3], (E, E), E)      # fc_out
    bo = uni(ks[4], (E,), E)
    w1 = uni(ks[5], (F, E), E)      # feed-forward
    b1 = uni(ks[6], (F,), E)
    w2 = uni(ks[7], (E, F), F)
    b2 = jnp.zeros((E,), jnp.float32)

    return {
        "wvT": wv.T.astype(jnp.bfloat16),
        "wkT": wk.T.astype(jnp.bfloat16),
        "wqT": wq.T.astype(jnp.bfloat16),      # unscaled; scale applied in f32 in-kernel
        "woT": wo.T.astype(jnp.bfloat16),
        "bo": bo[None, :],
        "ln1_g": jnp.ones((1, E), jnp.float32),
        "ln1_b": jnp.zeros((1, E), jnp.float32),
        "w1T": w1.T.astype(jnp.bfloat16),
        "b1": b1[None, :],
        "w2T": w2.T.astype(jnp.bfloat16),
        "b2": b2[None, :],
        "ln2_g": jnp.ones((1, E), jnp.float32),
        "ln2_b": jnp.zeros((1, E), jnp.float32),
    }


if __name__ == "__main__":
    N, S, E, H, FE = 2, 8, 32, 4, 4   # batch, seq, embed, heads, forward_expansion
    # NOTE: these demo shapes are far below vreg / MXU granularity; real benchmarking
    # should use D >= 128 and S, TQ >= 256 per the perf review.

    key = jax.random.PRNGKey(0)
    k_v, k_k, k_q, k_p = jax.random.split(key, 4)
    values = jax.random.normal(k_v, (N, S, E), jnp.float32)
    keys = jax.random.normal(k_k, (N, S, E), jnp.float32)
    query = jax.random.normal(k_q, (N, S, E), jnp.float32)
    params = make_params(k_p, E, H, FE)

    try:
        out = transformer_block(values, keys, query, params, heads=H,
                                single_buffer_weights=True)
        out = jax.block_until_ready(out)
    except Exception:
        # Fallback if this Pallas build rejects pl.Buffered(1) single-buffering.
        out = transformer_block(values, keys, query, params, heads=H,
                                single_buffer_weights=False)
        out = jax.block_until_ready(out)

    ref = _reference(values, keys, query, params, heads=H)
    assert out.shape == (N, S, E)
    err = float(jnp.max(jnp.abs(out - ref)))
    # Tolerance covers bf16 operand rounding + accumulation-order differences.
    assert jnp.allclose(out, ref, atol=2e-2, rtol=2e-2), err

    print("KERNEL_OK")
</pallas_src>

<mosaic_0001>
module attributes {stable_mosaic.version = 11 : i64} {
  func.func @_transformer_block_kernel(%arg0: i32, %arg1: i32, %arg2: memref<1x4x8x8xbf16, #tpu.memory_space<vmem>>, %arg3: memref<1x4x8x8xbf16, #tpu.memory_space<vmem>>, %arg4: memref<1x4x8x8xbf16, #tpu.memory_space<vmem>>, %arg5: memref<8x8xbf16, #tpu.memory_space<vmem>>, %arg6: memref<8x8xbf16, #tpu.memory_space<vmem>>, %arg7: memref<8x8xbf16, #tpu.memory_space<vmem>>, %arg8: memref<32x32xbf16, #tpu.memory_space<vmem>>, %arg9: memref<1x32xf32, #tpu.memory_space<vmem>>, %arg10: memref<1x32xf32, #tpu.memory_space<vmem>>, %arg11: memref<1x32xf32, #tpu.memory_space<vmem>>, %arg12: memref<32x128xbf16, #tpu.memory_space<vmem>>, %arg13: memref<1x128xf32, #tpu.memory_space<vmem>>, %arg14: memref<128x32xbf16, #tpu.memory_space<vmem>>, %arg15: memref<1x32xf32, #tpu.memory_space<vmem>>, %arg16: memref<1x32xf32, #tpu.memory_space<vmem>>, %arg17: memref<1x32xf32, #tpu.memory_space<vmem>>, %arg18: memref<1x8x32xf32, #tpu.memory_space<vmem>>, %arg19: memref<8x32xf32, #tpu.memory_space<vmem>>) attributes {dimension_semantics = [#tpu.dimension_semantics<parallel>, #tpu.dimension_semantics<parallel>], iteration_bounds = array<i64: 2, 1>, scalar_prefetch = 0 : i64, scratch_operands = 1 : i64, tpu.core_type = #tpu.core_type<tc>, window_params = [{transform_indices = @transform_0, window_bounds = array<i64: 1, 4, 8, 8>}, {transform_indices = @transform_1, window_bounds = array<i64: 1, 4, 8, 8>}, {transform_indices = @transform_2, window_bounds = array<i64: 1, 4, 8, 8>}, {pipeline_mode = #tpu.pipeline_mode<synchronous>, transform_indices = @transform_3, window_bounds = array<i64: 8, 8>}, {pipeline_mode = #tpu.pipeline_mode<synchronous>, transform_indices = @transform_4, window_bounds = array<i64: 8, 8>}, {pipeline_mode = #tpu.pipeline_mode<synchronous>, transform_indices = @transform_5, window_bounds = array<i64: 8, 8>}, {pipeline_mode = #tpu.pipeline_mode<synchronous>, transform_indices = @transform_6, window_bounds = array<i64: 32, 32>}, {pipeline_mode = #tpu.pipeline_mode<synchronous>, transform_indices = @transform_7, window_bounds = array<i64: 1, 32>}, {pipeline_mode = #tpu.pipeline_mode<synchronous>, transform_indices = @transform_8, window_bounds = array<i64: 1, 32>}, {pipeline_mode = #tpu.pipeline_mode<synchronous>, transform_indices = @transform_9, window_bounds = array<i64: 1, 32>}, {pipeline_mode = #tpu.pipeline_mode<synchronous>, transform_indices = @transform_10, window_bounds = array<i64: 32, 128>}, {pipeline_mode = #tpu.pipeline_mode<synchronous>, transform_indices = @transform_11, window_bounds = array<i64: 1, 128>}, {pipeline_mode = #tpu.pipeline_mode<synchronous>, transform_indices = @transform_12, window_bounds = array<i64: 128, 32>}, {pipeline_mode = #tpu.pipeline_mode<synchronous>, transform_indices = @transform_13, window_bounds = array<i64: 1, 32>}, {pipeline_mode = #tpu.pipeline_mode<synchronous>, transform_indices = @transform_14, window_bounds = array<i64: 1, 32>}, {pipeline_mode = #tpu.pipeline_mode<synchronous>, transform_indices = @transform_15, window_bounds = array<i64: 1, 32>}, {transform_indices = @transform_16, window_bounds = array<i64: 1, 8, 32>}]} {
    %c0 = arith.constant 0 : index
    %c0_0 = arith.constant 0 : index
    %c0_1 = arith.constant 0 : index
    %c0_2 = arith.constant 0 : index
    %0 = vector.load %arg4[%c0, %c0_0, %c0_1, %c0_2] : memref<1x4x8x8xbf16, #tpu.memory_space<vmem>>, vector<1x4x8x8xbf16>
    %1 = vector.shape_cast %0 : vector<1x4x8x8xbf16> to vector<4x8x8xbf16>
    %c0_3 = arith.constant 0 : index
    %c0_4 = arith.constant 0 : index
    %c0_5 = arith.constant 0 : index
    %c0_6 = arith.constant 0 : index
    %2 = vector.load %arg2[%c0_3, %c0_4, %c0_5, %c0_6] : memref<1x4x8x8xbf16, #tpu.memory_space<vmem>>, vector<1x4x8x8xbf16>
    %3 = vector.shape_cast %2 : vector<1x4x8x8xbf16> to vector<4x8x8xbf16>
    %4 = vector.shape_cast %3 : vector<4x8x8xbf16> to vector<32x8xbf16>
    %c0_7 = arith.constant 0 : index
    %c0_8 = arith.constant 0 : index
    %5 = vector.load %arg5[%c0_7, %c0_8] : memref<8x8xbf16, #tpu.memory_space<vmem>>, vector<8x8xbf16>
    %cst = arith.constant dense<0.000000e+00> : vector<32x8xf32>
    %6 = tpu.matmul %4, %5, %cst {dimension_numbers = #tpu.dot_dimension_numbers<[1], [0], [0], [1], [0, 0, 1, 1], [], []>} : vector<32x8xbf16>, vector<8x8xbf16>, vector<32x8xf32> -> vector<32x8xf32>
    %7 = vector.shape_cast %6 : vector<32x8xf32> to vector<4x8x8xf32>
    %8 = arith.truncf %7 : vector<4x8x8xf32> to vector<4x8x8xbf16>
    %c0_9 = arith.constant 0 : index
    %c0_10 = arith.constant 0 : index
    %c0_11 = arith.constant 0 : index
    %c0_12 = arith.constant 0 : index
    %9 = vector.load %arg3[%c0_9, %c0_10, %c0_11, %c0_12] : memref<1x4x8x8xbf16, #tpu.memory_space<vmem>>, vector<1x4x8x8xbf16>
    %10 = vector.shape_cast %9 : vector<1x4x8x8xbf16> to vector<4x8x8xbf16>
    %11 = vector.shape_cast %10 : vector<4x8x8xbf16> to vector<32x8xbf16>
    %c0_13 = arith.constant 0 : index
    %c0_14 = arith.constant 0 : index
    %12 = vector.load %arg6[%c0_13, %c0_14] : memref<8x8xbf16, #tpu.memory_space<vmem>>, vector<8x8xbf16>
    %cst_15 = arith.constant dense<0.000000e+00> : vector<32x8xf32>
    %13 = tpu.matmul %11, %12, %cst_15 {dimension_numbers = #tpu.dot_dimension_numbers<[1], [0], [0], [1], [0, 0, 1, 1], [], []>} : vector<32x8xbf16>, vector<8x8xbf16>, vector<32x8xf32> -> vector<32x8xf32>
    %14 = vector.shape_cast %13 : vector<32x8xf32> to vector<4x8x8xf32>
    %15 = arith.truncf %14 : vector<4x8x8xf32> to vector<4x8x8xbf16>
    %16 = vector.shape_cast %1 : vector<4x8x8xbf16> to vector<32x8xbf16>
    %c0_16 = arith.constant 0 : index
    %c0_17 = arith.constant 0 : index
    %17 = vector.load %arg7[%c0_16, %c0_17] : memref<8x8xbf16, #tpu.memory_space<vmem>>, vector<8x8xbf16>
    %cst_18 = arith.constant dense<0.000000e+00> : vector<32x8xf32>
    %18 = tpu.matmul %16, %17, %cst_18 {dimension_numbers = #tpu.dot_dimension_numbers<[1], [0], [0], [1], [0, 0, 1, 1], [], []>} : vector<32x8xbf16>, vector<8x8xbf16>, vector<32x8xf32> -> vector<32x8xf32>
    %cst_19 = arith.constant 0.176776692 : f32
    %19 = vector.broadcast %cst_19 : f32 to vector<32x8xf32>
    %20 = arith.mulf %18, %19 : vector<32x8xf32>
    %21 = vector.shape_cast %20 : vector<32x8xf32> to vector<4x8x8xf32>
    %22 = arith.truncf %21 : vector<4x8x8xf32> to vector<4x8x8xbf16>
    "tpu.trace_start"() <{level = 10 : i32, message = "hqd,hkd->hqk"}> : () -> ()
    %cst_20 = arith.constant dense<0.000000e+00> : vector<4x8x8xf32>
    %23 = tpu.matmul %22, %15, %cst_20 {dimension_numbers = #tpu.dot_dimension_numbers<[2], [2], [1], [1], [0, 0, 0, 1, 1, 1], [0], [0]>} : vector<4x8x8xbf16>, vector<4x8x8xbf16>, vector<4x8x8xf32> -> vector<4x8x8xf32>
    "tpu.trace_stop"() : () -> ()
    %cst_21 = arith.constant dense<0xFF800000> : vector<4x8xf32>
    %24 = vector.multi_reduction <maximumf>, %23, %cst_21 [2] : vector<4x8x8xf32> to vector<4x8xf32>
    %25 = vector.shape_cast %24 : vector<4x8xf32> to vector<4x8x1xf32>
    %26 = vector.broadcast %25 : vector<4x8x1xf32> to vector<4x8x8xf32>
    %27 = arith.subf %23, %26 : vector<4x8x8xf32>
    %28 = math.exp %27 : vector<4x8x8xf32>
    %cst_22 = arith.constant dense<0.000000e+00> : vector<4x8xf32>
    %29 = vector.multi_reduction <add>, %28, %cst_22 [2] : vector<4x8x8xf32> to vector<4x8xf32>
    %30 = vector.shape_cast %29 : vector<4x8xf32> to vector<4x8x1xf32>
    %31 = arith.truncf %28 : vector<4x8x8xf32> to vector<4x8x8xbf16>
    "tpu.trace_start"() <{level = 10 : i32, message = "hqk,hkd->hqd"}> : () -> ()
    %cst_23 = arith.constant dense<0.000000e+00> : vector<4x8x8xf32>
    %32 = tpu.matmul %31, %8, %cst_23 {dimension_numbers = #tpu.dot_dimension_numbers<[2], [1], [1], [2], [0, 0, 0, 1, 1, 2], [0], [0]>} : vector<4x8x8xbf16>, vector<4x8x8xbf16>, vector<4x8x8xf32> -> vector<4x8x8xf32>
    "tpu.trace_stop"() : () -> ()
    %33 = tpu.reciprocal %30 : vector<4x8x1xf32> -> vector<4x8x1xf32>
    %34 = vector.broadcast %33 : vector<4x8x1xf32> to vector<4x8x8xf32>
    %35 = arith.mulf %32, %34 : vector<4x8x8xf32>
    %36 = vector.extract_strided_slice %35 {offsets = [0, 0, 0], sizes = [1, 8, 8], strides = [1, 1, 1]} : vector<4x8x8xf32> to vector<1x8x8xf32>
    %37 = vector.shape_cast %36 : vector<1x8x8xf32> to vector<8x8xf32>
    %c0_24 = arith.constant 0 : index
    %c0_25 = arith.constant 0 : index
    %38 = vector.load %arg19[%c0_24, %c0_25] : memref<8x32xf32, #tpu.memory_space<vmem>>, vector<8x8xf32>
    tpu.vector_store %arg19[%c0_24, %c0_25], %37 {strides = array<i32>} : memref<8x32xf32, #tpu.memory_space<vmem>>, vector<8x8xf32>,
    %39 = vector.extract_strided_slice %35 {offsets = [1, 0, 0], sizes = [1, 8, 8], strides = [1, 1, 1]} : vector<4x8x8xf32> to vector<1x8x8xf32>
    %40 = vector.shape_cast %39 : vector<1x8x8xf32> to vector<8x8xf32>
    %c0_26 = arith.constant 0 : index
    %c8 = arith.constant 8 : index
    %41 = vector.load %arg19[%c0_26, %c8] : memref<8x32xf32, #tpu.memory_space<vmem>>, vector<8x8xf32>
    tpu.vector_store %arg19[%c0_26, %c8], %40 {strides = array<i32>} : memref<8x32xf32, #tpu.memory_space<vmem>>, vector<8x8xf32>,
    %42 = vector.extract_strided_slice %35 {offsets = [2, 0, 0], sizes = [1, 8, 8], strides = [1, 1, 1]} : vector<4x8x8xf32> to vector<1x8x8xf32>
    %43 = vector.shape_cast %42 : vector<1x8x8xf32> to vector<8x8xf32>
    %c0_27 = arith.constant 0 : index
    %c16 = arith.constant 16 : index
    %44 = vector.load %arg19[%c0_27, %c16] : memref<8x32xf32, #tpu.memory_space<vmem>>, vector<8x8xf32>
    tpu.vector_store %arg19[%c0_27, %c16], %43 {strides = array<i32>} : memref<8x32xf32, #tpu.memory_space<vmem>>, vector<8x8xf32>,
    %45 = vector.extract_strided_slice %35 {offsets = [3, 0, 0], sizes = [1, 8, 8], strides = [1, 1, 1]} : vector<4x8x8xf32> to vector<1x8x8xf32>
    %46 = vector.shape_cast %45 : vector<1x8x8xf32> to vector<8x8xf32>
    %c0_28 = arith.constant 0 : index
    %c24 = arith.constant 24 : index
    %47 = vector.load %arg19[%c0_28, %c24] : memref<8x32xf32, #tpu.memory_space<vmem>>, vector<8x8xf32>
    tpu.vector_store %arg19[%c0_28, %c24], %46 {strides = array<i32>} : memref<8x32xf32, #tpu.memory_space<vmem>>, vector<8x8xf32>,
    %c0_29 = arith.constant 0 : index
    %c0_30 = arith.constant 0 : index
    %48 = vector.load %arg19[%c0_29, %c0_30] : memref<8x32xf32, #tpu.memory_space<vmem>>, vector<8x32xf32>
    %49 = arith.truncf %48 : vector<8x32xf32> to vector<8x32xbf16>
    %c0_31 = arith.constant 0 : index
    %c0_32 = arith.constant 0 : index
    %50 = vector.load %arg8[%c0_31, %c0_32] : memref<32x32xbf16, #tpu.memory_space<vmem>>, vector<32x32xbf16>
    %cst_33 = arith.constant dense<0.000000e+00> : vector<8x32xf32>
    %51 = tpu.matmul %49, %50, %cst_33 {dimension_numbers = #tpu.dot_dimension_numbers<[1], [0], [0], [1], [0, 0, 1, 1], [], []>} : vector<8x32xbf16>, vector<32x32xbf16>, vector<8x32xf32> -> vector<8x32xf32>
    %c0_34 = arith.constant 0 : index
    %c0_35 = arith.constant 0 : index
    %52 = vector.load %arg9[%c0_34, %c0_35] : memref<1x32xf32, #tpu.memory_space<vmem>>, vector<1x32xf32>
    %53 = vector.broadcast %52 : vector<1x32xf32> to vector<8x32xf32>
    %54 = arith.addf %51, %53 : vector<8x32xf32>
    %55 = vector.extract_strided_slice %1 {offsets = [0, 0, 0], sizes = [1, 8, 8], strides = [1, 1, 1]} : vector<4x8x8xbf16> to vector<1x8x8xbf16>
    %56 = vector.shape_cast %55 : vector<1x8x8xbf16> to vector<8x8xbf16>
    %57 = arith.extf %56 : vector<8x8xbf16> to vector<8x8xf32>
    %c0_36 = arith.constant 0 : index
    %c0_37 = arith.constant 0 : index
    %58 = vector.load %arg19[%c0_36, %c0_37] : memref<8x32xf32, #tpu.memory_space<vmem>>, vector<8x8xf32>
    tpu.vector_store %arg19[%c0_36, %c0_37], %57 {strides = array<i32>} : memref<8x32xf32, #tpu.memory_space<vmem>>, vector<8x8xf32>,
    %59 = vector.extract_strided_slice %1 {offsets = [1, 0, 0], sizes = [1, 8, 8], strides = [1, 1, 1]} : vector<4x8x8xbf16> to vector<1x8x8xbf16>
    %60 = vector.shape_cast %59 : vector<1x8x8xbf16> to vector<8x8xbf16>
    %61 = arith.extf %60 : vector<8x8xbf16> to vector<8x8xf32>
    %c0_38 = arith.constant 0 : index
    %c8_39 = arith.constant 8 : index
    %62 = vector.load %arg19[%c0_38, %c8_39] : memref<8x32xf32, #tpu.memory_space<vmem>>, vector<8x8xf32>
    tpu.vector_store %arg19[%c0_38, %c8_39], %61 {strides = array<i32>} : memref<8x32xf32, #tpu.memory_space<vmem>>, vector<8x8xf32>,
    %63 = vector.extract_strided_slice %1 {offsets = [2, 0, 0], sizes = [1, 8, 8], strides = [1, 1, 1]} : vector<4x8x8xbf16> to vector<1x8x8xbf16>
    %64 = vector.shape_cast %63 : vector<1x8x8xbf16> to vector<8x8xbf16>
    %65 = arith.extf %64 : vector<8x8xbf16> to vector<8x8xf32>
    %c0_40 = arith.constant 0 : index
    %c16_41 = arith.constant 16 : index
    %66 = vector.load %arg19[%c0_40, %c16_41] : memref<8x32xf32, #tpu.memory_space<vmem>>, vector<8x8xf32>
    tpu.vector_store %arg19[%c0_40, %c16_41], %65 {strides = array<i32>} : memref<8x32xf32, #tpu.memory_space<vmem>>, vector<8x8xf32>,
    %67 = vector.extract_strided_slice %1 {offsets = [3, 0, 0], sizes = [1, 8, 8], strides = [1, 1, 1]} : vector<4x8x8xbf16> to vector<1x8x8xbf16>
    %68 = vector.shape_cast %67 : vector<1x8x8xbf16> to vector<8x8xbf16>
    %69 = arith.extf %68 : vector<8x8xbf16> to vector<8x8xf32>
    %c0_42 = arith.constant 0 : index
    %c24_43 = arith.constant 24 : index
    %70 = vector.load %arg19[%c0_42, %c24_43] : memref<8x32xf32, #tpu.memory_space<vmem>>, vector<8x8xf32>
    tpu.vector_store %arg19[%c0_42, %c24_43], %69 {strides = array<i32>} : memref<8x32xf32, #tpu.memory_space<vmem>>, vector<8x8xf32>,
    %c0_44 = arith.constant 0 : index
    %c0_45 = arith.constant 0 : index
    %71 = vector.load %arg19[%c0_44, %c0_45] : memref<8x32xf32, #tpu.memory_space<vmem>>, vector<8x32xf32>
    %72 = arith.addf %54, %71 : vector<8x32xf32>
    %cst_46 = arith.constant dense<0.000000e+00> : vector<8xf32>
    %73 = vector.multi_reduction <add>, %72, %cst_46 [1] : vector<8x32xf32> to vector<8xf32>
    %74 = vector.shape_cast %73 : vector<8xf32> to vector<8x1xf32>
    %cst_47 = arith.constant 3.200000e+01 : f32
    %75 = vector.broadcast %cst_47 : f32 to vector<8x1xf32>
    %76 = arith.divf %74, %75 : vector<8x1xf32>
    %77 = vector.broadcast %76 : vector<8x1xf32> to vector<8x32xf32>
    %78 = arith.subf %72, %77 : vector<8x32xf32>
    %79 = arith.mulf %78, %78 : vector<8x32xf32>
    %cst_48 = arith.constant dense<0.000000e+00> : vector<8xf32>
    %80 = vector.multi_reduction <add>, %79, %cst_48 [1] : vector<8x32xf32> to vector<8xf32>
    %81 = vector.shape_cast %80 : vector<8xf32> to vector<8x1xf32>
    %cst_49 = arith.constant 3.200000e+01 : f32
    %82 = vector.broadcast %cst_49 : f32 to vector<8x1xf32>
    %83 = arith.divf %81, %82 : vector<8x1xf32>
    %84 = vector.broadcast %76 : vector<8x1xf32> to vector<8x32xf32>
    %85 = arith.subf %72, %84 : vector<8x32xf32>
    %cst_50 = arith.constant 9.99999974E-6 : f32
    %86 = vector.broadcast %cst_50 : f32 to vector<8x1xf32>
    %87 = arith.addf %83, %86 : vector<8x1xf32>
    %88 = math.rsqrt %87 : vector<8x1xf32>
    %89 = vector.broadcast %88 : vector<8x1xf32> to vector<8x32xf32>
    %90 = arith.mulf %85, %89 : vector<8x32xf32>
    %c0_51 = arith.constant 0 : index
    %c0_52 = arith.constant 0 : index
    %91 = vector.load %arg10[%c0_51, %c0_52] : memref<1x32xf32, #tpu.memory_space<vmem>>, vector<1x32xf32>
    %92 = vector.broadcast %91 : vector<1x32xf32> to vector<8x32xf32>
    %93 = arith.mulf %90, %92 : vector<8x32xf32>
    %c0_53 = arith.constant 0 : index
    %c0_54 = arith.constant 0 : index
    %94 = vector.load %arg11[%c0_53, %c0_54] : memref<1x32xf32, #tpu.memory_space<vmem>>, vector<1x32xf32>
    %95 = vector.broadcast %94 : vector<1x32xf32> to vector<8x32xf32>
    %96 = arith.addf %93, %95 : vector<8x32xf32>
    %97 = arith.truncf %96 : vector<8x32xf32> to vector<8x32xbf16>
    %c0_55 = arith.constant 0 : index
    %c0_56 = arith.constant 0 : index
    %98 = vector.load %arg12[%c0_55, %c0_56] : memref<32x128xbf16, #tpu.memory_space<vmem>>, vector<32x128xbf16>
    %cst_57 = arith.constant dense<0.000000e+00> : vector<8x128xf32>
    %99 = tpu.matmul %97, %98, %cst_57 {dimension_numbers = #tpu.dot_dimension_numbers<[1], [0], [0], [1], [0, 0, 1, 1], [], []>} : vector<8x32xbf16>, vector<32x128xbf16>, vector<8x128xf32> -> vector<8x128xf32>
    %c0_58 = arith.constant 0 : index
    %c0_59 = arith.constant 0 : index
    %100 = vector.load %arg13[%c0_58, %c0_59] : memref<1x128xf32, #tpu.memory_space<vmem>>, vector<1x128xf32>
    %101 = vector.broadcast %100 : vector<1x128xf32> to vector<8x128xf32>
    %102 = arith.addf %99, %101 : vector<8x128xf32>
    %cst_60 = arith.constant 0.000000e+00 : f32
    %103 = vector.broadcast %cst_60 : f32 to vector<8x128xf32>
    %104 = arith.maximumf %102, %103 : vector<8x128xf32>
    %105 = arith.truncf %104 : vector<8x128xf32> to vector<8x128xbf16>
    %c0_61 = arith.constant 0 : index
    %c0_62 = arith.constant 0 : index
    %106 = vector.load %arg14[%c0_61, %c0_62] : memref<128x32xbf16, #tpu.memory_space<vmem>>, vector<128x32xbf16>
    %cst_63 = arith.constant dense<0.000000e+00> : vector<8x32xf32>
    %107 = tpu.matmul %105, %106, %cst_63 {dimension_numbers = #tpu.dot_dimension_numbers<[1], [0], [0], [1], [0, 0, 1, 1], [], []>} : vector<8x128xbf16>, vector<128x32xbf16>, vector<8x32xf32> -> vector<8x32xf32>
    %c0_64 = arith.constant 0 : index
    %c0_65 = arith.constant 0 : index
    %108 = vector.load %arg15[%c0_64, %c0_65] : memref<1x32xf32, #tpu.memory_space<vmem>>, vector<1x32xf32>
    %109 = vector.broadcast %108 : vector<1x32xf32> to vector<8x32xf32>
    %110 = arith.addf %107, %109 : vector<8x32xf32>
    %111 = arith.addf %110, %96 : vector<8x32xf32>
    %cst_66 = arith.constant dense<0.000000e+00> : vector<8xf32>
    %112 = vector.multi_reduction <add>, %111, %cst_66 [1] : vector<8x32xf32> to vector<8xf32>
    %113 = vector.shape_cast %112 : vector<8xf32> to vector<8x1xf32>
    %cst_67 = arith.constant 3.200000e+01 : f32
    %114 = vector.broadcast %cst_67 : f32 to vector<8x1xf32>
    %115 = arith.divf %113, %114 : vector<8x1xf32>
    %116 = vector.broadcast %115 : vector<8x1xf32> to vector<8x32xf32>
    %117 = arith.subf %111, %116 : vector<8x32xf32>
    %118 = arith.mulf %117, %117 : vector<8x32xf32>
    %cst_68 = arith.constant dense<0.000000e+00> : vector<8xf32>
    %119 = vector.multi_reduction <add>, %118, %cst_68 [1] : vector<8x32xf32> to vector<8xf32>
    %120 = vector.shape_cast %119 : vector<8xf32> to vector<8x1xf32>
    %cst_69 = arith.constant 3.200000e+01 : f32
    %121 = vector.broadcast %cst_69 : f32 to vector<8x1xf32>
    %122 = arith.divf %120, %121 : vector<8x1xf32>
    %123 = vector.broadcast %115 : vector<8x1xf32> to vector<8x32xf32>
    %124 = arith.subf %111, %123 : vector<8x32xf32>
    %cst_70 = arith.constant 9.99999974E-6 : f32
    %125 = vector.broadcast %cst_70 : f32 to vector<8x1xf32>
    %126 = arith.addf %122, %125 : vector<8x1xf32>
    %127 = math.rsqrt %126 : vector<8x1xf32>
    %128 = vector.broadcast %127 : vector<8x1xf32> to vector<8x32xf32>
    %129 = arith.mulf %124, %128 : vector<8x32xf32>
    %c0_71 = arith.constant 0 : index
    %c0_72 = arith.constant 0 : index
    %130 = vector.load %arg16[%c0_71, %c0_72] : memref<1x32xf32, #tpu.memory_space<vmem>>, vector<1x32xf32>
    %131 = vector.broadcast %130 : vector<1x32xf32> to vector<8x32xf32>
    %132 = arith.mulf %129, %131 : vector<8x32xf32>
    %c0_73 = arith.constant 0 : index
    %c0_74 = arith.constant 0 : index
    %133 = vector.load %arg17[%c0_73, %c0_74] : memref<1x32xf32, #tpu.memory_space<vmem>>, vector<1x32xf32>
    %134 = vector.broadcast %133 : vector<1x32xf32> to vector<8x32xf32>
    %135 = arith.addf %132, %134 : vector<8x32xf32>
    %c0_75 = arith.constant 0 : index
    %c0_76 = arith.constant 0 : index
    %c0_77 = arith.constant 0 : index
    %136 = vector.load %arg18[%c0_75, %c0_76, %c0_77] : memref<1x8x32xf32, #tpu.memory_space<vmem>>, vector<1x8x32xf32>
    %137 = vector.shape_cast %136 : vector<1x8x32xf32> to vector<8x32xf32>
    %138 = vector.shape_cast %135 : vector<8x32xf32> to vector<1x8x32xf32>
    tpu.vector_store %arg18[%c0_75, %c0_76, %c0_77], %138 {strides = array<i32>} : memref<1x8x32xf32, #tpu.memory_space<vmem>>, vector<1x8x32xf32>,
    return
  }
  func.func @transform_0(%arg0: i32, %arg1: i32) -> (i32, i32, i32, i32) {
    %c0_i32 = arith.constant 0 : i32
    %c0_i32_0 = arith.constant 0 : i32
    %c0_i32_1 = arith.constant 0 : i32
    %c0_i32_2 = arith.constant 0 : i32
    return %arg0, %c0_i32, %c0_i32_0, %c0_i32_1 : i32, i32, i32, i32
  }
  func.func @transform_1(%arg0: i32, %arg1: i32) -> (i32, i32, i32, i32) {
    %c0_i32 = arith.constant 0 : i32
    %c0_i32_0 = arith.constant 0 : i32
    %c0_i32_1 = arith.constant 0 : i32
    %c0_i32_2 = arith.constant 0 : i32
    return %arg0, %c0_i32, %c0_i32_0, %c0_i32_1 : i32, i32, i32, i32
  }
  func.func @transform_2(%arg0: i32, %arg1: i32) -> (i32, i32, i32, i32) {
    %c0_i32 = arith.constant 0 : i32
    %c0_i32_0 = arith.constant 0 : i32
    %c0_i32_1 = arith.constant 0 : i32
    return %arg0, %c0_i32, %arg1, %c0_i32_0 : i32, i32, i32, i32
  }
  func.func @transform_3(%arg0: i32, %arg1: i32) -> (i32, i32) {
    %c0_i32 = arith.constant 0 : i32
    %c0_i32_0 = arith.constant 0 : i32
    %c0_i32_1 = arith.constant 0 : i32
    return %c0_i32, %c0_i32_0 : i32, i32
  }
  func.func @transform_4(%arg0: i32, %arg1: i32) -> (i32, i32) {
    %c0_i32 = arith.constant 0 : i32
    %c0_i32_0 = arith.constant 0 : i32
    %c0_i32_1 = arith.constant 0 : i32
    return %c0_i32, %c0_i32_0 : i32, i32
  }
  func.func @transform_5(%arg0: i32, %arg1: i32) -> (i32, i32) {
    %c0_i32 = arith.constant 0 : i32
    %c0_i32_0 = arith.constant 0 : i32
    %c0_i32_1 = arith.constant 0 : i32
    return %c0_i32, %c0_i32_0 : i32, i32
  }
  func.func @transform_6(%arg0: i32, %arg1: i32) -> (i32, i32) {
    %c0_i32 = arith.constant 0 : i32
    %c0_i32_0 = arith.constant 0 : i32
    %c0_i32_1 = arith.constant 0 : i32
    return %c0_i32, %c0_i32_0 : i32, i32
  }
  func.func @transform_7(%arg0: i32, %arg1: i32) -> (i32, i32) {
    %c0_i32 = arith.constant 0 : i32
    %c0_i32_0 = arith.constant 0 : i32
    %c0_i32_1 = arith.constant 0 : i32
    return %c0_i32, %c0_i32_0 : i32, i32
  }
  func.func @transform_8(%arg0: i32, %arg1: i32) -> (i32, i32) {
    %c0_i32 = arith.constant 0 : i32
    %c0_i32_0 = arith.constant 0 : i32
    %c0_i32_1 = arith.constant 0 : i32
    return %c0_i32, %c0_i32_0 : i32, i32
  }
  func.func @transform_9(%arg0: i32, %arg1: i32) -> (i32, i32) {
    %c0_i32 = arith.constant 0 : i32
    %c0_i32_0 = arith.constant 0 : i32
    %c0_i32_1 = arith.constant 0 : i32
    return %c0_i32, %c0_i32_0 : i32, i32
  }
  func.func @transform_10(%arg0: i32, %arg1: i32) -> (i32, i32) {
    %c0_i32 = arith.constant 0 : i32
    %c0_i32_0 = arith.constant 0 : i32
    %c0_i32_1 = arith.constant 0 : i32
    return %c0_i32, %c0_i32_0 : i32, i32
  }
  func.func @transform_11(%arg0: i32, %arg1: i32) -> (i32, i32) {
    %c0_i32 = arith.constant 0 : i32
    %c0_i32_0 = arith.constant 0 : i32
    %c0_i32_1 = arith.constant 0 : i32
    return %c0_i32, %c0_i32_0 : i32, i32
  }
  func.func @transform_12(%arg0: i32, %arg1: i32) -> (i32, i32) {
    %c0_i32 = arith.constant 0 : i32
    %c0_i32_0 = arith.constant 0 : i32
    %c0_i32_1 = arith.constant 0 : i32
    return %c0_i32, %c0_i32_0 : i32, i32
  }
  func.func @transform_13(%arg0: i32, %arg1: i32) -> (i32, i32) {
    %c0_i32 = arith.constant 0 : i32
    %c0_i32_0 = arith.constant 0 : i32
    %c0_i32_1 = arith.constant 0 : i32
    return %c0_i32, %c0_i32_0 : i32, i32
  }
  func.func @transform_14(%arg0: i32, %arg1: i32) -> (i32, i32) {
    %c0_i32 = arith.constant 0 : i32
    %c0_i32_0 = arith.constant 0 : i32
    %c0_i32_1 = arith.constant 0 : i32
    return %c0_i32, %c0_i32_0 : i32, i32
  }
  func.func @transform_15(%arg0: i32, %arg1: i32) -> (i32, i32) {
    %c0_i32 = arith.constant 0 : i32
    %c0_i32_0 = arith.constant 0 : i32
    %c0_i32_1 = arith.constant 0 : i32
    return %c0_i32, %c0_i32_0 : i32, i32
  }
  func.func @transform_16(%arg0: i32, %arg1: i32) -> (i32, i32, i32) {
    %c0_i32 = arith.constant 0 : i32
    %c0_i32_0 = arith.constant 0 : i32
    return %arg0, %arg1, %c0_i32 : i32, i32, i32
  }
}

module attributes {stable_mosaic.version = 11 : i64} {
  func.func @_transformer_block_kernel(%arg0: i32, %arg1: i32, %arg2: memref<1x4x8x8xbf16, #tpu.memory_space<vmem>>, %arg3: memref<1x4x8x8xbf16, #tpu.memory_space<vmem>>, %arg4: memref<1x4x8x8xbf16, #tpu.memory_space<vmem>>, %arg5: memref<8x8xbf16, #tpu.memory_space<vmem>>, %arg6: memref<8x8xbf16, #tpu.memory_space<vmem>>, %arg7: memref<8x8xbf16, #tpu.memory_space<vmem>>, %arg8: memref<32x32xbf16, #tpu.memory_space<vmem>>, %arg9: memref<1x32xf32, #tpu.memory_space<vmem>>, %arg10: memref<1x32xf32, #tpu.memory_space<vmem>>, %arg11: memref<1x32xf32, #tpu.memory_space<vmem>>, %arg12: memref<32x128xbf16, #tpu.memory_space<vmem>>, %arg13: memref<1x128xf32, #tpu.memory_space<vmem>>, %arg14: memref<128x32xbf16, #tpu.memory_space<vmem>>, %arg15: memref<1x32xf32, #tpu.memory_space<vmem>>, %arg16: memref<1x32xf32, #tpu.memory_space<vmem>>, %arg17: memref<1x32xf32, #tpu.memory_space<vmem>>, %arg18: memref<1x8x32xf32, #tpu.memory_space<vmem>>, %arg19: memref<8x32xf32, #tpu.memory_space<vmem>>) attributes {dimension_semantics = [#tpu.dimension_semantics<parallel>, #tpu.dimension_semantics<parallel>], iteration_bounds = array<i64: 2, 1>, scalar_prefetch = 0 : i64, scratch_operands = 1 : i64, tpu.core_type = #tpu.core_type<tc>, window_params = [{transform_indices = @transform_0, window_bounds = array<i64: 1, 4, 8, 8>}, {transform_indices = @transform_1, window_bounds = array<i64: 1, 4, 8, 8>}, {transform_indices = @transform_2, window_bounds = array<i64: 1, 4, 8, 8>}, {pipeline_mode = #tpu.pipeline_mode<synchronous>, transform_indices = @transform_3, window_bounds = array<i64: 8, 8>}, {pipeline_mode = #tpu.pipeline_mode<synchronous>, transform_indices = @transform_4, window_bounds = array<i64: 8, 8>}, {pipeline_mode = #tpu.pipeline_mode<synchronous>, transform_indices = @transform_5, window_bounds = array<i64: 8, 8>}, {pipeline_mode = #tpu.pipeline_mode<synchronous>, transform_indices = @transform_6, window_bounds = array<i64: 32, 32>}, {pipeline_mode = #tpu.pipeline_mode<synchronous>, transform_indices = @transform_7, window_bounds = array<i64: 1, 32>}, {pipeline_mode = #tpu.pipeline_mode<synchronous>, transform_indices = @transform_8, window_bounds = array<i64: 1, 32>}, {pipeline_mode = #tpu.pipeline_mode<synchronous>, transform_indices = @transform_9, window_bounds = array<i64: 1, 32>}, {pipeline_mode = #tpu.pipeline_mode<synchronous>, transform_indices = @transform_10, window_bounds = array<i64: 32, 128>}, {pipeline_mode = #tpu.pipeline_mode<synchronous>, transform_indices = @transform_11, window_bounds = array<i64: 1, 128>}, {pipeline_mode = #tpu.pipeline_mode<synchronous>, transform_indices = @transform_12, window_bounds = array<i64: 128, 32>}, {pipeline_mode = #tpu.pipeline_mode<synchronous>, transform_indices = @transform_13, window_bounds = array<i64: 1, 32>}, {pipeline_mode = #tpu.pipeline_mode<synchronous>, transform_indices = @transform_14, window_bounds = array<i64: 1, 32>}, {pipeline_mode = #tpu.pipeline_mode<synchronous>, transform_indices = @transform_15, window_bounds = array<i64: 1, 32>}, {transform_indices = @transform_16, window_bounds = array<i64: 1, 8, 32>}]} {
    %c0 = arith.constant 0 : index
    %c0_0 = arith.constant 0 : index
    %c0_1 = arith.constant 0 : index
    %c0_2 = arith.constant 0 : index
    %0 = vector.load %arg4[%c0, %c0_0, %c0_1, %c0_2] : memref<1x4x8x8xbf16, #tpu.memory_space<vmem>>, vector<1x4x8x8xbf16>
    %1 = vector.shape_cast %0 : vector<1x4x8x8xbf16> to vector<4x8x8xbf16>
    %c0_3 = arith.constant 0 : index
    %c0_4 = arith.constant 0 : index
    %c0_5 = arith.constant 0 : index
    %c0_6 = arith.constant 0 : index
    %2 = vector.load %arg2[%c0_3, %c0_4, %c0_5, %c0_6] : memref<1x4x8x8xbf16, #tpu.memory_space<vmem>>, vector<1x4x8x8xbf16>
    %3 = vector.shape_cast %2 : vector<1x4x8x8xbf16> to vector<4x8x8xbf16>
    %4 = vector.shape_cast %3 : vector<4x8x8xbf16> to vector<32x8xbf16>
    %c0_7 = arith.constant 0 : index
    %c0_8 = arith.constant 0 : index
    %5 = vector.load %arg5[%c0_7, %c0_8] : memref<8x8xbf16, #tpu.memory_space<vmem>>, vector<8x8xbf16>
    %cst = arith.constant dense<0.000000e+00> : vector<32x8xf32>
    %6 = tpu.matmul %4, %5, %cst {dimension_numbers = #tpu.dot_dimension_numbers<[1], [0], [0], [1], [0, 0, 1, 1], [], []>} : vector<32x8xbf16>, vector<8x8xbf16>, vector<32x8xf32> -> vector<32x8xf32>
    %7 = vector.shape_cast %6 : vector<32x8xf32> to vector<4x8x8xf32>
    %8 = arith.truncf %7 : vector<4x8x8xf32> to vector<4x8x8xbf16>
    %c0_9 = arith.constant 0 : index
    %c0_10 = arith.constant 0 : index
    %c0_11 = arith.constant 0 : index
    %c0_12 = arith.constant 0 : index
    %9 = vector.load %arg3[%c0_9, %c0_10, %c0_11, %c0_12] : memref<1x4x8x8xbf16, #tpu.memory_space<vmem>>, vector<1x4x8x8xbf16>
    %10 = vector.shape_cast %9 : vector<1x4x8x8xbf16> to vector<4x8x8xbf16>
    %11 = vector.shape_cast %10 : vector<4x8x8xbf16> to vector<32x8xbf16>
    %c0_13 = arith.constant 0 : index
    %c0_14 = arith.constant 0 : index
    %12 = vector.load %arg6[%c0_13, %c0_14] : memref<8x8xbf16, #tpu.memory_space<vmem>>, vector<8x8xbf16>
    %cst_15 = arith.constant dense<0.000000e+00> : vector<32x8xf32>
    %13 = tpu.matmul %11, %12, %cst_15 {dimension_numbers = #tpu.dot_dimension_numbers<[1], [0], [0], [1], [0, 0, 1, 1], [], []>} : vector<32x8xbf16>, vector<8x8xbf16>, vector<32x8xf32> -> vector<32x8xf32>
    %14 = vector.shape_cast %13 : vector<32x8xf32> to vector<4x8x8xf32>
    %15 = arith.truncf %14 : vector<4x8x8xf32> to vector<4x8x8xbf16>
    %16 = vector.shape_cast %1 : vector<4x8x8xbf16> to vector<32x8xbf16>
    %c0_16 = arith.constant 0 : index
    %c0_17 = arith.constant 0 : index
    %17 = vector.load %arg7[%c0_16, %c0_17] : memref<8x8xbf16, #tpu.memory_space<vmem>>, vector<8x8xbf16>
    %cst_18 = arith.constant dense<0.000000e+00> : vector<32x8xf32>
    %18 = tpu.matmul %16, %17, %cst_18 {dimension_numbers = #tpu.dot_dimension_numbers<[1], [0], [0], [1], [0, 0, 1, 1], [], []>} : vector<32x8xbf16>, vector<8x8xbf16>, vector<32x8xf32> -> vector<32x8xf32>
    %cst_19 = arith.constant 0.176776692 : f32
    %19 = vector.broadcast %cst_19 : f32 to vector<32x8xf32>
    %20 = arith.mulf %18, %19 : vector<32x8xf32>
    %21 = vector.shape_cast %20 : vector<32x8xf32> to vector<4x8x8xf32>
    %22 = arith.truncf %21 : vector<4x8x8xf32> to vector<4x8x8xbf16>
    "tpu.trace_start"() <{level = 10 : i32, message = "hqd,hkd->hqk"}> : () -> ()
    %cst_20 = arith.constant dense<0.000000e+00> : vector<4x8x8xf32>
    %23 = tpu.matmul %22, %15, %cst_20 {dimension_numbers = #tpu.dot_dimension_numbers<[2], [2], [1], [1], [0, 0, 0, 1, 1, 1], [0], [0]>} : vector<4x8x8xbf16>, vector<4x8x8xbf16>, vector<4x8x8xf32> -> vector<4x8x8xf32>
    "tpu.trace_stop"() : () -> ()
    %cst_21 = arith.constant dense<0xFF800000> : vector<4x8xf32>
    %24 = vector.multi_reduction <maximumf>, %23, %cst_21 [2] : vector<4x8x8xf32> to vector<4x8xf32>
    %25 = vector.shape_cast %24 : vector<4x8xf32> to vector<4x8x1xf32>
    %26 = vector.broadcast %25 : vector<4x8x1xf32> to vector<4x8x8xf32>
    %27 = arith.subf %23, %26 : vector<4x8x8xf32>
    %28 = math.exp %27 : vector<4x8x8xf32>
    %cst_22 = arith.constant dense<0.000000e+00> : vector<4x8xf32>
    %29 = vector.multi_reduction <add>, %28, %cst_22 [2] : vector<4x8x8xf32> to vector<4x8xf32>
    %30 = vector.shape_cast %29 : vector<4x8xf32> to vector<4x8x1xf32>
    %31 = arith.truncf %28 : vector<4x8x8xf32> to vector<4x8x8xbf16>
    "tpu.trace_start"() <{level = 10 : i32, message = "hqk,hkd->hqd"}> : () -> ()
    %cst_23 = arith.constant dense<0.000000e+00> : vector<4x8x8xf32>
    %32 = tpu.matmul %31, %8, %cst_23 {dimension_numbers = #tpu.dot_dimension_numbers<[2], [1], [1], [2], [0, 0, 0, 1, 1, 2], [0], [0]>} : vector<4x8x8xbf16>, vector<4x8x8xbf16>, vector<4x8x8xf32> -> vector<4x8x8xf32>
    "tpu.trace_stop"() : () -> ()
    %33 = tpu.reciprocal %30 : vector<4x8x1xf32> -> vector<4x8x1xf32>
    %34 = vector.broadcast %33 : vector<4x8x1xf32> to vector<4x8x8xf32>
    %35 = arith.mulf %32, %34 : vector<4x8x8xf32>
    %36 = vector.extract_strided_slice %35 {offsets = [0, 0, 0], sizes = [1, 8, 8], strides = [1, 1, 1]} : vector<4x8x8xf32> to vector<1x8x8xf32>
    %37 = vector.shape_cast %36 : vector<1x8x8xf32> to vector<8x8xf32>
    %c0_24 = arith.constant 0 : index
    %c0_25 = arith.constant 0 : index
    %38 = vector.load %arg19[%c0_24, %c0_25] : memref<8x32xf32, #tpu.memory_space<vmem>>, vector<8x8xf32>
    tpu.vector_store %arg19[%c0_24, %c0_25], %37 {strides = array<i32>} : memref<8x32xf32, #tpu.memory_space<vmem>>, vector<8x8xf32>,
    %39 = vector.extract_strided_slice %35 {offsets = [1, 0, 0], sizes = [1, 8, 8], strides = [1, 1, 1]} : vector<4x8x8xf32> to vector<1x8x8xf32>
    %40 = vector.shape_cast %39 : vector<1x8x8xf32> to vector<8x8xf32>
    %c0_26 = arith.constant 0 : index
    %c8 = arith.constant 8 : index
    %41 = vector.load %arg19[%c0_26, %c8] : memref<8x32xf32, #tpu.memory_space<vmem>>, vector<8x8xf32>
    tpu.vector_store %arg19[%c0_26, %c8], %40 {strides = array<i32>} : memref<8x32xf32, #tpu.memory_space<vmem>>, vector<8x8xf32>,
    %42 = vector.extract_strided_slice %35 {offsets = [2, 0, 0], sizes = [1, 8, 8], strides = [1, 1, 1]} : vector<4x8x8xf32> to vector<1x8x8xf32>
    %43 = vector.shape_cast %42 : vector<1x8x8xf32> to vector<8x8xf32>
    %c0_27 = arith.constant 0 : index
    %c16 = arith.constant 16 : index
    %44 = vector.load %arg19[%c0_27, %c16] : memref<8x32xf32, #tpu.memory_space<vmem>>, vector<8x8xf32>
    tpu.vector_store %arg19[%c0_27, %c16], %43 {strides = array<i32>} : memref<8x32xf32, #tpu.memory_space<vmem>>, vector<8x8xf32>,
    %45 = vector.extract_strided_slice %35 {offsets = [3, 0, 0], sizes = [1, 8, 8], strides = [1, 1, 1]} : vector<4x8x8xf32> to vector<1x8x8xf32>
    %46 = vector.shape_cast %45 : vector<1x8x8xf32> to vector<8x8xf32>
    %c0_28 = arith.constant 0 : index
    %c24 = arith.constant 24 : index
    %47 = vector.load %arg19[%c0_28, %c24] : memref<8x32xf32, #tpu.memory_space<vmem>>, vector<8x8xf32>
    tpu.vector_store %arg19[%c0_28, %c24], %46 {strides = array<i32>} : memref<8x32xf32, #tpu.memory_space<vmem>>, vector<8x8xf32>,
    %c0_29 = arith.constant 0 : index
    %c0_30 = arith.constant 0 : index
    %48 = vector.load %arg19[%c0_29, %c0_30] : memref<8x32xf32, #tpu.memory_space<vmem>>, vector<8x32xf32>
    %49 = arith.truncf %48 : vector<8x32xf32> to vector<8x32xbf16>
    %c0_31 = arith.constant 0 : index
    %c0_32 = arith.constant 0 : index
    %50 = vector.load %arg8[%c0_31, %c0_32] : memref<32x32xbf16, #tpu.memory_space<vmem>>, vector<32x32xbf16>
    %cst_33 = arith.constant dense<0.000000e+00> : vector<8x32xf32>
    %51 = tpu.matmul %49, %50, %cst_33 {dimension_numbers = #tpu.dot_dimension_numbers<[1], [0], [0], [1], [0, 0, 1, 1], [], []>} : vector<8x32xbf16>, vector<32x32xbf16>, vector<8x32xf32> -> vector<8x32xf32>
    %c0_34 = arith.constant 0 : index
    %c0_35 = arith.constant 0 : index
    %52 = vector.load %arg9[%c0_34, %c0_35] : memref<1x32xf32, #tpu.memory_space<vmem>>, vector<1x32xf32>
    %53 = vector.broadcast %52 : vector<1x32xf32> to vector<8x32xf32>
    %54 = arith.addf %51, %53 : vector<8x32xf32>
    %55 = vector.extract_strided_slice %1 {offsets = [0, 0, 0], sizes = [1, 8, 8], strides = [1, 1, 1]} : vector<4x8x8xbf16> to vector<1x8x8xbf16>
    %56 = vector.shape_cast %55 : vector<1x8x8xbf16> to vector<8x8xbf16>
    %57 = arith.extf %56 : vector<8x8xbf16> to vector<8x8xf32>
    %c0_36 = arith.constant 0 : index
    %c0_37 = arith.constant 0 : index
    %58 = vector.load %arg19[%c0_36, %c0_37] : memref<8x32xf32, #tpu.memory_space<vmem>>, vector<8x8xf32>
    tpu.vector_store %arg19[%c0_36, %c0_37], %57 {strides = array<i32>} : memref<8x32xf32, #tpu.memory_space<vmem>>, vector<8x8xf32>,
    %59 = vector.extract_strided_slice %1 {offsets = [1, 0, 0], sizes = [1, 8, 8], strides = [1, 1, 1]} : vector<4x8x8xbf16> to vector<1x8x8xbf16>
    %60 = vector.shape_cast %59 : vector<1x8x8xbf16> to vector<8x8xbf16>
    %61 = arith.extf %60 : vector<8x8xbf16> to vector<8x8xf32>
    %c0_38 = arith.constant 0 : index
    %c8_39 = arith.constant 8 : index
    %62 = vector.load %arg19[%c0_38, %c8_39] : memref<8x32xf32, #tpu.memory_space<vmem>>, vector<8x8xf32>
    tpu.vector_store %arg19[%c0_38, %c8_39], %61 {strides = array<i32>} : memref<8x32xf32, #tpu.memory_space<vmem>>, vector<8x8xf32>,
    %63 = vector.extract_strided_slice %1 {offsets = [2, 0, 0], sizes = [1, 8, 8], strides = [1, 1, 1]} : vector<4x8x8xbf16> to vector<1x8x8xbf16>
    %64 = vector.shape_cast %63 : vector<1x8x8xbf16> to vector<8x8xbf16>
    %65 = arith.extf %64 : vector<8x8xbf16> to vector<8x8xf32>
    %c0_40 = arith.constant 0 : index
    %c16_41 = arith.constant 16 : index
    %66 = vector.load %arg19[%c0_40, %c16_41] : memref<8x32xf32, #tpu.memory_space<vmem>>, vector<8x8xf32>
    tpu.vector_store %arg19[%c0_40, %c16_41], %65 {strides = array<i32>} : memref<8x32xf32, #tpu.memory_space<vmem>>, vector<8x8xf32>,
    %67 = vector.extract_strided_slice %1 {offsets = [3, 0, 0], sizes = [1, 8, 8], strides = [1, 1, 1]} : vector<4x8x8xbf16> to vector<1x8x8xbf16>
    %68 = vector.shape_cast %67 : vector<1x8x8xbf16> to vector<8x8xbf16>
    %69 = arith.extf %68 : vector<8x8xbf16> to vector<8x8xf32>
    %c0_42 = arith.constant 0 : index
    %c24_43 = arith.constant 24 : index
    %70 = vector.load %arg19[%c0_42, %c24_43] : memref<8x32xf32, #tpu.memory_space<vmem>>, vector<8x8xf32>
    tpu.vector_store %arg19[%c0_42, %c24_43], %69 {strides = array<i32>} : memref<8x32xf32, #tpu.memory_space<vmem>>, vector<8x8xf32>,
    %c0_44 = arith.constant 0 : index
    %c0_45 = arith.constant 0 : index
    %71 = vector.load %arg19[%c0_44, %c0_45] : memref<8x32xf32, #tpu.memory_space<vmem>>, vector<8x32xf32>
    %72 = arith.addf %54, %71 : vector<8x32xf32>
    %cst_46 = arith.constant dense<0.000000e+00> : vector<8xf32>
    %73 = vector.multi_reduction <add>, %72, %cst_46 [1] : vector<8x32xf32> to vector<8xf32>
    %74 = vector.shape_cast %73 : vector<8xf32> to vector<8x1xf32>
    %cst_47 = arith.constant 3.200000e+01 : f32
    %75 = vector.broadcast %cst_47 : f32 to vector<8x1xf32>
    %76 = arith.divf %74, %75 : vector<8x1xf32>
    %77 = vector.broadcast %76 : vector<8x1xf32> to vector<8x32xf32>
    %78 = arith.subf %72, %77 : vector<8x32xf32>
    %79 = arith.mulf %78, %78 : vector<8x32xf32>
    %cst_48 = arith.constant dense<0.000000e+00> : vector<8xf32>
    %80 = vector.multi_reduction <add>, %79, %cst_48 [1] : vector<8x32xf32> to vector<8xf32>
    %81 = vector.shape_cast %80 : vector<8xf32> to vector<8x1xf32>
    %cst_49 = arith.constant 3.200000e+01 : f32
    %82 = vector.broadcast %cst_49 : f32 to vector<8x1xf32>
    %83 = arith.divf %81, %82 : vector<8x1xf32>
    %84 = vector.broadcast %76 : vector<8x1xf32> to vector<8x32xf32>
    %85 = arith.subf %72, %84 : vector<8x32xf32>
    %cst_50 = arith.constant 9.99999974E-6 : f32
    %86 = vector.broadcast %cst_50 : f32 to vector<8x1xf32>
    %87 = arith.addf %83, %86 : vector<8x1xf32>
    %88 = math.rsqrt %87 : vector<8x1xf32>
    %89 = vector.broadcast %88 : vector<8x1xf32> to vector<8x32xf32>
    %90 = arith.mulf %85, %89 : vector<8x32xf32>
    %c0_51 = arith.constant 0 : index
    %c0_52 = arith.constant 0 : index
    %91 = vector.load %arg10[%c0_51, %c0_52] : memref<1x32xf32, #tpu.memory_space<vmem>>, vector<1x32xf32>
    %92 = vector.broadcast %91 : vector<1x32xf32> to vector<8x32xf32>
    %93 = arith.mulf %90, %92 : vector<8x32xf32>
    %c0_53 = arith.constant 0 : index
    %c0_54 = arith.constant 0 : index
    %94 = vector.load %arg11[%c0_53, %c0_54] : memref<1x32xf32, #tpu.memory_space<vmem>>, vector<1x32xf32>
    %95 = vector.broadcast %94 : vector<1x32xf32> to vector<8x32xf32>
    %96 = arith.addf %93, %95 : vector<8x32xf32>
    %97 = arith.truncf %96 : vector<8x32xf32> to vector<8x32xbf16>
    %c0_55 = arith.constant 0 : index
    %c0_56 = arith.constant 0 : index
    %98 = vector.load %arg12[%c0_55, %c0_56] : memref<32x128xbf16, #tpu.memory_space<vmem>>, vector<32x128xbf16>
    %cst_57 = arith.constant dense<0.000000e+00> : vector<8x128xf32>
    %99 = tpu.matmul %97, %98, %cst_57 {dimension_numbers = #tpu.dot_dimension_numbers<[1], [0], [0], [1], [0, 0, 1, 1], [], []>} : vector<8x32xbf16>, vector<32x128xbf16>, vector<8x128xf32> -> vector<8x128xf32>
    %c0_58 = arith.constant 0 : index
    %c0_59 = arith.constant 0 : index
    %100 = vector.load %arg13[%c0_58, %c0_59] : memref<1x128xf32, #tpu.memory_space<vmem>>, vector<1x128xf32>
    %101 = vector.broadcast %100 : vector<1x128xf32> to vector<8x128xf32>
    %102 = arith.addf %99, %101 : vector<8x128xf32>
    %cst_60 = arith.constant 0.000000e+00 : f32
    %103 = vector.broadcast %cst_60 : f32 to vector<8x128xf32>
    %104 = arith.maximumf %102, %103 : vector<8x128xf32>
    %105 = arith.truncf %104 : vector<8x128xf32> to vector<8x128xbf16>
    %c0_61 = arith.constant 0 : index
    %c0_62 = arith.constant 0 : index
    %106 = vector.load %arg14[%c0_61, %c0_62] : memref<128x32xbf16, #tpu.memory_space<vmem>>, vector<128x32xbf16>
    %cst_63 = arith.constant dense<0.000000e+00> : vector<8x32xf32>
    %107 = tpu.matmul %105, %106, %cst_63 {dimension_numbers = #tpu.dot_dimension_numbers<[1], [0], [0], [1], [0, 0, 1, 1], [], []>} : vector<8x128xbf16>, vector<128x32xbf16>, vector<8x32xf32> -> vector<8x32xf32>
    %c0_64 = arith.constant 0 : index
    %c0_65 = arith.constant 0 : index
    %108 = vector.load %arg15[%c0_64, %c0_65] : memref<1x32xf32, #tpu.memory_space<vmem>>, vector<1x32xf32>
    %109 = vector.broadcast %108 : vector<1x32xf32> to vector<8x32xf32>
    %110 = arith.addf %107, %109 : vector<8x32xf32>
    %111 = arith.addf %110, %96 : vector<8x32xf32>
    %cst_66 = arith.constant dense<0.000000e+00> : vector<8xf32>
    %112 = vector.multi_reduction <add>, %111, %cst_66 [1] : vector<8x32xf32> to vector<8xf32>
    %113 = vector.shape_cast %112 : vector<8xf32> to vector<8x1xf32>
    %cst_67 = arith.constant 3.200000e+01 : f32
    %114 = vector.broadcast %cst_67 : f32 to vector<8x1xf32>
    %115 = arith.divf %113, %114 : vector<8x1xf32>
    %116 = vector.broadcast %115 : vector<8x1xf32> to vector<8x32xf32>
    %117 = arith.subf %111, %116 : vector<8x32xf32>
    %118 = arith.mulf %117, %117 : vector<8x32xf32>
    %cst_68 = arith.constant dense<0.000000e+00> : vector<8xf32>
    %119 = vector.multi_reduction <add>, %118, %cst_68 [1] : vector<8x32xf32> to vector<8xf32>
    %120 = vector.shape_cast %119 : vector<8xf32> to vector<8x1xf32>
    %cst_69 = arith.constant 3.200000e+01 : f32
    %121 = vector.broadcast %cst_69 : f32 to vector<8x1xf32>
    %122 = arith.divf %120, %121 : vector<8x1xf32>
    %123 = vector.broadcast %115 : vector<8x1xf32> to vector<8x32xf32>
    %124 = arith.subf %111, %123 : vector<8x32xf32>
    %cst_70 = arith.constant 9.99999974E-6 : f32
    %125 = vector.broadcast %cst_70 : f32 to vector<8x1xf32>
    %126 = arith.addf %122, %125 : vector<8x1xf32>
    %127 = math.rsqrt %126 : vector<8x1xf32>
    %128 = vector.broadcast %127 : vector<8x1xf32> to vector<8x32xf32>
    %129 = arith.mulf %124, %128 : vector<8x32xf32>
    %c0_71 = arith.constant 0 : index
    %c0_72 = arith.constant 0 : index
    %130 = vector.load %arg16[%c0_71, %c0_72] : memref<1x32xf32, #tpu.memory_space<vmem>>, vector<1x32xf32>
    %131 = vector.broadcast %130 : vector<1x32xf32> to vector<8x32xf32>
    %132 = arith.mulf %129, %131 : vector<8x32xf32>
    %c0_73 = arith.constant 0 : index
    %c0_74 = arith.constant 0 : index
    %133 = vector.load %arg17[%c0_73, %c0_74] : memref<1x32xf32, #tpu.memory_space<vmem>>, vector<1x32xf32>
    %134 = vector.broadcast %133 : vector<1x32xf32> to vector<8x32xf32>
    %135 = arith.addf %132, %134 : vector<8x32xf32>
    %c0_75 = arith.constant 0 : index
    %c0_76 = arith.constant 0 : index
    %c0_77 = arith.constant 0 : index
    %136 = vector.load %arg18[%c0_75, %c0_76, %c0_77] : memref<1x8x32xf32, #tpu.memory_space<vmem>>, vector<1x8x32xf32>
    %137 = vector.shape_cast %136 : vector<1x8x32xf32> to vector<8x32xf32>
    %138 = vector.shape_cast %135 : vector<8x32xf32> to vector<1x8x32xf32>
    tpu.vector_store %arg18[%c0_75, %c0_76, %c0_77], %138 {strides = array<i32>} : memref<1x8x32xf32, #tpu.memory_space<vmem>>, vector<1x8x32xf32>,
    return
  }
  func.func @transform_0(%arg0: i32, %arg1: i32) -> (i32, i32, i32, i32) {
    %c0_i32 = arith.constant 0 : i32
    %c0_i32_0 = arith.constant 0 : i32
    %c0_i32_1 = arith.constant 0 : i32
    %c0_i32_2 = arith.constant 0 : i32
    return %arg0, %c0_i32, %c0_i32_0, %c0_i32_1 : i32, i32, i32, i32
  }
  func.func @transform_1(%arg0: i32, %arg1: i32) -> (i32, i32, i32, i32) {
    %c0_i32 = arith.constant 0 : i32
    %c0_i32_0 = arith.constant 0 : i32
    %c0_i32_1 = arith.constant 0 : i32
    %c0_i32_2 = arith.constant 0 : i32
    return %arg0, %c0_i32, %c0_i32_0, %c0_i32_1 : i32, i32, i32, i32
  }
  func.func @transform_2(%arg0: i32, %arg1: i32) -> (i32, i32, i32, i32) {
    %c0_i32 = arith.constant 0 : i32
    %c0_i32_0 = arith.constant 0 : i32
    %c0_i32_1 = arith.constant 0 : i32
    return %arg0, %c0_i32, %arg1, %c0_i32_0 : i32, i32, i32, i32
  }
  func.func @transform_3(%arg0: i32, %arg1: i32) -> (i32, i32) {
    %c0_i32 = arith.constant 0 : i32
    %c0_i32_0 = arith.constant 0 : i32
    %c0_i32_1 = arith.constant 0 : i32
    return %c0_i32, %c0_i32_0 : i32, i32
  }
  func.func @transform_4(%arg0: i32, %arg1: i32) -> (i32, i32) {
    %c0_i32 = arith.constant 0 : i32
    %c0_i32_0 = arith.constant 0 : i32
    %c0_i32_1 = arith.constant 0 : i32
    return %c0_i32, %c0_i32_0 : i32, i32
  }
  func.func @transform_5(%arg0: i32, %arg1: i32) -> (i32, i32) {
    %c0_i32 = arith.constant 0 : i32
    %c0_i32_0 = arith.constant 0 : i32
    %c0_i32_1 = arith.constant 0 : i32
    return %c0_i32, %c0_i32_0 : i32, i32
  }
  func.func @transform_6(%arg0: i32, %arg1: i32) -> (i32, i32) {
    %c0_i32 = arith.constant 0 : i32
    %c0_i32_0 = arith.constant 0 : i32
    %c0_i32_1 = arith.constant 0 : i32
    return %c0_i32, %c0_i32_0 : i32, i32
  }
  func.func @transform_7(%arg0: i32, %arg1: i32) -> (i32, i32) {
    %c0_i32 = arith.constant 0 : i32
    %c0_i32_0 = arith.constant 0 : i32
    %c0_i32_1 = arith.constant 0 : i32
    return %c0_i32, %c0_i32_0 : i32, i32
  }
  func.func @transform_8(%arg0: i32, %arg1: i32) -> (i32, i32) {
    %c0_i32 = arith.constant 0 : i32
    %c0_i32_0 = arith.constant 0 : i32
    %c0_i32_1 = arith.constant 0 : i32
    return %c0_i32, %c0_i32_0 : i32, i32
  }
  func.func @transform_9(%arg0: i32, %arg1: i32) -> (i32, i32) {
    %c0_i32 = arith.constant 0 : i32
    %c0_i32_0 = arith.constant 0 : i32
    %c0_i32_1 = arith.constant 0 : i32
    return %c0_i32, %c0_i32_0 : i32, i32
  }
  func.func @transform_10(%arg0: i32, %arg1: i32) -> (i32, i32) {
    %c0_i32 = arith.constant 0 : i32
    %c0_i32_0 = arith.constant 0 : i32
    %c0_i32_1 = arith.constant 0 : i32
    return %c0_i32, %c0_i32_0 : i32, i32
  }
  func.func @transform_11(%arg0: i32, %arg1: i32) -> (i32, i32) {
    %c0_i32 = arith.constant 0 : i32
    %c0_i32_0 = arith.constant 0 : i32
    %c0_i32_1 = arith.constant 0 : i32
    return %c0_i32, %c0_i32_0 : i32, i32
  }
  func.func @transform_12(%arg0: i32, %arg1: i32) -> (i32, i32) {
    %c0_i32 = arith.constant 0 : i32
    %c0_i32_0 = arith.constant 0 : i32
    %c0_i32_1 = arith.constant 0 : i32
    return %c0_i32, %c0_i32_0 : i32, i32
  }
  func.func @transform_13(%arg0: i32, %arg1: i32) -> (i32, i32) {
    %c0_i32 = arith.constant 0 : i32
    %c0_i32_0 = arith.constant 0 : i32
    %c0_i32_1 = arith.constant 0 : i32
    return %c0_i32, %c0_i32_0 : i32, i32
  }
  func.func @transform_14(%arg0: i32, %arg1: i32) -> (i32, i32) {
    %c0_i32 = arith.constant 0 : i32
    %c0_i32_0 = arith.constant 0 : i32
    %c0_i32_1 = arith.constant 0 : i32
    return %c0_i32, %c0_i32_0 : i32, i32
  }
  func.func @transform_15(%arg0: i32, %arg1: i32) -> (i32, i32) {
    %c0_i32 = arith.constant 0 : i32
    %c0_i32_0 = arith.constant 0 : i32
    %c0_i32_1 = arith.constant 0 : i32
    return %c0_i32, %c0_i32_0 : i32, i32
  }
  func.func @transform_16(%arg0: i32, %arg1: i32) -> (i32, i32, i32) {
    %c0_i32 = arith.constant 0 : i32
    %c0_i32_0 = arith.constant 0 : i32
    return %arg0, %arg1, %c0_i32 : i32, i32, i32
  }
}

</mosaic_0001>

<llo_original>
// kernel: tpu_custom_call.1
$region0: #{tpu_custom_call.1}
  #allocation0 [shape = 'u32[]', space=smem, size = 0x4, offset = 0x4, fixed_abs, tag = 'smem constant byte address 0x4 - core index']
  #allocation1 [shape = 'u32[144,128]{1,0:T(1,128)}', space=vmem, size = 0x12000, scoped, tag = 'internal scratch']
  #allocation2 [shape = 'f32[8,32]{1,0:T(8,128)}', space=vmem, size = 0x1000, scoped, tag = 'scratch operand']
  %s0 = inlined_call_operand.hbm [shape: bf16[2,4,8,8], index: 0, kind: input, shape index: {}]
  %s1 = inlined_call_operand.hbm [shape: bf16[2,4,8,8], index: 1, kind: input, shape index: {}]
  %s2 = inlined_call_operand.hbm [shape: bf16[2,4,8,8], index: 2, kind: input, shape index: {}]
  %s3 = inlined_call_operand.hbm [shape: bf16[8,8], index: 3, kind: input, shape index: {}]
  %s4 = inlined_call_operand.hbm [shape: bf16[8,8], index: 4, kind: input, shape index: {}]
  %s5 = inlined_call_operand.hbm [shape: bf16[8,8], index: 5, kind: input, shape index: {}]
  %s6 = inlined_call_operand.hbm [shape: bf16[32,32], index: 6, kind: input, shape index: {}]
  %s7 = inlined_call_operand.hbm [shape: f32[1,32], index: 7, kind: input, shape index: {}]
  %s8 = inlined_call_operand.hbm [shape: f32[1,32], index: 8, kind: input, shape index: {}]
  %s9 = inlined_call_operand.hbm [shape: f32[1,32], index: 9, kind: input, shape index: {}]
  %s10 = inlined_call_operand.hbm [shape: bf16[32,128], index: 10, kind: input, shape index: {}]
  %s11 = inlined_call_operand.hbm [shape: f32[1,128], index: 11, kind: input, shape index: {}]
  %s12 = inlined_call_operand.hbm [shape: bf16[128,32], index: 12, kind: input, shape index: {}]
  %s13 = inlined_call_operand.hbm [shape: f32[1,32], index: 13, kind: input, shape index: {}]
  %s14 = inlined_call_operand.hbm [shape: f32[1,32], index: 14, kind: input, shape index: {}]
  %s15 = inlined_call_operand.hbm [shape: f32[1,32], index: 15, kind: input, shape index: {}]
  %s16 = inlined_call_operand.hbm [shape: f32[2,8,32], index: 16, kind: output, shape index: {}]
  %s17 = sld [smem:[#allocation0]]
  $region161: #{tpu_custom_call.1} parent=0
    _
  %s19 = ssub.s32 1, %s17
  %s20 = scalar_select 0, %s19, %s17
  $region1: #{tpu_custom_call.1} parent=0
    #allocation3 [shape = 'u8[16384]{0}', space=vmem, size = 0x4000, scoped, tag = 'input window, operand 0']
    #allocation4 [shape = 's32[2]{0}', space=sflag, size = 0x8, scoped, tag = 'scoped memory for tpu_custom_call.1']
    #allocation5 [shape = 's32[2]{0}', space=sflag, size = 0x8, scoped, tag = 'scoped memory for tpu_custom_call.1']
    #allocation6 [shape = 'u8[16384]{0}', space=vmem, size = 0x4000, scoped, tag = 'input window, operand 1']
    #allocation7 [shape = 's32[2]{0}', space=sflag, size = 0x8, scoped, tag = 'scoped memory for tpu_custom_call.1']
    #allocation8 [shape = 'u8[16384]{0}', space=vmem, size = 0x4000, scoped, tag = 'input window, operand 2']
    #allocation9 [shape = 'u8[2048]{0}', space=vmem, size = 0x800, scoped, tag = 'input window, operand 3, single buffered']
    #allocation10 [shape = 's32[1]{0}', space=sflag, size = 0x4, scoped, tag = 'scoped memory for tpu_custom_call.1']
    #allocation11 [shape = 'u8[2048]{0}', space=vmem, size = 0x800, scoped, tag = 'input window, operand 4, single buffered']
    #allocation12 [shape = 'u8[2048]{0}', space=vmem, size = 0x800, scoped, tag = 'input window, operand 5, single buffered']
    #allocation13 [shape = 's32[1]{0}', space=sflag, size = 0x4, scoped, tag = 'scoped memory for tpu_custom_call.1']
    #allocation14 [shape = 'u8[8192]{0}', space=vmem, size = 0x2000, scoped, tag = 'input window, operand 6, single buffered']
    #allocation15 [shape = 'u8[512]{0}', space=vmem, size = 0x400, scoped, tag = 'input window, operand 7, single buffered']
    #allocation16 [shape = 's32[1]{0}', space=sflag, size = 0x4, scoped, tag = 'scoped memory for tpu_custom_call.1']
    #allocation17 [shape = 'u8[512]{0}', space=vmem, size = 0x400, scoped, tag = 'input window, operand 8, single buffered']
    #allocation18 [shape = 'u8[512]{0}', space=vmem, size = 0x400, scoped, tag = 'input window, operand 9, single buffered']
    #allocation19 [shape = 's32[1]{0}', space=sflag, size = 0x4, scoped, tag = 'scoped memory for tpu_custom_call.1']
    #allocation20 [shape = 'u8[8192]{0}', space=vmem, size = 0x2000, scoped, tag = 'input window, operand 10, single buffered']
    #allocation21 [shape = 'u8[512]{0}', space=vmem, size = 0x400, scoped, tag = 'input window, operand 11, single buffered']
    #allocation22 [shape = 's32[1]{0}', space=sflag, size = 0x4, scoped, tag = 'scoped memory for tpu_custom_call.1']
    #allocation23 [shape = 'u8[32768]{0}', space=vmem, size = 0x8000, scoped, tag = 'input window, operand 12, single buffered']
    #allocation24 [shape = 'u8[512]{0}', space=vmem, size = 0x400, scoped, tag = 'input window, operand 13, single buffered']
    #allocation25 [shape = 's32[1]{0}', space=sflag, size = 0x4, scoped, tag = 'scoped memory for tpu_custom_call.1']
    #allocation26 [shape = 'u8[512]{0}', space=vmem, size = 0x400, scoped, tag = 'input window, operand 14, single buffered']
    #allocation27 [shape = 'u8[512]{0}', space=vmem, size = 0x400, scoped, tag = 'input window, operand 15, single buffered']
    #allocation28 [shape = 's32[1]{0}', space=sflag, size = 0x4, scoped, tag = 'scoped memory for tpu_custom_call.1']
    #allocation29 [shape = 'u8[8192]{0}', space=vmem, size = 0x2000, scoped, tag = 'output window, operand 0']
    %21 = vsyncpa [#allocation4], 0
    %s22 = scalar_lea.sflag [#allocation4], 1
    %23 = vsyncpa %s22, 0
    %24 = vsyncpa [#allocation7], 0
    %s25 = scalar_lea.sflag [#allocation7], 1
    %26 = vsyncpa %s25, 0
    %27 = vsyncpa [#allocation10], 0
    %28 = vsyncpa [#allocation13], 0
    %29 = vsyncpa [#allocation16], 0
    %30 = vsyncpa [#allocation19], 0
    %31 = vsyncpa [#allocation22], 0
    %32 = vsyncpa [#allocation25], 0
    %33 = vsyncpa [#allocation28], 0
    %34 = vsyncpa [#allocation5], 0
    %s35 = scalar_lea.sflag [#allocation5], 1
    %36 = vsyncpa %s35, 0
    loop: start=0, step=1, limit=4
    $region2: #{tpu_custom_call.1} parent=1 // loop_pre_header
      _
    $region3: #{tpu_custom_call.1} parent=1 // loop_header
      %s38 = sphi 0, %s42
      %p39 = scmp.ge.s32.totalorder %s38, 4
      %s45 = sphi 0, %s57
      %s46 = sphi 0, %s53
      %s47 = sphi 0, %s45
      %s48 = sphi 0, %s46
      %s49 = sphi 0, %s47
      %s50 = sphi 0, %s48
      %s60 = sphi 0, %s62
      %s63 = sphi 0, %s60
      %s64 = sphi 0, %s63
      %s80 = sphi 0, %s64
      %s86 = sphi 0, %s88
      %s89 = sphi 0, %s86
      %s90 = sphi 0, %s89
      %s106 = sphi 0, %s90
      %s114 = sphi 0, %s116
      %s117 = sphi 0, %s114
      %s118 = sphi 0, %s117
      %s134 = sphi 0, %s118
      %s138 = sphi 0, %s138
      %s140 = sphi 0, %s138
      %s141 = sphi 0, %s140
      %s155 = sphi 0, %s141
      %s159 = sphi 0, %s159
      %s161 = sphi 0, %s159
      %s162 = sphi 0, %s161
      %s176 = sphi 0, %s162
      %s180 = sphi 0, %s180
      %s182 = sphi 0, %s180
      %s183 = sphi 0, %s182
      %s197 = sphi 0, %s183
      %s201 = sphi 0, %s201
      %s203 = sphi 0, %s201
      %s204 = sphi 0, %s203
      %s218 = sphi 0, %s204
      %s222 = sphi 0, %s222
      %s224 = sphi 0, %s222
      %s225 = sphi 0, %s224
      %s239 = sphi 0, %s225
      %s243 = sphi 0, %s243
      %s245 = sphi 0, %s243
      %s246 = sphi 0, %s245
      %s260 = sphi 0, %s246
      %s264 = sphi 0, %s264
      %s266 = sphi 0, %s264
      %s267 = sphi 0, %s266
      %s281 = sphi 0, %s267
      %s285 = sphi 0, %s285
      %s287 = sphi 0, %s285
      %s288 = sphi 0, %s287
      %s302 = sphi 0, %s288
      %s306 = sphi 0, %s306
      %s308 = sphi 0, %s306
      %s309 = sphi 0, %s308
      %s323 = sphi 0, %s309
      %s327 = sphi 0, %s327
      %s329 = sphi 0, %s327
      %s330 = sphi 0, %s329
      %s344 = sphi 0, %s330
      %s348 = sphi 0, %s348
      %s350 = sphi 0, %s348
      %s351 = sphi 0, %s350
      %s365 = sphi 0, %s351
      %s369 = sphi 0, %s369
      %s371 = sphi 0, %s369
      %s372 = sphi 0, %s371
      %s386 = sphi 0, %s372
      %s390 = sphi 0, %s390
      %s392 = sphi 0, %s390
      %s393 = sphi 0, %s392
      %s407 = sphi 0, %s393
      %s415 = sphi 0, %s417
      %s418 = sphi 0, %s415
      %s419 = sphi 0, %s418
      %s435 = sphi 0, %s419
    $region4: #{tpu_custom_call.1} parent=1 // loop_header_branch
      %41 = sbr.rel (%p39) target = $region8
    $region5: #{tpu_custom_call.1} parent=1 // loop_body
      %s43 = ssub.s32 %s38, 1
      %s44 = ssub.s32 %s38, 2
      %s51 = sadd.s32 1, %s46
      %p52 = scmp.ge.s32.totalorder %s51, 1
      %s53 = scalar_select %p52, 0, %s51
      %s54 = sadd.s32 1, %s45
      %s55 = scalar_select %p52, %s54, %s45
      %p56 = scmp.ge.s32.totalorder %s55, 2
      %s57 = scalar_select %p56, 0, %s55
      %s58 = ssub.s32 %s45, %s57
      %p59 = scmp.eq.s32.totalorder %s58, 0
      %s61 = sadd.s32 %s60, 1
      %s62 = scalar_select %p59, %s60, %s61
      %p65 = pneg %p59
      %p66 = scmp.eq.s32.totalorder %s38, 1
      %p67 = por %p65, %p66
      %p68 = scmp.ne.s32.totalorder %s60, %s63
      %p69 = scmp.eq.s32.totalorder %s38, 0
      %p70 = por %p68, %p69
      %p71 = scmp.ne.s32.totalorder %s60, %s63
      %p72 = scmp.eq.s32.totalorder %s43, 1
      %p73 = por %p71, %p72
      %p74 = scmp.ne.s32.totalorder %s63, %s64
      %p75 = scmp.eq.s32.totalorder %s43, 0
      %p76 = por %p74, %p75
      %p77 = scmp.ne.s32.totalorder %s63, %s64
      %p78 = scmp.eq.s32.totalorder %s44, 1
      %p79 = por %p77, %p78
      %p81 = scmp.ne.s32.totalorder %s64, %s80
      %p82 = scmp.eq.s32.totalorder %s44, 0
      %p83 = por %p81, %p82
      %s84 = ssub.s32 %s45, %s57
      %p85 = scmp.eq.s32.totalorder %s84, 0
      %s87 = sadd.s32 %s86, 1
      %s88 = scalar_select %p85, %s86, %s87
      %p91 = pneg %p85
      %p92 = scmp.eq.s32.totalorder %s38, 1
      %p93 = por %p91, %p92
      %p94 = scmp.ne.s32.totalorder %s86, %s89
      %p95 = scmp.eq.s32.totalorder %s38, 0
      %p96 = por %p94, %p95
      %p97 = scmp.ne.s32.totalorder %s86, %s89
      %p98 = scmp.eq.s32.totalorder %s43, 1
      %p99 = por %p97, %p98
      %p100 = scmp.ne.s32.totalorder %s89, %s90
      %p101 = scmp.eq.s32.totalorder %s43, 0
      %p102 = por %p100, %p101
      %p103 = scmp.ne.s32.totalorder %s89, %s90
      %p104 = scmp.eq.s32.totalorder %s44, 1
      %p105 = por %p103, %p104
      %p107 = scmp.ne.s32.totalorder %s90, %s106
      %p108 = scmp.eq.s32.totalorder %s44, 0
      %p109 = por %p107, %p108
      %s110 = ssub.s32 %s45, %s57
      %s111 = ssub.s32 %s46, %s53
      %s112 = sor.u32 %s110, %s111
      %p113 = scmp.eq.s32.totalorder %s112, 0
      %s115 = sadd.s32 %s114, 1
      %s116 = scalar_select %p113, %s114, %s115
      %p119 = pneg %p113
      %p120 = scmp.eq.s32.totalorder %s38, 1
      %p121 = por %p119, %p120
      %p122 = scmp.ne.s32.totalorder %s114, %s117
      %p123 = scmp.eq.s32.totalorder %s38, 0
      %p124 = por %p122, %p123
      %p125 = scmp.ne.s32.totalorder %s114, %s117
      %p126 = scmp.eq.s32.totalorder %s43, 1
      %p127 = por %p125, %p126
      %p128 = scmp.ne.s32.totalorder %s117, %s118
      %p129 = scmp.eq.s32.totalorder %s43, 0
      %p130 = por %p128, %p129
      %p131 = scmp.ne.s32.totalorder %s117, %s118
      %p132 = scmp.eq.s32.totalorder %s44, 1
      %p133 = por %p131, %p132
      %p135 = scmp.ne.s32.totalorder %s118, %s134
      %p136 = scmp.eq.s32.totalorder %s44, 0
      %p137 = por %p135, %p136
      %s139 = sadd.s32 %s138, 1
      %p142 = scmp.eq.s32.totalorder %s38, 1
      %p143 = scmp.ne.s32.totalorder %s138, %s140
      %p144 = scmp.eq.s32.totalorder %s38, 0
      %p145 = por %p143, %p144
      %p146 = scmp.ne.s32.totalorder %s138, %s140
      %p147 = scmp.eq.s32.totalorder %s43, 1
      %p148 = por %p146, %p147
      %p149 = scmp.ne.s32.totalorder %s140, %s141
      %p150 = scmp.eq.s32.totalorder %s43, 0
      %p151 = por %p149, %p150
      %p152 = scmp.ne.s32.totalorder %s140, %s141
      %p153 = scmp.eq.s32.totalorder %s44, 1
      %p154 = por %p152, %p153
      %p156 = scmp.ne.s32.totalorder %s141, %s155
      %p157 = scmp.eq.s32.totalorder %s44, 0
      %p158 = por %p156, %p157
      %s160 = sadd.s32 %s159, 1
      %p163 = scmp.eq.s32.totalorder %s38, 1
      %p164 = scmp.ne.s32.totalorder %s159, %s161
      %p165 = scmp.eq.s32.totalorder %s38, 0
      %p166 = por %p164, %p165
      %p167 = scmp.ne.s32.totalorder %s159, %s161
      %p168 = scmp.eq.s32.totalorder %s43, 1
      %p169 = por %p167, %p168
      %p170 = scmp.ne.s32.totalorder %s161, %s162
      %p171 = scmp.eq.s32.totalorder %s43, 0
      %p172 = por %p170, %p171
      %p173 = scmp.ne.s32.totalorder %s161, %s162
      %p174 = scmp.eq.s32.totalorder %s44, 1
      %p175 = por %p173, %p174
      %p177 = scmp.ne.s32.totalorder %s162, %s176
      %p178 = scmp.eq.s32.totalorder %s44, 0
      %p179 = por %p177, %p178
      %s181 = sadd.s32 %s180, 1
      %p184 = scmp.eq.s32.totalorder %s38, 1
      %p185 = scmp.ne.s32.totalorder %s180, %s182
      %p186 = scmp.eq.s32.totalorder %s38, 0
      %p187 = por %p185, %p186
      %p188 = scmp.ne.s32.totalorder %s180, %s182
      %p189 = scmp.eq.s32.totalorder %s43, 1
      %p190 = por %p188, %p189
      %p191 = scmp.ne.s32.totalorder %s182, %s183
      %p192 = scmp.eq.s32.totalorder %s43, 0
      %p193 = por %p191, %p192
      %p194 = scmp.ne.s32.totalorder %s182, %s183
      %p195 = scmp.eq.s32.totalorder %s44, 1
      %p196 = por %p194, %p195
      %p198 = scmp.ne.s32.totalorder %s183, %s197
      %p199 = scmp.eq.s32.totalorder %s44, 0
      %p200 = por %p198, %p199
      %s202 = sadd.s32 %s201, 1
      %p205 = scmp.eq.s32.totalorder %s38, 1
      %p206 = scmp.ne.s32.totalorder %s201, %s203
      %p207 = scmp.eq.s32.totalorder %s38, 0
      %p208 = por %p206, %p207
      %p209 = scmp.ne.s32.totalorder %s201, %s203
      %p210 = scmp.eq.s32.totalorder %s43, 1
      %p211 = por %p209, %p210
      %p212 = scmp.ne.s32.totalorder %s203, %s204
      %p213 = scmp.eq.s32.totalorder %s43, 0
      %p214 = por %p212, %p213
      %p215 = scmp.ne.s32.totalorder %s203, %s204
      %p216 = scmp.eq.s32.totalorder %s44, 1
      %p217 = por %p215, %p216
      %p219 = scmp.ne.s32.totalorder %s204, %s218
      %p220 = scmp.eq.s32.totalorder %s44, 0
      %p221 = por %p219, %p220
      %s223 = sadd.s32 %s222, 1
      %p226 = scmp.eq.s32.totalorder %s38, 1
      %p227 = scmp.ne.s32.totalorder %s222, %s224
      %p228 = scmp.eq.s32.totalorder %s38, 0
      %p229 = por %p227, %p228
      %p230 = scmp.ne.s32.totalorder %s222, %s224
      %p231 = scmp.eq.s32.totalorder %s43, 1
      %p232 = por %p230, %p231
      %p233 = scmp.ne.s32.totalorder %s224, %s225
      %p234 = scmp.eq.s32.totalorder %s43, 0
      %p235 = por %p233, %p234
      %p236 = scmp.ne.s32.totalorder %s224, %s225
      %p237 = scmp.eq.s32.totalorder %s44, 1
      %p238 = por %p236, %p237
      %p240 = scmp.ne.s32.totalorder %s225, %s239
      %p241 = scmp.eq.s32.totalorder %s44, 0
      %p242 = por %p240, %p241
      %s244 = sadd.s32 %s243, 1
      %p247 = scmp.eq.s32.totalorder %s38, 1
      %p248 = scmp.ne.s32.totalorder %s243, %s245
      %p249 = scmp.eq.s32.totalorder %s38, 0
      %p250 = por %p248, %p249
      %p251 = scmp.ne.s32.totalorder %s243, %s245
      %p252 = scmp.eq.s32.totalorder %s43, 1
      %p253 = por %p251, %p252
      %p254 = scmp.ne.s32.totalorder %s245, %s246
      %p255 = scmp.eq.s32.totalorder %s43, 0
      %p256 = por %p254, %p255
      %p257 = scmp.ne.s32.totalorder %s245, %s246
      %p258 = scmp.eq.s32.totalorder %s44, 1
      %p259 = por %p257, %p258
      %p261 = scmp.ne.s32.totalorder %s246, %s260
      %p262 = scmp.eq.s32.totalorder %s44, 0
      %p263 = por %p261, %p262
      %s265 = sadd.s32 %s264, 1
      %p268 = scmp.eq.s32.totalorder %s38, 1
      %p269 = scmp.ne.s32.totalorder %s264, %s266
      %p270 = scmp.eq.s32.totalorder %s38, 0
      %p271 = por %p269, %p270
      %p272 = scmp.ne.s32.totalorder %s264, %s266
      %p273 = scmp.eq.s32.totalorder %s43, 1
      %p274 = por %p272, %p273
      %p275 = scmp.ne.s32.totalorder %s266, %s267
      %p276 = scmp.eq.s32.totalorder %s43, 0
      %p277 = por %p275, %p276
      %p278 = scmp.ne.s32.totalorder %s266, %s267
      %p279 = scmp.eq.s32.totalorder %s44, 1
      %p280 = por %p278, %p279
      %p282 = scmp.ne.s32.totalorder %s267, %s281
      %p283 = scmp.eq.s32.totalorder %s44, 0
      %p284 = por %p282, %p283
      %s286 = sadd.s32 %s285, 1
      %p289 = scmp.eq.s32.totalorder %s38, 1
      %p290 = scmp.ne.s32.totalorder %s285, %s287
      %p291 = scmp.eq.s32.totalorder %s38, 0
      %p292 = por %p290, %p291
      %p293 = scmp.ne.s32.totalorder %s285, %s287
      %p294 = scmp.eq.s32.totalorder %s43, 1
      %p295 = por %p293, %p294
      %p296 = scmp.ne.s32.totalorder %s287, %s288
      %p297 = scmp.eq.s32.totalorder %s43, 0
      %p298 = por %p296, %p297
      %p299 = scmp.ne.s32.totalorder %s287, %s288
      %p300 = scmp.eq.s32.totalorder %s44, 1
      %p301 = por %p299, %p300
      %p303 = scmp.ne.s32.totalorder %s288, %s302
      %p304 = scmp.eq.s32.totalorder %s44, 0
      %p305 = por %p303, %p304
      %s307 = sadd.s32 %s306, 1
      %p310 = scmp.eq.s32.totalorder %s38, 1
      %p311 = scmp.ne.s32.totalorder %s306, %s308
      %p312 = scmp.eq.s32.totalorder %s38, 0
      %p313 = por %p311, %p312
      %p314 = scmp.ne.s32.totalorder %s306, %s308
      %p315 = scmp.eq.s32.totalorder %s43, 1
      %p316 = por %p314, %p315
      %p317 = scmp.ne.s32.totalorder %s308, %s309
      %p318 = scmp.eq.s32.totalorder %s43, 0
      %p319 = por %p317, %p318
      %p320 = scmp.ne.s32.totalorder %s308, %s309
      %p321 = scmp.eq.s32.totalorder %s44, 1
      %p322 = por %p320, %p321
      %p324 = scmp.ne.s32.totalorder %s309, %s323
      %p325 = scmp.eq.s32.totalorder %s44, 0
      %p326 = por %p324, %p325
      %s328 = sadd.s32 %s327, 1
      %p331 = scmp.eq.s32.totalorder %s38, 1
      %p332 = scmp.ne.s32.totalorder %s327, %s329
      %p333 = scmp.eq.s32.totalorder %s38, 0
      %p334 = por %p332, %p333
      %p335 = scmp.ne.s32.totalorder %s327, %s329
      %p336 = scmp.eq.s32.totalorder %s43, 1
      %p337 = por %p335, %p336
      %p338 = scmp.ne.s32.totalorder %s329, %s330
      %p339 = scmp.eq.s32.totalorder %s43, 0
      %p340 = por %p338, %p339
      %p341 = scmp.ne.s32.totalorder %s329, %s330
      %p342 = scmp.eq.s32.totalorder %s44, 1
      %p343 = por %p341, %p342
      %p345 = scmp.ne.s32.totalorder %s330, %s344
      %p346 = scmp.eq.s32.totalorder %s44, 0
      %p347 = por %p345, %p346
      %s349 = sadd.s32 %s348, 1
      %p352 = scmp.eq.s32.totalorder %s38, 1
      %p353 = scmp.ne.s32.totalorder %s348, %s350
      %p354 = scmp.eq.s32.totalorder %s38, 0
      %p355 = por %p353, %p354
      %p356 = scmp.ne.s32.totalorder %s348, %s350
      %p357 = scmp.eq.s32.totalorder %s43, 1
      %p358 = por %p356, %p357
      %p359 = scmp.ne.s32.totalorder %s350, %s351
      %p360 = scmp.eq.s32.totalorder %s43, 0
      %p361 = por %p359, %p360
      %p362 = scmp.ne.s32.totalorder %s350, %s351
      %p363 = scmp.eq.s32.totalorder %s44, 1
      %p364 = por %p362, %p363
      %p366 = scmp.ne.s32.totalorder %s351, %s365
      %p367 = scmp.eq.s32.totalorder %s44, 0
      %p368 = por %p366, %p367
      %s370 = sadd.s32 %s369, 1
      %p373 = scmp.eq.s32.totalorder %s38, 1
      %p374 = scmp.ne.s32.totalorder %s369, %s371
      %p375 = scmp.eq.s32.totalorder %s38, 0
      %p376 = por %p374, %p375
      %p377 = scmp.ne.s32.totalorder %s369, %s371
      %p378 = scmp.eq.s32.totalorder %s43, 1
      %p379 = por %p377, %p378
      %p380 = scmp.ne.s32.totalorder %s371, %s372
      %p381 = scmp.eq.s32.totalorder %s43, 0
      %p382 = por %p380, %p381
      %p383 = scmp.ne.s32.totalorder %s371, %s372
      %p384 = scmp.eq.s32.totalorder %s44, 1
      %p385 = por %p383, %p384
      %p387 = scmp.ne.s32.totalorder %s372, %s386
      %p388 = scmp.eq.s32.totalorder %s44, 0
      %p389 = por %p387, %p388
      %s391 = sadd.s32 %s390, 1
      %p394 = scmp.eq.s32.totalorder %s38, 1
      %p395 = scmp.ne.s32.totalorder %s390, %s392
      %p396 = scmp.eq.s32.totalorder %s38, 0
      %p397 = por %p395, %p396
      %p398 = scmp.ne.s32.totalorder %s390, %s392
      %p399 = scmp.eq.s32.totalorder %s43, 1
      %p400 = por %p398, %p399
      %p401 = scmp.ne.s32.totalorder %s392, %s393
      %p402 = scmp.eq.s32.totalorder %s43, 0
      %p403 = por %p401, %p402
      %p404 = scmp.ne.s32.totalorder %s392, %s393
      %p405 = scmp.eq.s32.totalorder %s44, 1
      %p406 = por %p404, %p405
      %p408 = scmp.ne.s32.totalorder %s393, %s407
      %p409 = scmp.eq.s32.totalorder %s44, 0
      %p410 = por %p408, %p409
      %s411 = ssub.s32 %s45, %s57
      %s412 = ssub.s32 %s46, %s53
      %s413 = sor.u32 %s411, %s412
      %p414 = scmp.eq.s32.totalorder %s413, 0
      %s416 = sadd.s32 %s415, 1
      %s417 = scalar_select %p414, %s415, %s416
      %p420 = pneg %p414
      %p421 = scmp.eq.s32.totalorder %s38, 1
      %p422 = por %p420, %p421
      %p423 = scmp.ne.s32.totalorder %s415, %s418
      %p424 = scmp.eq.s32.totalorder %s38, 0
      %p425 = por %p423, %p424
      %p426 = scmp.ne.s32.totalorder %s415, %s418
      %p427 = scmp.eq.s32.totalorder %s43, 1
      %p428 = por %p426, %p427
      %p429 = scmp.ne.s32.totalorder %s418, %s419
      %p430 = scmp.eq.s32.totalorder %s43, 0
      %p431 = por %p429, %p430
      %p432 = scmp.ne.s32.totalorder %s418, %s419
      %p433 = scmp.eq.s32.totalorder %s44, 1
      %p434 = por %p432, %p433
      %p436 = scmp.ne.s32.totalorder %s419, %s435
      %p437 = scmp.eq.s32.totalorder %s44, 0
      %p438 = por %p436, %p437
      %p439 = scmp.le.s32.totalorder 1, %s38
      %p440 = scmp.lt.s32.totalorder %s38, 3
      %p441 = pnand %p439, %p440
      %p442 = pneg %p441
      // Predicated region
      $region9: #{tpu_custom_call.1} parent=5 // pred_check
        _
      $region10: #{tpu_custom_call.1} parent=5 // pred_check_branch
        %444 = sbr.rel (%p441) target = $region12
      $region11: #{tpu_custom_call.1} parent=5 // pred_region
        %s445 = ssub.s32 %s38, 1
        // Predicated region
        $region13: #{tpu_custom_call.1} parent=11 // pred_check
          %p446 = pneg %p151
        $region14: #{tpu_custom_call.1} parent=11 // pred_check_branch
          %448 = sbr.rel (%p446) target = $region16
        $region15: #{tpu_custom_call.1} parent=11 // pred_region
          %s450 = ssub.s32 64, 64
          %451 = vsyncadd [#allocation10], %s450
          %s453 = sshll.u32 [#allocation9], 4
          %s454 = int_to_ptr.vmem [resolvable:$true] %s453
          %456 = dma.hbm_to_vmem [thread:$0]  %s3, 64, %s454, [#allocation10]
        $region16: #{tpu_custom_call.1} parent=11 // pred_fallthru
          _
        // Predicated region
        $region17: #{tpu_custom_call.1} parent=11 // pred_check
          %p457 = pneg %p172
        $region18: #{tpu_custom_call.1} parent=11 // pred_check_branch
          %459 = sbr.rel (%p457) target = $region20
        $region19: #{tpu_custom_call.1} parent=11 // pred_region
          %s461 = ssub.s32 64, 64
          %462 = vsyncadd [#allocation10], %s461
          %s464 = sshll.u32 [#allocation11], 4
          %s465 = int_to_ptr.vmem [resolvable:$true] %s464
          %467 = dma.hbm_to_vmem [thread:$0]  %s4, 64, %s465, [#allocation10]
        $region20: #{tpu_custom_call.1} parent=11 // pred_fallthru
          _
        // Predicated region
        $region21: #{tpu_custom_call.1} parent=11 // pred_check
          %p468 = pneg %p193
        $region22: #{tpu_custom_call.1} parent=11 // pred_check_branch
          %470 = sbr.rel (%p468) target = $region24
        $region23: #{tpu_custom_call.1} parent=11 // pred_region
          %s472 = ssub.s32 64, 64
          %473 = vsyncadd [#allocation13], %s472
          %s475 = sshll.u32 [#allocation12], 4
          %s476 = int_to_ptr.vmem [resolvable:$true] %s475
          %478 = dma.hbm_to_vmem [thread:$0]  %s5, 64, %s476, [#allocation13]
        $region24: #{tpu_custom_call.1} parent=11 // pred_fallthru
          _
        // Predicated region
        $region25: #{tpu_custom_call.1} parent=11 // pred_check
          %p479 = pneg %p214
        $region26: #{tpu_custom_call.1} parent=11 // pred_check_branch
          %481 = sbr.rel (%p479) target = $region28
        $region27: #{tpu_custom_call.1} parent=11 // pred_region
          %s483 = ssub.s32 256, 256
          %484 = vsyncadd [#allocation13], %s483
          %s485 = sshll.u32 [#allocation14], 4
          %s486 = int_to_ptr.vmem [resolvable:$true] %s485
          %491 = dma.hbm_to_vmem [thread:$0]  %s6, 256, %s486, [#allocation13], 64, 64, 4
        $region28: #{tpu_custom_call.1} parent=11 // pred_fallthru
          _
        // Predicated region
        $region29: #{tpu_custom_call.1} parent=11 // pred_check
          %p492 = pneg %p235
        $region30: #{tpu_custom_call.1} parent=11 // pred_check_branch
          %494 = sbr.rel (%p492) target = $region32
        $region31: #{tpu_custom_call.1} parent=11 // pred_region
          %s496 = ssub.s32 16, 16
          %497 = vsyncadd [#allocation16], %s496
          %s499 = sshll.u32 [#allocation15], 4
          %s500 = int_to_ptr.vmem [resolvable:$true] %s499
          %502 = dma.hbm_to_vmem [thread:$0]  %s7, 16, %s500, [#allocation16]
        $region32: #{tpu_custom_call.1} parent=11 // pred_fallthru
          _
        // Predicated region
        $region33: #{tpu_custom_call.1} parent=11 // pred_check
          %p503 = pneg %p256
        $region34: #{tpu_custom_call.1} parent=11 // pred_check_branch
          %505 = sbr.rel (%p503) target = $region36
        $region35: #{tpu_custom_call.1} parent=11 // pred_region
          %s507 = ssub.s32 16, 16
          %508 = vsyncadd [#allocation16], %s507
          %s510 = sshll.u32 [#allocation17], 4
          %s511 = int_to_ptr.vmem [resolvable:$true] %s510
          %513 = dma.hbm_to_vmem [thread:$0]  %s8, 16, %s511, [#allocation16]
        $region36: #{tpu_custom_call.1} parent=11 // pred_fallthru
          _
        // Predicated region
        $region37: #{tpu_custom_call.1} parent=11 // pred_check
          %p514 = pneg %p277
        $region38: #{tpu_custom_call.1} parent=11 // pred_check_branch
          %516 = sbr.rel (%p514) target = $region40
        $region39: #{tpu_custom_call.1} parent=11 // pred_region
          %s518 = ssub.s32 16, 16
          %519 = vsyncadd [#allocation19], %s518
          %s521 = sshll.u32 [#allocation18], 4
          %s522 = int_to_ptr.vmem [resolvable:$true] %s521
          %524 = dma.hbm_to_vmem [thread:$0]  %s9, 16, %s522, [#allocation19]
        $region40: #{tpu_custom_call.1} parent=11 // pred_fallthru
          _
        // Predicated region
        $region41: #{tpu_custom_call.1} parent=11 // pred_check
          %p525 = pneg %p298
        $region42: #{tpu_custom_call.1} parent=11 // pred_check_branch
          %527 = sbr.rel (%p525) target = $region44
        $region43: #{tpu_custom_call.1} parent=11 // pred_region
          %s529 = ssub.s32 256, 256
          %530 = vsyncadd [#allocation19], %s529
          %s531 = sshll.u32 [#allocation20], 4
          %s532 = int_to_ptr.vmem [resolvable:$true] %s531
          %537 = dma.hbm_to_vmem [thread:$0]  %s10, 256, %s532, [#allocation19], 64, 64, 4
        $region44: #{tpu_custom_call.1} parent=11 // pred_fallthru
          _
        // Predicated region
        $region45: #{tpu_custom_call.1} parent=11 // pred_check
          %p538 = pneg %p319
        $region46: #{tpu_custom_call.1} parent=11 // pred_check_branch
          %540 = sbr.rel (%p538) target = $region48
        $region47: #{tpu_custom_call.1} parent=11 // pred_region
          %s542 = ssub.s32 16, 16
          %543 = vsyncadd [#allocation22], %s542
          %s545 = sshll.u32 [#allocation21], 4
          %s546 = int_to_ptr.vmem [resolvable:$true] %s545
          %548 = dma.hbm_to_vmem [thread:$0]  %s11, 16, %s546, [#allocation22]
        $region48: #{tpu_custom_call.1} parent=11 // pred_fallthru
          _
        // Predicated region
        $region49: #{tpu_custom_call.1} parent=11 // pred_check
          %p549 = pneg %p340
        $region50: #{tpu_custom_call.1} parent=11 // pred_check_branch
          %551 = sbr.rel (%p549) target = $region52
        $region51: #{tpu_custom_call.1} parent=11 // pred_region
          %s553 = ssub.s32 1024, 1024
          %554 = vsyncadd [#allocation22], %s553
          %s555 = sshll.u32 [#allocation23], 4
          %s556 = int_to_ptr.vmem [resolvable:$true] %s555
          %561 = dma.hbm_to_vmem [thread:$0]  %s12, 1024, %s556, [#allocation22], 64, 64, 4
        $region52: #{tpu_custom_call.1} parent=11 // pred_fallthru
          _
        // Predicated region
        $region53: #{tpu_custom_call.1} parent=11 // pred_check
          %p562 = pneg %p361
        $region54: #{tpu_custom_call.1} parent=11 // pred_check_branch
          %564 = sbr.rel (%p562) target = $region56
        $region55: #{tpu_custom_call.1} parent=11 // pred_region
          %s566 = ssub.s32 16, 16
          %567 = vsyncadd [#allocation25], %s566
          %s569 = sshll.u32 [#allocation24], 4
          %s570 = int_to_ptr.vmem [resolvable:$true] %s569
          %572 = dma.hbm_to_vmem [thread:$0]  %s13, 16, %s570, [#allocation25]
        $region56: #{tpu_custom_call.1} parent=11 // pred_fallthru
          _
        // Predicated region
        $region57: #{tpu_custom_call.1} parent=11 // pred_check
          %p573 = pneg %p382
        $region58: #{tpu_custom_call.1} parent=11 // pred_check_branch
          %575 = sbr.rel (%p573) target = $region60
        $region59: #{tpu_custom_call.1} parent=11 // pred_region
          %s577 = ssub.s32 16, 16
          %578 = vsyncadd [#allocation25], %s577
          %s580 = sshll.u32 [#allocation26], 4
          %s581 = int_to_ptr.vmem [resolvable:$true] %s580
          %583 = dma.hbm_to_vmem [thread:$0]  %s14, 16, %s581, [#allocation25]
        $region60: #{tpu_custom_call.1} parent=11 // pred_fallthru
          _
        // Predicated region
        $region61: #{tpu_custom_call.1} parent=11 // pred_check
          %p584 = pneg %p403
        $region62: #{tpu_custom_call.1} parent=11 // pred_check_branch
          %586 = sbr.rel (%p584) target = $region64
        $region63: #{tpu_custom_call.1} parent=11 // pred_region
          %s588 = ssub.s32 16, 16
          %589 = vsyncadd [#allocation28], %s588
          %s591 = sshll.u32 [#allocation27], 4
          %s592 = int_to_ptr.vmem [resolvable:$true] %s591
          %594 = dma.hbm_to_vmem [thread:$0]  %s15, 16, %s592, [#allocation28]
        $region64: #{tpu_custom_call.1} parent=11 // pred_fallthru
          _
      $region12: #{tpu_custom_call.1} parent=5 // pred_fallthru
        _
      %p595 = scmp.lt.s32.totalorder %s38, 2
      // Predicated region
      $region65: #{tpu_custom_call.1} parent=5 // pred_check
        %p596 = pneg %p595
      $region66: #{tpu_custom_call.1} parent=5 // pred_check_branch
        %598 = sbr.rel (%p596) target = $region68
      $region67: #{tpu_custom_call.1} parent=5 // pred_region
        // Predicated region
        $region69: #{tpu_custom_call.1} parent=67 // pred_check
          %p599 = pneg %p70
        $region70: #{tpu_custom_call.1} parent=67 // pred_check_branch
          %601 = sbr.rel (%p599) target = $region72
        $region71: #{tpu_custom_call.1} parent=67 // pred_region
          %s602 = sand.u32 %s60, 1
          %s603 = scalar_lea.sflag [#allocation4], %s602
          %s604 = sand.u32 %s60, 1
          %s605 = smul.addr %s604, 16
          %s606 = scalar_lea.vmem [#allocation3], %s605
          %s608 = ssub.s32 256, 256
          %609 = vsyncadd %s603, %s608
          %s610 = smul.addr %s45, 4
          %s611 = smul.addr %s610, 64
          %s612 = scalar_lea.hbm %s0, %s611
          %s613 = sshll.u32 %s606, 4
          %s614 = int_to_ptr.vmem [resolvable:$true] %s613
          %619 = dma.hbm_to_vmem [thread:$0]  %s612, 256, %s614, %s603, 64, 64, 4
        $region72: #{tpu_custom_call.1} parent=67 // pred_fallthru
          _
        // Predicated region
        $region73: #{tpu_custom_call.1} parent=67 // pred_check
          %p620 = pneg %p96
        $region74: #{tpu_custom_call.1} parent=67 // pred_check_branch
          %622 = sbr.rel (%p620) target = $region76
        $region75: #{tpu_custom_call.1} parent=67 // pred_region
          %s623 = sand.u32 %s38, 1
          %s624 = scalar_lea.sflag [#allocation7], %s623
          %s625 = sand.u32 %s86, 1
          %s626 = smul.addr %s625, 16
          %s627 = scalar_lea.vmem [#allocation6], %s626
          %s629 = ssub.s32 256, 256
          %630 = vsyncadd %s624, %s629
          %s631 = smul.addr %s45, 4
          %s632 = smul.addr %s631, 64
          %s633 = scalar_lea.hbm %s1, %s632
          %s634 = sshll.u32 %s627, 4
          %s635 = int_to_ptr.vmem [resolvable:$true] %s634
          %640 = dma.hbm_to_vmem [thread:$0]  %s633, 256, %s635, %s624, 64, 64, 4
        $region76: #{tpu_custom_call.1} parent=67 // pred_fallthru
          _
        // Predicated region
        $region77: #{tpu_custom_call.1} parent=67 // pred_check
          %p641 = pneg %p124
        $region78: #{tpu_custom_call.1} parent=67 // pred_check_branch
          %643 = sbr.rel (%p641) target = $region80
        $region79: #{tpu_custom_call.1} parent=67 // pred_region
          %s644 = sand.u32 %s38, 1
          %s645 = scalar_lea.sflag [#allocation7], %s644
          %s646 = sand.u32 %s114, 1
          %s647 = smul.addr %s646, 16
          %s648 = scalar_lea.vmem [#allocation8], %s647
          %s650 = ssub.s32 256, 256
          %651 = vsyncadd %s645, %s650
          %s652 = smul.addr %s45, 4
          %s653 = sadd.s32 %s46, %s652
          %s654 = smul.addr %s653, 64
          %s655 = scalar_lea.hbm %s2, %s654
          %s656 = sshll.u32 %s648, 4
          %s657 = int_to_ptr.vmem [resolvable:$true] %s656
          %662 = dma.hbm_to_vmem [thread:$0]  %s655, 256, %s657, %s645, 64, 64, 4
        $region80: #{tpu_custom_call.1} parent=67 // pred_fallthru
          _
      $region68: #{tpu_custom_call.1} parent=5 // pred_fallthru
        _
      %p663 = scmp.le.s32.totalorder 1, %s38
      %p664 = scmp.lt.s32.totalorder %s38, 3
      %p665 = pnand %p663, %p664
      %p666 = pneg %p665
      // Predicated region
      $region81: #{tpu_custom_call.1} parent=5 // pred_check
        _
      $region82: #{tpu_custom_call.1} parent=5 // pred_check_branch
        %668 = sbr.rel (%p665) target = $region84
      $region83: #{tpu_custom_call.1} parent=5 // pred_region
        %s669 = ssub.s32 %s38, 1
        %s670 = sand.u32 %s63, 1
        %s671 = scalar_lea.sflag [#allocation4], %s670
        %s672 = sand.u32 %s63, 1
        %s673 = smul.addr %s672, 16
        %s674 = scalar_lea.vmem [#allocation3], %s673
        // Predicated region
        $region85: #{tpu_custom_call.1} parent=83 // pred_check
          %p675 = pneg %p76
        $region86: #{tpu_custom_call.1} parent=83 // pred_check_branch
          %677 = sbr.rel (%p675) target = $region88
        $region87: #{tpu_custom_call.1} parent=83 // pred_region
          %678 = dma.done %s671, 256
        $region88: #{tpu_custom_call.1} parent=83 // pred_fallthru
          _
        %s679 = sand.u32 %s43, 1
        %s680 = scalar_lea.sflag [#allocation7], %s679
        %s681 = sand.u32 %s89, 1
        %s682 = smul.addr %s681, 16
        %s683 = scalar_lea.vmem [#allocation6], %s682
        // Predicated region
        $region89: #{tpu_custom_call.1} parent=83 // pred_check
          %p684 = pneg %p102
        $region90: #{tpu_custom_call.1} parent=83 // pred_check_branch
          %686 = sbr.rel (%p684) target = $region92
        $region91: #{tpu_custom_call.1} parent=83 // pred_region
          %687 = dma.done %s680, 256
        $region92: #{tpu_custom_call.1} parent=83 // pred_fallthru
          _
        %s688 = sand.u32 %s43, 1
        %s689 = scalar_lea.sflag [#allocation7], %s688
        %s690 = sand.u32 %s117, 1
        %s691 = smul.addr %s690, 16
        %s692 = scalar_lea.vmem [#allocation8], %s691
        // Predicated region
        $region93: #{tpu_custom_call.1} parent=83 // pred_check
          %p693 = pneg %p130
        $region94: #{tpu_custom_call.1} parent=83 // pred_check_branch
          %695 = sbr.rel (%p693) target = $region96
        $region95: #{tpu_custom_call.1} parent=83 // pred_region
          %696 = dma.done %s689, 256
        $region96: #{tpu_custom_call.1} parent=83 // pred_fallthru
          _
        // Predicated region
        $region97: #{tpu_custom_call.1} parent=83 // pred_check
          %p697 = pneg %p151
        $region98: #{tpu_custom_call.1} parent=83 // pred_check_branch
          %699 = sbr.rel (%p697) target = $region100
        $region99: #{tpu_custom_call.1} parent=83 // pred_region
          %700 = dma.done [#allocation10], 64
        $region100: #{tpu_custom_call.1} parent=83 // pred_fallthru
          _
        // Predicated region
        $region101: #{tpu_custom_call.1} parent=83 // pred_check
          %p701 = pneg %p172
        $region102: #{tpu_custom_call.1} parent=83 // pred_check_branch
          %703 = sbr.rel (%p701) target = $region104
        $region103: #{tpu_custom_call.1} parent=83 // pred_region
          %704 = dma.done [#allocation10], 64
        $region104: #{tpu_custom_call.1} parent=83 // pred_fallthru
          _
        // Predicated region
        $region105: #{tpu_custom_call.1} parent=83 // pred_check
          %p705 = pneg %p193
        $region106: #{tpu_custom_call.1} parent=83 // pred_check_branch
          %707 = sbr.rel (%p705) target = $region108
        $region107: #{tpu_custom_call.1} parent=83 // pred_region
          %708 = dma.done [#allocation13], 64
        $region108: #{tpu_custom_call.1} parent=83 // pred_fallthru
          _
        // Predicated region
        $region109: #{tpu_custom_call.1} parent=83 // pred_check
          %p709 = pneg %p214
        $region110: #{tpu_custom_call.1} parent=83 // pred_check_branch
          %711 = sbr.rel (%p709) target = $region112
        $region111: #{tpu_custom_call.1} parent=83 // pred_region
          %712 = dma.done [#allocation13], 256
        $region112: #{tpu_custom_call.1} parent=83 // pred_fallthru
          _
        // Predicated region
        $region113: #{tpu_custom_call.1} parent=83 // pred_check
          %p713 = pneg %p235
        $region114: #{tpu_custom_call.1} parent=83 // pred_check_branch
          %715 = sbr.rel (%p713) target = $region116
        $region115: #{tpu_custom_call.1} parent=83 // pred_region
          %716 = dma.done [#allocation16], 16
        $region116: #{tpu_custom_call.1} parent=83 // pred_fallthru
          _
        // Predicated region
        $region117: #{tpu_custom_call.1} parent=83 // pred_check
          %p717 = pneg %p256
        $region118: #{tpu_custom_call.1} parent=83 // pred_check_branch
          %719 = sbr.rel (%p717) target = $region120
        $region119: #{tpu_custom_call.1} parent=83 // pred_region
          %720 = dma.done [#allocation16], 16
        $region120: #{tpu_custom_call.1} parent=83 // pred_fallthru
          _
        // Predicated region
        $region121: #{tpu_custom_call.1} parent=83 // pred_check
          %p721 = pneg %p277
        $region122: #{tpu_custom_call.1} parent=83 // pred_check_branch
          %723 = sbr.rel (%p721) target = $region124
        $region123: #{tpu_custom_call.1} parent=83 // pred_region
          %724 = dma.done [#allocation19], 16
        $region124: #{tpu_custom_call.1} parent=83 // pred_fallthru
          _
        // Predicated region
        $region125: #{tpu_custom_call.1} parent=83 // pred_check
          %p725 = pneg %p298
        $region126: #{tpu_custom_call.1} parent=83 // pred_check_branch
          %727 = sbr.rel (%p725) target = $region128
        $region127: #{tpu_custom_call.1} parent=83 // pred_region
          %728 = dma.done [#allocation19], 256
        $region128: #{tpu_custom_call.1} parent=83 // pred_fallthru
          _
        // Predicated region
        $region129: #{tpu_custom_call.1} parent=83 // pred_check
          %p729 = pneg %p319
        $region130: #{tpu_custom_call.1} parent=83 // pred_check_branch
          %731 = sbr.rel (%p729) target = $region132
        $region131: #{tpu_custom_call.1} parent=83 // pred_region
          %732 = dma.done [#allocation22], 16
        $region132: #{tpu_custom_call.1} parent=83 // pred_fallthru
          _
        // Predicated region
        $region133: #{tpu_custom_call.1} parent=83 // pred_check
          %p733 = pneg %p340
        $region134: #{tpu_custom_call.1} parent=83 // pred_check_branch
          %735 = sbr.rel (%p733) target = $region136
        $region135: #{tpu_custom_call.1} parent=83 // pred_region
          %736 = dma.done [#allocation22], 1024
        $region136: #{tpu_custom_call.1} parent=83 // pred_fallthru
          _
        // Predicated region
        $region137: #{tpu_custom_call.1} parent=83 // pred_check
          %p737 = pneg %p361
        $region138: #{tpu_custom_call.1} parent=83 // pred_check_branch
          %739 = sbr.rel (%p737) target = $region140
        $region139: #{tpu_custom_call.1} parent=83 // pred_region
          %740 = dma.done [#allocation25], 16
        $region140: #{tpu_custom_call.1} parent=83 // pred_fallthru
          _
        // Predicated region
        $region141: #{tpu_custom_call.1} parent=83 // pred_check
          %p741 = pneg %p382
        $region142: #{tpu_custom_call.1} parent=83 // pred_check_branch
          %743 = sbr.rel (%p741) target = $region144
        $region143: #{tpu_custom_call.1} parent=83 // pred_region
          %744 = dma.done [#allocation25], 16
        $region144: #{tpu_custom_call.1} parent=83 // pred_fallthru
          _
        // Predicated region
        $region145: #{tpu_custom_call.1} parent=83 // pred_check
          %p745 = pneg %p403
        $region146: #{tpu_custom_call.1} parent=83 // pred_check_branch
          %747 = sbr.rel (%p745) target = $region148
        $region147: #{tpu_custom_call.1} parent=83 // pred_region
          %748 = dma.done [#allocation28], 16
        $region148: #{tpu_custom_call.1} parent=83 // pred_fallthru
          _
        %s749 = sand.u32 %s63, 1
        %s750 = scalar_lea.sflag [#allocation4], %s749
        %s751 = sand.u32 %s63, 1
        %s752 = smul.addr %s751, 16
        %s753 = scalar_lea.vmem [#allocation3], %s752
        %p754 = pneg %p76
        %p755 = pneg %p73
        %s756 = sand.u32 %s43, 1
        %s757 = scalar_lea.sflag [#allocation7], %s756
        %s758 = sand.u32 %s89, 1
        %s759 = smul.addr %s758, 16
        %s760 = scalar_lea.vmem [#allocation6], %s759
        %p761 = pneg %p102
        %p762 = pneg %p99
        %s763 = sand.u32 %s43, 1
        %s764 = scalar_lea.sflag [#allocation7], %s763
        %s765 = sand.u32 %s117, 1
        %s766 = smul.addr %s765, 16
        %s767 = scalar_lea.vmem [#allocation8], %s766
        %p768 = pneg %p130
        %p769 = pneg %p127
        %p770 = pneg %p151
        %p771 = pneg %p148
        %p772 = pneg %p172
        %p773 = pneg %p169
        %p774 = pneg %p193
        %p775 = pneg %p190
        %p776 = pneg %p214
        %p777 = pneg %p211
        %p778 = pneg %p235
        %p779 = pneg %p232
        %p780 = pneg %p256
        %p781 = pneg %p253
        %p782 = pneg %p277
        %p783 = pneg %p274
        %p784 = pneg %p298
        %p785 = pneg %p295
        %p786 = pneg %p319
        %p787 = pneg %p316
        %p788 = pneg %p340
        %p789 = pneg %p337
        %p790 = pneg %p361
        %p791 = pneg %p358
        %p792 = pneg %p382
        %p793 = pneg %p379
        %p794 = pneg %p403
        %p795 = pneg %p400
        %p796 = pneg %p431
        %p797 = pneg %p428
        %s798 = sand.u32 %s418, 1
        %s799 = scalar_lea.sflag [#allocation5], %s798
        %s800 = sand.u32 %s418, 1
        %s801 = smul.addr %s800, 8
        %s802 = scalar_lea.vmem [#allocation29], %s801
        %v804 = vld [vmem:[%s692] sm:$0xf]
        %v805 = vld [vmem:[%s692 + $0x4] sm:$0xf]
        %v806 = vld [vmem:[%s692 + $0x8] sm:$0xf]
        %v807 = vld [vmem:[%s692 + $0xc] sm:$0xf]
        %v808 = vld [vmem:[%s674] sm:$0xf]
        %v809 = vld [vmem:[%s674 + $0x4] sm:$0xf]
        %v810 = vld [vmem:[%s674 + $0x8] sm:$0xf]
        %v811 = vld [vmem:[%s674 + $0xc] sm:$0xf]
        %v812 = vld [vmem:[#allocation9] sm:$0xf]
        %v817 = vunpack.c.l.b16 %v808
        %v818 = vunpack.c.l.b16 %v809
        %v819 = vunpack.c.l.b16 %v810
        %v820 = vunpack.c.l.b16 %v811
        %v821 = vpack.c.b16 %v818, %v817
        %v822 = vpack.c.b16 %v820, %v819
        %vm823 = vcmask 64512
        %v825 = vsel %vm823, %v821, 0
        %v828 = vsel %vm823, %v822, 0
        %vm830 = vcmask 1043456
        %v832 = vsel %vm830, %v812, 0
        %834 = vmatprep.subr.bf16.mxu0 0
        %835 = vmatpush1.bf16.msra.mxu0 %v832
        %836 = vmatprep.subr.bf16.mxu0 0
        %837 = vmatpush1.bf16.msra.mxu0 0
        %838 = vmatprep.subr.bf16.mxu0 0
        %839 = vmatpush1.bf16.msra.mxu0 0
        %840 = vmatprep.subr.bf16.mxu0 0
        %841 = vmatpush1.bf16.msra.mxu0 0
        %842 = vmatprep.subr.bf16.mxu0 0
        %843 = vmatpush1.bf16.msra.mxu0 0
        %844 = vmatprep.subr.bf16.mxu0 0
        %845 = vmatpush1.bf16.msra.mxu0 0
        %846 = vmatprep.subr.bf16.mxu0 0
        %847 = vmatpush1.bf16.msra.mxu0 0
        %848 = vmatprep.subr.bf16.mxu0 0
        %849 = vmatpush1.bf16.msra.mxu0 0
        %850 = vmatprep.subr.bf16.mxu0 0
        %851 = vmatpush1.bf16.msra.mxu0 0
        %852 = vmatprep.subr.bf16.mxu0 0
        %853 = vmatpush1.bf16.msra.mxu0 0
        %854 = vmatprep.subr.bf16.mxu0 0
        %855 = vmatpush1.bf16.msra.mxu0 0
        %856 = vmatprep.subr.bf16.mxu0 0
        %857 = vmatpush1.bf16.msra.mxu0 0
        %858 = vmatprep.subr.bf16.mxu0 0
        %859 = vmatpush1.bf16.msra.mxu0 0
        %860 = vmatprep.subr.bf16.mxu0 0
        %861 = vmatpush1.bf16.msra.mxu0 0
        %862 = vmatprep.subr.bf16.mxu0 0
        %863 = vmatpush1.bf16.msra.mxu0 0
        %864 = vmatprep.subr.bf16.mxu0 0
        %865 = vmatpush1.bf16.msra.mxu0 0
        %866 = vmatprep.mubr.bf16.mxu0 0
        %867 = vmatmul.mubr.bf16.gmra.mrb[0].mxu0 %v825
        %v868 = vpop.f32.mrb[0].mxu0
        %v869 = vadd.f32 0.0, %v868
        %v870 = vpop.f32.mrb[0].mxu0
        %v871 = vpop.f32.mrb[0].mxu0
        %v872 = vadd.f32 0.0, %v871
        %v873 = vpop.f32.mrb[0].mxu0
        %874 = vmatprep.mubr.bf16.mxu0 0
        %875 = vmatmul.mubr.bf16.gmra.mrb[0].mxu0 %v828
        %v876 = vpop.f32.mrb[0].mxu0
        %v877 = vadd.f32 0.0, %v876
        %v878 = vpop.f32.mrb[0].mxu0
        %v879 = vpop.f32.mrb[0].mxu0
        %v880 = vadd.f32 0.0, %v879
        %v881 = vpop.f32.mrb[0].mxu0
        %882 = vdwg.mxu0
        %v883 = vpack.c.bf16 %v869, %v869
        %v884 = vpack.c.bf16 %v872, %v872
        %v885 = vpack.c.bf16 %v877, %v877
        %v886 = vpack.c.bf16 %v880, %v880
        %v887 = vld [vmem:[%s683] sm:$0xf]
        %v888 = vld [vmem:[%s683 + $0x4] sm:$0xf]
        %v889 = vld [vmem:[%s683 + $0x8] sm:$0xf]
        %v890 = vld [vmem:[%s683 + $0xc] sm:$0xf]
        %v891 = vld [vmem:[#allocation11] sm:$0xf]
        %v896 = vunpack.c.l.b16 %v887
        %v897 = vunpack.c.l.b16 %v888
        %v898 = vunpack.c.l.b16 %v889
        %v899 = vunpack.c.l.b16 %v890
        %v900 = vpack.c.b16 %v897, %v896
        %v901 = vpack.c.b16 %v899, %v898
        %v903 = vsel %vm823, %v900, 0
        %v906 = vsel %vm823, %v901, 0
        %v909 = vsel %vm830, %v891, 0
        %911 = vmatprep.subr.bf16.mxu0 0
        %912 = vmatpush1.bf16.msra.mxu0 %v909
        %913 = vmatprep.subr.bf16.mxu0 0
        %914 = vmatpush1.bf16.msra.mxu0 0
        %915 = vmatprep.subr.bf16.mxu0 0
        %916 = vmatpush1.bf16.msra.mxu0 0
        %917 = vmatprep.subr.bf16.mxu0 0
        %918 = vmatpush1.bf16.msra.mxu0 0
        %919 = vmatprep.subr.bf16.mxu0 0
        %920 = vmatpush1.bf16.msra.mxu0 0
        %921 = vmatprep.subr.bf16.mxu0 0
        %922 = vmatpush1.bf16.msra.mxu0 0
        %923 = vmatprep.subr.bf16.mxu0 0
        %924 = vmatpush1.bf16.msra.mxu0 0
        %925 = vmatprep.subr.bf16.mxu0 0
        %926 = vmatpush1.bf16.msra.mxu0 0
        %927 = vmatprep.subr.bf16.mxu0 0
        %928 = vmatpush1.bf16.msra.mxu0 0
        %929 = vmatprep.subr.bf16.mxu0 0
        %930 = vmatpush1.bf16.msra.mxu0 0
        %931 = vmatprep.subr.bf16.mxu0 0
        %932 = vmatpush1.bf16.msra.mxu0 0
        %933 = vmatprep.subr.bf16.mxu0 0
        %934 = vmatpush1.bf16.msra.mxu0 0
        %935 = vmatprep.subr.bf16.mxu0 0
        %936 = vmatpush1.bf16.msra.mxu0 0
        %937 = vmatprep.subr.bf16.mxu0 0
        %938 = vmatpush1.bf16.msra.mxu0 0
        %939 = vmatprep.subr.bf16.mxu0 0
        %940 = vmatpush1.bf16.msra.mxu0 0
        %941 = vmatprep.subr.bf16.mxu0 0
        %942 = vmatpush1.bf16.msra.mxu0 0
        %943 = vmatprep.mubr.bf16.mxu0 0
        %944 = vmatmul.mubr.bf16.gmra.mrb[0].mxu0 %v903
        %v945 = vpop.f32.mrb[0].mxu0
        %v946 = vadd.f32 0.0, %v945
        %v947 = vpop.f32.mrb[0].mxu0
        %v948 = vpop.f32.mrb[0].mxu0
        %v949 = vadd.f32 0.0, %v948
        %v950 = vpop.f32.mrb[0].mxu0
        %951 = vmatprep.mubr.bf16.mxu0 0
        %952 = vmatmul.mubr.bf16.gmra.mrb[0].mxu0 %v906
        %v953 = vpop.f32.mrb[0].mxu0
        %v954 = vadd.f32 0.0, %v953
        %v955 = vpop.f32.mrb[0].mxu0
        %v956 = vpop.f32.mrb[0].mxu0
        %v957 = vadd.f32 0.0, %v956
        %v958 = vpop.f32.mrb[0].mxu0
        %959 = vdwg.mxu0
        %v960 = vpack.c.bf16 %v946, %v946
        %v961 = vpack.c.bf16 %v949, %v949
        %v962 = vpack.c.bf16 %v954, %v954
        %v963 = vpack.c.bf16 %v957, %v957
        %v964 = vld [vmem:[#allocation12] sm:$0xf]
        %v969 = vunpack.c.l.b16 %v804
        %v970 = vunpack.c.l.b16 %v805
        %v971 = vunpack.c.l.b16 %v806
        %v972 = vunpack.c.l.b16 %v807
        %v973 = vpack.c.b16 %v970, %v969
        %v974 = vpack.c.b16 %v972, %v971
        %v976 = vsel %vm823, %v973, 0
        %v979 = vsel %vm823, %v974, 0
        %v982 = vsel %vm830, %v964, 0
        %984 = vmatprep.subr.bf16.mxu0 0
        %985 = vmatpush1.bf16.msra.mxu0 %v982
        %986 = vmatprep.subr.bf16.mxu0 0
        %987 = vmatpush1.bf16.msra.mxu0 0
        %988 = vmatprep.subr.bf16.mxu0 0
        %989 = vmatpush1.bf16.msra.mxu0 0
        %990 = vmatprep.subr.bf16.mxu0 0
        %991 = vmatpush1.bf16.msra.mxu0 0
        %992 = vmatprep.subr.bf16.mxu0 0
        %993 = vmatpush1.bf16.msra.mxu0 0
        %994 = vmatprep.subr.bf16.mxu0 0
        %995 = vmatpush1.bf16.msra.mxu0 0
        %996 = vmatprep.subr.bf16.mxu0 0
        %997 = vmatpush1.bf16.msra.mxu0 0
        %998 = vmatprep.subr.bf16.mxu0 0
        %999 = vmatpush1.bf16.msra.mxu0 0
        %1000 = vmatprep.subr.bf16.mxu0 0
        %1001 = vmatpush1.bf16.msra.mxu0 0
        %1002 = vmatprep.subr.bf16.mxu0 0
        %1003 = vmatpush1.bf16.msra.mxu0 0
        %1004 = vmatprep.subr.bf16.mxu0 0
        %1005 = vmatpush1.bf16.msra.mxu0 0
        %1006 = vmatprep.subr.bf16.mxu0 0
        %1007 = vmatpush1.bf16.msra.mxu0 0
        %1008 = vmatprep.subr.bf16.mxu0 0
        %1009 = vmatpush1.bf16.msra.mxu0 0
        %1010 = vmatprep.subr.bf16.mxu0 0
        %1011 = vmatpush1.bf16.msra.mxu0 0
        %1012 = vmatprep.subr.bf16.mxu0 0
        %1013 = vmatpush1.bf16.msra.mxu0 0
        %1014 = vmatprep.subr.bf16.mxu0 0
        %1015 = vmatpush1.bf16.msra.mxu0 0
        %1016 = vmatprep.mubr.bf16.mxu0 0
        %1017 = vmatmul.mubr.bf16.gmra.mrb[0].mxu0 %v976
        %v1018 = vpop.f32.mrb[0].mxu0
        %v1019 = vadd.f32 0.0, %v1018
        %v1020 = vpop.f32.mrb[0].mxu0
        %v1021 = vpop.f32.mrb[0].mxu0
        %v1022 = vadd.f32 0.0, %v1021
        %v1023 = vpop.f32.mrb[0].mxu0
        %1024 = vmatprep.mubr.bf16.mxu0 0
        %1025 = vmatmul.mubr.bf16.gmra.mrb[0].mxu0 %v979
        %v1026 = vpop.f32.mrb[0].mxu0
        %v1027 = vadd.f32 0.0, %v1026
        %v1028 = vpop.f32.mrb[0].mxu0
        %v1029 = vpop.f32.mrb[0].mxu0
        %v1030 = vadd.f32 0.0, %v1029
        %v1031 = vpop.f32.mrb[0].mxu0
        %1032 = vdwg.mxu0
        %v1033 = vmul.f32 %v1019, 0.17677669
        %v1034 = vmul.f32 %v1022, 0.17677669
        %v1035 = vmul.f32 %v1027, 0.17677669
        %v1036 = vmul.f32 %v1030, 0.17677669
        %v1037 = vpack.c.bf16 %v1033, %v1033
        %v1038 = vpack.c.bf16 %v1034, %v1034
        %v1039 = vpack.c.bf16 %v1035, %v1035
        %v1040 = vpack.c.bf16 %v1036, %v1036
        %v1042 = vsel %vm823, %v1037, 0
        %v1045 = vsel %vm823, %v960, 0
        %1047 = vmatprep.subr.bf16.mxu0 0
        %1048 = vmatpush1.bf16.xpose.msra.mxu0 %v1045
        %1049 = vmatprep.subr.bf16.mxu0 0
        %1050 = vmatpush1.bf16.xpose.msra.mxu0 0
        %1051 = vmatprep.subr.bf16.mxu0 0
        %1052 = vmatpush1.bf16.xpose.msra.mxu0 0
        %1053 = vmatprep.subr.bf16.mxu0 0
        %1054 = vmatpush1.bf16.xpose.msra.mxu0 0
        %1055 = vmatprep.subr.bf16.mxu0 0
        %1056 = vmatpush1.bf16.xpose.msra.mxu0 0
        %1057 = vmatprep.subr.bf16.mxu0 0
        %1058 = vmatpush1.bf16.xpose.msra.mxu0 0
        %1059 = vmatprep.subr.bf16.mxu0 0
        %1060 = vmatpush1.bf16.xpose.msra.mxu0 0
        %1061 = vmatprep.subr.bf16.mxu0 0
        %1062 = vmatpush1.bf16.xpose.msra.mxu0 0
        %1063 = vmatprep.subr.bf16.mxu0 0
        %1064 = vmatpush1.bf16.xpose.msra.mxu0 0
        %1065 = vmatprep.subr.bf16.mxu0 0
        %1066 = vmatpush1.bf16.xpose.msra.mxu0 0
        %1067 = vmatprep.subr.bf16.mxu0 0
        %1068 = vmatpush1.bf16.xpose.msra.mxu0 0
        %1069 = vmatprep.subr.bf16.mxu0 0
        %1070 = vmatpush1.bf16.xpose.msra.mxu0 0
        %1071 = vmatprep.subr.bf16.mxu0 0
        %1072 = vmatpush1.bf16.xpose.msra.mxu0 0
        %1073 = vmatprep.subr.bf16.mxu0 0
        %1074 = vmatpush1.bf16.xpose.msra.mxu0 0
        %1075 = vmatprep.subr.bf16.mxu0 0
        %1076 = vmatpush1.bf16.xpose.msra.mxu0 0
        %1077 = vmatprep.subr.bf16.mxu0 0
        %1078 = vmatpush1.bf16.xpose.msra.mxu0 0
        %1079 = vmatprep.mubr.bf16.mxu0 0
        %1080 = vmatmul.mubr.bf16.gmra.mrb[0].mxu0 %v1042
        %v1081 = vpop.f32.mrb[0].mxu0
        %v1082 = vadd.f32 0.0, %v1081
        %v1083 = vpop.f32.mrb[0].mxu0
        %v1084 = vpop.f32.mrb[0].mxu0
        %v1085 = vpop.f32.mrb[0].mxu0
        %1086 = vdwg.mxu0
        %v1088 = vsel %vm823, %v1038, 0
        %v1091 = vsel %vm823, %v961, 0
        %1093 = vmatprep.subr.bf16.mxu0 0
        %1094 = vmatpush1.bf16.xpose.msra.mxu0 %v1091
        %1095 = vmatprep.subr.bf16.mxu0 0
        %1096 = vmatpush1.bf16.xpose.msra.mxu0 0
        %1097 = vmatprep.subr.bf16.mxu0 0
        %1098 = vmatpush1.bf16.xpose.msra.mxu0 0
        %1099 = vmatprep.subr.bf16.mxu0 0
        %1100 = vmatpush1.bf16.xpose.msra.mxu0 0
        %1101 = vmatprep.subr.bf16.mxu0 0
        %1102 = vmatpush1.bf16.xpose.msra.mxu0 0
        %1103 = vmatprep.subr.bf16.mxu0 0
        %1104 = vmatpush1.bf16.xpose.msra.mxu0 0
        %1105 = vmatprep.subr.bf16.mxu0 0
        %1106 = vmatpush1.bf16.xpose.msra.mxu0 0
        %1107 = vmatprep.subr.bf16.mxu0 0
        %1108 = vmatpush1.bf16.xpose.msra.mxu0 0
        %1109 = vmatprep.subr.bf16.mxu0 0
        %1110 = vmatpush1.bf16.xpose.msra.mxu0 0
        %1111 = vmatprep.subr.bf16.mxu0 0
        %1112 = vmatpush1.bf16.xpose.msra.mxu0 0
        %1113 = vmatprep.subr.bf16.mxu0 0
        %1114 = vmatpush1.bf16.xpose.msra.mxu0 0
        %1115 = vmatprep.subr.bf16.mxu0 0
        %1116 = vmatpush1.bf16.xpose.msra.mxu0 0
        %1117 = vmatprep.subr.bf16.mxu0 0
        %1118 = vmatpush1.bf16.xpose.msra.mxu0 0
        %1119 = vmatprep.subr.bf16.mxu0 0
        %1120 = vmatpush1.bf16.xpose.msra.mxu0 0
        %1121 = vmatprep.subr.bf16.mxu0 0
        %1122 = vmatpush1.bf16.xpose.msra.mxu0 0
        %1123 = vmatprep.subr.bf16.mxu0 0
        %1124 = vmatpush1.bf16.xpose.msra.mxu0 0
        %1125 = vmatprep.mubr.bf16.mxu0 0
        %1126 = vmatmul.mubr.bf16.gmra.mrb[0].mxu0 %v1088
        %v1127 = vpop.f32.mrb[0].mxu0
        %v1128 = vadd.f32 0.0, %v1127
        %v1129 = vpop.f32.mrb[0].mxu0
        %v1130 = vpop.f32.mrb[0].mxu0
        %v1131 = vpop.f32.mrb[0].mxu0
        %1132 = vdwg.mxu0
        %v1134 = vsel %vm823, %v1039, 0
        %v1137 = vsel %vm823, %v962, 0
        %1139 = vmatprep.subr.bf16.mxu0 0
        %1140 = vmatpush1.bf16.xpose.msra.mxu0 %v1137
        %1141 = vmatprep.subr.bf16.mxu0 0
        %1142 = vmatpush1.bf16.xpose.msra.mxu0 0
        %1143 = vmatprep.subr.bf16.mxu0 0
        %1144 = vmatpush1.bf16.xpose.msra.mxu0 0
        %1145 = vmatprep.subr.bf16.mxu0 0
        %1146 = vmatpush1.bf16.xpose.msra.mxu0 0
        %1147 = vmatprep.subr.bf16.mxu0 0
        %1148 = vmatpush1.bf16.xpose.msra.mxu0 0
        %1149 = vmatprep.subr.bf16.mxu0 0
        %1150 = vmatpush1.bf16.xpose.msra.mxu0 0
        %1151 = vmatprep.subr.bf16.mxu0 0
        %1152 = vmatpush1.bf16.xpose.msra.mxu0 0
        %1153 = vmatprep.subr.bf16.mxu0 0
        %1154 = vmatpush1.bf16.xpose.msra.mxu0 0
        %1155 = vmatprep.subr.bf16.mxu0 0
        %1156 = vmatpush1.bf16.xpose.msra.mxu0 0
        %1157 = vmatprep.subr.bf16.mxu0 0
        %1158 = vmatpush1.bf16.xpose.msra.mxu0 0
        %1159 = vmatprep.subr.bf16.mxu0 0
        %1160 = vmatpush1.bf16.xpose.msra.mxu0 0
        %1161 = vmatprep.subr.bf16.mxu0 0
        %1162 = vmatpush1.bf16.xpose.msra.mxu0 0
        %1163 = vmatprep.subr.bf16.mxu0 0
        %1164 = vmatpush1.bf16.xpose.msra.mxu0 0
        %1165 = vmatprep.subr.bf16.mxu0 0
        %1166 = vmatpush1.bf16.xpose.msra.mxu0 0
        %1167 = vmatprep.subr.bf16.mxu0 0
        %1168 = vmatpush1.bf16.xpose.msra.mxu0 0
        %1169 = vmatprep.subr.bf16.mxu0 0
        %1170 = vmatpush1.bf16.xpose.msra.mxu0 0
        %1171 = vmatprep.mubr.bf16.mxu0 0
        %1172 = vmatmul.mubr.bf16.gmra.mrb[0].mxu0 %v1134
        %v1173 = vpop.f32.mrb[0].mxu0
        %v1174 = vadd.f32 0.0, %v1173
        %v1175 = vpop.f32.mrb[0].mxu0
        %v1176 = vpop.f32.mrb[0].mxu0
        %v1177 = vpop.f32.mrb[0].mxu0
        %1178 = vdwg.mxu0
        %v1180 = vsel %vm823, %v1040, 0
        %v1183 = vsel %vm823, %v963, 0
        %1185 = vmatprep.subr.bf16.mxu0 0
        %1186 = vmatpush1.bf16.xpose.msra.mxu0 %v1183
        %1187 = vmatprep.subr.bf16.mxu0 0
        %1188 = vmatpush1.bf16.xpose.msra.mxu0 0
        %1189 = vmatprep.subr.bf16.mxu0 0
        %1190 = vmatpush1.bf16.xpose.msra.mxu0 0
        %1191 = vmatprep.subr.bf16.mxu0 0
        %1192 = vmatpush1.bf16.xpose.msra.mxu0 0
        %1193 = vmatprep.subr.bf16.mxu0 0
        %1194 = vmatpush1.bf16.xpose.msra.mxu0 0
        %1195 = vmatprep.subr.bf16.mxu0 0
        %1196 = vmatpush1.bf16.xpose.msra.mxu0 0
        %1197 = vmatprep.subr.bf16.mxu0 0
        %1198 = vmatpush1.bf16.xpose.msra.mxu0 0
        %1199 = vmatprep.subr.bf16.mxu0 0
        %1200 = vmatpush1.bf16.xpose.msra.mxu0 0
        %1201 = vmatprep.subr.bf16.mxu0 0
        %1202 = vmatpush1.bf16.xpose.msra.mxu0 0
        %1203 = vmatprep.subr.bf16.mxu0 0
        %1204 = vmatpush1.bf16.xpose.msra.mxu0 0
        %1205 = vmatprep.subr.bf16.mxu0 0
        %1206 = vmatpush1.bf16.xpose.msra.mxu0 0
        %1207 = vmatprep.subr.bf16.mxu0 0
        %1208 = vmatpush1.bf16.xpose.msra.mxu0 0
        %1209 = vmatprep.subr.bf16.mxu0 0
        %1210 = vmatpush1.bf16.xpose.msra.mxu0 0
        %1211 = vmatprep.subr.bf16.mxu0 0
        %1212 = vmatpush1.bf16.xpose.msra.mxu0 0
        %1213 = vmatprep.subr.bf16.mxu0 0
        %1214 = vmatpush1.bf16.xpose.msra.mxu0 0
        %1215 = vmatprep.subr.bf16.mxu0 0
        %1216 = vmatpush1.bf16.xpose.msra.mxu0 0
        %1217 = vmatprep.mubr.bf16.mxu0 0
        %1218 = vmatmul.mubr.bf16.gmra.mrb[0].mxu0 %v1180
        %v1219 = vpop.f32.mrb[0].mxu0
        %v1220 = vadd.f32 0.0, %v1219
        %v1221 = vpop.f32.mrb[0].mxu0
        %v1222 = vpop.f32.mrb[0].mxu0
        %v1223 = vpop.f32.mrb[0].mxu0
        %1224 = vdwg.mxu0
        %v1225 = vsel %vm823, %v1082, -inf
        %1226 = vmax.xlane.f32.xlu0 %v1225
        %v1227 = vpop.xlane.xlu0 %1226
        %v1228 = vsel %vm823, %v1128, -inf
        %1229 = vmax.xlane.f32.xlu0 %v1228
        %v1230 = vpop.xlane.xlu0 %1229
        %v1231 = vsel %vm823, %v1174, -inf
        %1232 = vmax.xlane.f32.xlu0 %v1231
        %v1233 = vpop.xlane.xlu0 %1232
        %v1234 = vsel %vm823, %v1220, -inf
        %1235 = vmax.xlane.f32.xlu0 %v1234
        %v1236 = vpop.xlane.xlu0 %1235
        %v1237 = vsub.f32 %v1082, %v1227
        %v1238 = vsub.f32 %v1128, %v1230
        %v1239 = vsub.f32 %v1174, %v1233
        %v1240 = vsub.f32 %v1220, %v1236
        %v1241 = vmul.f32 %v1237, 1.442695
        %v1242 = vpow.pop %v1241
        %v1243 = vmul.f32 %v1238, 1.442695
        %v1244 = vpow.pop %v1243
        %v1245 = vmul.f32 %v1239, 1.442695
        %v1246 = vpow.pop %v1245
        %v1247 = vmul.f32 %v1240, 1.442695
        %v1248 = vpow.pop %v1247
        %v1249 = vsel %vm823, %v1242, 0.0
        %1250 = vadd.xlane.f32.xlu0 %v1249
        %v1251 = vpop.xlane.xlu0 %1250
        %v1252 = vsel %vm823, %v1244, 0.0
        %1253 = vadd.xlane.f32.xlu0 %v1252
        %v1254 = vpop.xlane.xlu0 %1253
        %v1255 = vsel %vm823, %v1246, 0.0
        %1256 = vadd.xlane.f32.xlu0 %v1255
        %v1257 = vpop.xlane.xlu0 %1256
        %v1258 = vsel %vm823, %v1248, 0.0
        %1259 = vadd.xlane.f32.xlu0 %v1258
        %v1260 = vpop.xlane.xlu0 %1259
        %v1261 = vpack.c.bf16 %v1242, %v1242
        %v1262 = vpack.c.bf16 %v1244, %v1244
        %v1263 = vpack.c.bf16 %v1246, %v1246
        %v1264 = vpack.c.bf16 %v1248, %v1248
        %v1266 = vsel %vm823, %v1261, 0
        %v1269 = vsel %vm830, %v883, 0
        %1271 = vmatprep.subr.bf16.mxu0 0
        %1272 = vmatpush1.bf16.msra.mxu0 %v1269
        %1273 = vmatprep.subr.bf16.mxu0 0
        %1274 = vmatpush1.bf16.msra.mxu0 0
        %1275 = vmatprep.subr.bf16.mxu0 0
        %1276 = vmatpush1.bf16.msra.mxu0 0
        %1277 = vmatprep.subr.bf16.mxu0 0
        %1278 = vmatpush1.bf16.msra.mxu0 0
        %1279 = vmatprep.subr.bf16.mxu0 0
        %1280 = vmatpush1.bf16.msra.mxu0 0
        %1281 = vmatprep.subr.bf16.mxu0 0
        %1282 = vmatpush1.bf16.msra.mxu0 0
        %1283 = vmatprep.subr.bf16.mxu0 0
        %1284 = vmatpush1.bf16.msra.mxu0 0
        %1285 = vmatprep.subr.bf16.mxu0 0
        %1286 = vmatpush1.bf16.msra.mxu0 0
        %1287 = vmatprep.subr.bf16.mxu0 0
        %1288 = vmatpush1.bf16.msra.mxu0 0
        %1289 = vmatprep.subr.bf16.mxu0 0
        %1290 = vmatpush1.bf16.msra.mxu0 0
        %1291 = vmatprep.subr.bf16.mxu0 0
        %1292 = vmatpush1.bf16.msra.mxu0 0
        %1293 = vmatprep.subr.bf16.mxu0 0
        %1294 = vmatpush1.bf16.msra.mxu0 0
        %1295 = vmatprep.subr.bf16.mxu0 0
        %1296 = vmatpush1.bf16.msra.mxu0 0
        %1297 = vmatprep.subr.bf16.mxu0 0
        %1298 = vmatpush1.bf16.msra.mxu0 0
        %1299 = vmatprep.subr.bf16.mxu0 0
        %1300 = vmatpush1.bf16.msra.mxu0 0
        %1301 = vmatprep.subr.bf16.mxu0 0
        %1302 = vmatpush1.bf16.msra.mxu0 0
        %1303 = vmatprep.mubr.bf16.mxu0 0
        %1304 = vmatmul.mubr.bf16.gmra.mrb[0].mxu0 %v1266
        %v1305 = vpop.f32.mrb[0].mxu0
        %v1306 = vadd.f32 0.0, %v1305
        %v1307 = vpop.f32.mrb[0].mxu0
        %v1308 = vpop.f32.mrb[0].mxu0
        %v1309 = vpop.f32.mrb[0].mxu0
        %1310 = vdwg.mxu0
        %v1312 = vsel %vm823, %v1262, 0
        %v1315 = vsel %vm830, %v884, 0
        %1317 = vmatprep.subr.bf16.mxu0 0
        %1318 = vmatpush1.bf16.msra.mxu0 %v1315
        %1319 = vmatprep.subr.bf16.mxu0 0
        %1320 = vmatpush1.bf16.msra.mxu0 0
        %1321 = vmatprep.subr.bf16.mxu0 0
        %1322 = vmatpush1.bf16.msra.mxu0 0
        %1323 = vmatprep.subr.bf16.mxu0 0
        %1324 = vmatpush1.bf16.msra.mxu0 0
        %1325 = vmatprep.subr.bf16.mxu0 0
        %1326 = vmatpush1.bf16.msra.mxu0 0
        %1327 = vmatprep.subr.bf16.mxu0 0
        %1328 = vmatpush1.bf16.msra.mxu0 0
        %1329 = vmatprep.subr.bf16.mxu0 0
        %1330 = vmatpush1.bf16.msra.mxu0 0
        %1331 = vmatprep.subr.bf16.mxu0 0
        %1332 = vmatpush1.bf16.msra.mxu0 0
        %1333 = vmatprep.subr.bf16.mxu0 0
        %1334 = vmatpush1.bf16.msra.mxu0 0
        %1335 = vmatprep.subr.bf16.mxu0 0
        %1336 = vmatpush1.bf16.msra.mxu0 0
        %1337 = vmatprep.subr.bf16.mxu0 0
        %1338 = vmatpush1.bf16.msra.mxu0 0
        %1339 = vmatprep.subr.bf16.mxu0 0
        %1340 = vmatpush1.bf16.msra.mxu0 0
        %1341 = vmatprep.subr.bf16.mxu0 0
        %1342 = vmatpush1.bf16.msra.mxu0 0
        %1343 = vmatprep.subr.bf16.mxu0 0
        %1344 = vmatpush1.bf16.msra.mxu0 0
        %1345 = vmatprep.subr.bf16.mxu0 0
        %1346 = vmatpush1.bf16.msra.mxu0 0
        %1347 = vmatprep.subr.bf16.mxu0 0
        %1348 = vmatpush1.bf16.msra.mxu0 0
        %1349 = vmatprep.mubr.bf16.mxu0 0
        %1350 = vmatmul.mubr.bf16.gmra.mrb[0].mxu0 %v1312
        %v1351 = vpop.f32.mrb[0].mxu0
        %v1352 = vadd.f32 0.0, %v1351
        %v1353 = vpop.f32.mrb[0].mxu0
        %v1354 = vpop.f32.mrb[0].mxu0
        %v1355 = vpop.f32.mrb[0].mxu0
        %1356 = vdwg.mxu0
        %v1358 = vsel %vm823, %v1263, 0
        %v1361 = vsel %vm830, %v885, 0
        %1363 = vmatprep.subr.bf16.mxu0 0
        %1364 = vmatpush1.bf16.msra.mxu0 %v1361
        %1365 = vmatprep.subr.bf16.mxu0 0
        %1366 = vmatpush1.bf16.msra.mxu0 0
        %1367 = vmatprep.subr.bf16.mxu0 0
        %1368 = vmatpush1.bf16.msra.mxu0 0
        %1369 = vmatprep.subr.bf16.mxu0 0
        %1370 = vmatpush1.bf16.msra.mxu0 0
        %1371 = vmatprep.subr.bf16.mxu0 0
        %1372 = vmatpush1.bf16.msra.mxu0 0
        %1373 = vmatprep.subr.bf16.mxu0 0
        %1374 = vmatpush1.bf16.msra.mxu0 0
        %1375 = vmatprep.subr.bf16.mxu0 0
        %1376 = vmatpush1.bf16.msra.mxu0 0
        %1377 = vmatprep.subr.bf16.mxu0 0
        %1378 = vmatpush1.bf16.msra.mxu0 0
        %1379 = vmatprep.subr.bf16.mxu0 0
        %1380 = vmatpush1.bf16.msra.mxu0 0
        %1381 = vmatprep.subr.bf16.mxu0 0
        %1382 = vmatpush1.bf16.msra.mxu0 0
        %1383 = vmatprep.subr.bf16.mxu0 0
        %1384 = vmatpush1.bf16.msra.mxu0 0
        %1385 = vmatprep.subr.bf16.mxu0 0
        %1386 = vmatpush1.bf16.msra.mxu0 0
        %1387 = vmatprep.subr.bf16.mxu0 0
        %1388 = vmatpush1.bf16.msra.mxu0 0
        %1389 = vmatprep.subr.bf16.mxu0 0
        %1390 = vmatpush1.bf16.msra.mxu0 0
        %1391 = vmatprep.subr.bf16.mxu0 0
        %1392 = vmatpush1.bf16.msra.mxu0 0
        %1393 = vmatprep.subr.bf16.mxu0 0
        %1394 = vmatpush1.bf16.msra.mxu0 0
        %1395 = vmatprep.mubr.bf16.mxu0 0
        %1396 = vmatmul.mubr.bf16.gmra.mrb[0].mxu0 %v1358
        %v1397 = vpop.f32.mrb[0].mxu0
        %v1398 = vadd.f32 0.0, %v1397
        %v1399 = vpop.f32.mrb[0].mxu0
        %v1400 = vpop.f32.mrb[0].mxu0
        %v1401 = vpop.f32.mrb[0].mxu0
        %1402 = vdwg.mxu0
        %v1404 = vsel %vm823, %v1264, 0
        %v1407 = vsel %vm830, %v886, 0
        %1409 = vmatprep.subr.bf16.mxu0 0
        %1410 = vmatpush1.bf16.msra.mxu0 %v1407
        %1411 = vmatprep.subr.bf16.mxu0 0
        %1412 = vmatpush1.bf16.msra.mxu0 0
        %1413 = vmatprep.subr.bf16.mxu0 0
        %1414 = vmatpush1.bf16.msra.mxu0 0
        %1415 = vmatprep.subr.bf16.mxu0 0
        %1416 = vmatpush1.bf16.msra.mxu0 0
        %1417 = vmatprep.subr.bf16.mxu0 0
        %1418 = vmatpush1.bf16.msra.mxu0 0
        %1419 = vmatprep.subr.bf16.mxu0 0
        %1420 = vmatpush1.bf16.msra.mxu0 0
        %1421 = vmatprep.subr.bf16.mxu0 0
        %1422 = vmatpush1.bf16.msra.mxu0 0
        %1423 = vmatprep.subr.bf16.mxu0 0
        %1424 = vmatpush1.bf16.msra.mxu0 0
        %1425 = vmatprep.subr.bf16.mxu0 0
        %1426 = vmatpush1.bf16.msra.mxu0 0
        %1427 = vmatprep.subr.bf16.mxu0 0
        %1428 = vmatpush1.bf16.msra.mxu0 0
        %1429 = vmatprep.subr.bf16.mxu0 0
        %1430 = vmatpush1.bf16.msra.mxu0 0
        %1431 = vmatprep.subr.bf16.mxu0 0
        %1432 = vmatpush1.bf16.msra.mxu0 0
        %1433 = vmatprep.subr.bf16.mxu0 0
        %1434 = vmatpush1.bf16.msra.mxu0 0
        %1435 = vmatprep.subr.bf16.mxu0 0
        %1436 = vmatpush1.bf16.msra.mxu0 0
        %1437 = vmatprep.subr.bf16.mxu0 0
        %1438 = vmatpush1.bf16.msra.mxu0 0
        %1439 = vmatprep.subr.bf16.mxu0 0
        %1440 = vmatpush1.bf16.msra.mxu0 0
        %1441 = vmatprep.mubr.bf16.mxu0 0
        %1442 = vmatmul.mubr.bf16.gmra.mrb[0].mxu0 %v1404
        %v1443 = vpop.f32.mrb[0].mxu0
        %v1444 = vadd.f32 0.0, %v1443
        %v1445 = vpop.f32.mrb[0].mxu0
        %v1446 = vpop.f32.mrb[0].mxu0
        %v1447 = vpop.f32.mrb[0].mxu0
        %1448 = vdwg.mxu0
        %v1449 = vrcp.pop %v1251
        %v1450 = vrcp.pop %v1254
        %v1451 = vrcp.pop %v1257
        %v1452 = vrcp.pop %v1260
        %v1453 = vmul.f32 %v1306, %v1449
        %v1454 = vmul.f32 %v1352, %v1450
        %v1455 = vmul.f32 %v1398, %v1451
        %v1456 = vmul.f32 %v1444, %v1452
        %1457 = vst.msk [vmem:[#allocation2] sm:$0xff] %vm823, %v1453
        %1459 = vrot.lane.b32.xlu0 %v1454, 8
        %v1460 = vpop.permute.xlu0 %1459
        %vm1462 = vcmask 130112
        %1463 = vst.msk [vmem:[#allocation2] sm:$0xff] %vm1462, %v1460
        %1465 = vrot.lane.b32.xlu0 %v1455, 16
        %v1466 = vpop.permute.xlu0 %1465
        %vm1468 = vcmask 195712
        %1469 = vst.msk [vmem:[#allocation2] sm:$0xff] %vm1468, %v1466
        %1471 = vrot.lane.b32.xlu0 %v1456, 24
        %v1472 = vpop.permute.xlu0 %1471
        %vm1474 = vcmask 261312
        %1475 = vst.msk [vmem:[#allocation2] sm:$0xff] %vm1474, %v1472
        %v1476 = vld [vmem:[#allocation2] sm:$0xff]
        %v1477 = vpack.c.bf16 %v1476, %v1476
        %v1478 = vld [vmem:[#allocation14] sm:$0xf]
        %v1479 = vld [vmem:[#allocation14 + $0x4] sm:$0xf]
        %v1480 = vld [vmem:[#allocation14 + $0x8] sm:$0xf]
        %v1481 = vld [vmem:[#allocation14 + $0xc] sm:$0xf]
        %v1482 = vld [vmem:[#allocation15] sm:$0x1]
        %v1484 = vlaneseq
        %v1485 = vshrl.u32 %v1484, 7
        %v1486 = vsub.s32 0, %v1485
        %v1487 = vrot.slane %v1482, %v1486
        %v1493 = vunpack.c.l.b16 %v1478
        %v1494 = vunpack.c.l.b16 %v1479
        %v1495 = vunpack.c.l.b16 %v1480
        %v1496 = vunpack.c.l.b16 %v1481
        %v1497 = vpack.c.b16 %v1494, %v1493
        %v1498 = vpack.c.b16 %v1496, %v1495
        %vm1501 = vcmask 261120
        %v1503 = vsel %vm1501, %v1477, 0
        %1505 = vmatprep.subr.bf16.mxu0 0
        %1506 = vmatpush1.bf16.msra.mxu0 %v1497
        %1507 = vmatprep.subr.bf16.mxu0 0
        %1508 = vmatpush1.bf16.msra.mxu0 %v1498
        %1509 = vmatprep.subr.bf16.mxu0 0
        %1510 = vmatpush1.bf16.msra.mxu0 0
        %1511 = vmatprep.subr.bf16.mxu0 0
        %1512 = vmatpush1.bf16.msra.mxu0 0
        %1513 = vmatprep.subr.bf16.mxu0 0
        %1514 = vmatpush1.bf16.msra.mxu0 0
        %1515 = vmatprep.subr.bf16.mxu0 0
        %1516 = vmatpush1.bf16.msra.mxu0 0
        %1517 = vmatprep.subr.bf16.mxu0 0
        %1518 = vmatpush1.bf16.msra.mxu0 0
        %1519 = vmatprep.subr.bf16.mxu0 0
        %1520 = vmatpush1.bf16.msra.mxu0 0
        %1521 = vmatprep.subr.bf16.mxu0 0
        %1522 = vmatpush1.bf16.msra.mxu0 0
        %1523 = vmatprep.subr.bf16.mxu0 0
        %1524 = vmatpush1.bf16.msra.mxu0 0
        %1525 = vmatprep.subr.bf16.mxu0 0
        %1526 = vmatpush1.bf16.msra.mxu0 0
        %1527 = vmatprep.subr.bf16.mxu0 0
        %1528 = vmatpush1.bf16.msra.mxu0 0
        %1529 = vmatprep.subr.bf16.mxu0 0
        %1530 = vmatpush1.bf16.msra.mxu0 0
        %1531 = vmatprep.subr.bf16.mxu0 0
        %1532 = vmatpush1.bf16.msra.mxu0 0
        %1533 = vmatprep.subr.bf16.mxu0 0
        %1534 = vmatpush1.bf16.msra.mxu0 0
        %1535 = vmatprep.subr.bf16.mxu0 0
        %1536 = vmatpush1.bf16.msra.mxu0 0
        %1537 = vmatprep.mubr.bf16.mxu0 0
        %1538 = vmatmul.mubr.bf16.gmra.mrb[0].mxu0 %v1503
        %v1539 = vpop.f32.mrb[0].mxu0
        %v1540 = vadd.f32 %v1487, %v1539
        %v1541 = vpop.f32.mrb[0].mxu0
        %v1542 = vpop.f32.mrb[0].mxu0
        %v1543 = vpop.f32.mrb[0].mxu0
        %1544 = vdwg.mxu0
        %v1545 = vunpack.c.l.bf16 %v804
        %1546 = vst.msk [vmem:[#allocation2] sm:$0xff] %vm823, %v1545
        %v1547 = vunpack.c.l.bf16 %v805
        %1549 = vrot.lane.b32.xlu0 %v1547, 8
        %v1550 = vpop.permute.xlu0 %1549
        %1552 = vst.msk [vmem:[#allocation2] sm:$0xff] %vm1462, %v1550
        %v1553 = vunpack.c.l.bf16 %v806
        %1555 = vrot.lane.b32.xlu0 %v1553, 16
        %v1556 = vpop.permute.xlu0 %1555
        %1558 = vst.msk [vmem:[#allocation2] sm:$0xff] %vm1468, %v1556
        %v1559 = vunpack.c.l.bf16 %v807
        %1561 = vrot.lane.b32.xlu0 %v1559, 24
        %v1562 = vpop.permute.xlu0 %1561
        %1564 = vst.msk [vmem:[#allocation2] sm:$0xff] %vm1474, %v1562
        %v1565 = vld [vmem:[#allocation2] sm:$0xff]
        %v1566 = vadd.f32 %v1540, %v1565
        %v1567 = vsel %vm1501, %v1566, 0.0
        %1568 = vadd.xlane.f32.xlu0 %v1567
        %v1569 = vpop.xlane.xlu0 %1568
        %v1570 = vrcp.pop 32.0
        %v1571 = vmul.f32 %v1569, %v1570
        %v1572 = vsub.f32 %v1566, %v1571
        %v1573 = vmul.f32 %v1572, %v1572
        %v1574 = vsel %vm1501, %v1573, 0.0
        %1575 = vadd.xlane.f32.xlu0 %v1574
        %v1576 = vpop.xlane.xlu0 %1575
        %v1577 = vmul.f32 %v1576, %v1570
        %v1578 = vadd.f32 %v1577, 1e-05
        %v1579 = vrsqrt.pop %v1578
        %v1580 = vmul.f32 %v1572, %v1579
        %v1581 = vld [vmem:[#allocation17] sm:$0x1]
        %v1583 = vlaneseq
        %v1584 = vshrl.u32 %v1583, 7
        %v1585 = vsub.s32 0, %v1584
        %v1586 = vrot.slane %v1581, %v1585
        %v1588 = vmul.f32 %v1580, %v1586
        %v1589 = vld [vmem:[#allocation18] sm:$0x1]
        %v1591 = vlaneseq
        %v1592 = vshrl.u32 %v1591, 7
        %v1593 = vsub.s32 0, %v1592
        %v1594 = vrot.slane %v1589, %v1593
        %v1596 = vadd.f32 %v1588, %v1594
        %v1597 = vpack.c.bf16 %v1596, %v1596
        %v1598 = vld [vmem:[#allocation20] sm:$0xf]
        %v1599 = vld [vmem:[#allocation20 + $0x4] sm:$0xf]
        %v1600 = vld [vmem:[#allocation20 + $0x8] sm:$0xf]
        %v1601 = vld [vmem:[#allocation20 + $0xc] sm:$0xf]
        %v1602 = vld [vmem:[#allocation21] sm:$0x1]
        %v1604 = vlaneseq
        %v1605 = vshrl.u32 %v1604, 7
        %v1606 = vsub.s32 0, %v1605
        %v1607 = vrot.slane %v1602, %v1606
        %v1613 = vunpack.c.l.b16 %v1598
        %v1614 = vunpack.c.l.b16 %v1599
        %v1615 = vunpack.c.l.b16 %v1600
        %v1616 = vunpack.c.l.b16 %v1601
        %v1617 = vpack.c.b16 %v1614, %v1613
        %v1618 = vpack.c.b16 %v1616, %v1615
        %v1622 = vsel %vm1501, %v1597, 0
        %1624 = vmatprep.subr.bf16.mxu0 0
        %1625 = vmatpush1.bf16.msra.mxu0 %v1617
        %1626 = vmatprep.subr.bf16.mxu0 0
        %1627 = vmatpush1.bf16.msra.mxu0 %v1618
        %1628 = vmatprep.subr.bf16.mxu0 0
        %1629 = vmatpush1.bf16.msra.mxu0 0
        %1630 = vmatprep.subr.bf16.mxu0 0
        %1631 = vmatpush1.bf16.msra.mxu0 0
        %1632 = vmatprep.subr.bf16.mxu0 0
        %1633 = vmatpush1.bf16.msra.mxu0 0
        %1634 = vmatprep.subr.bf16.mxu0 0
        %1635 = vmatpush1.bf16.msra.mxu0 0
        %1636 = vmatprep.subr.bf16.mxu0 0
        %1637 = vmatpush1.bf16.msra.mxu0 0
        %1638 = vmatprep.subr.bf16.mxu0 0
        %1639 = vmatpush1.bf16.msra.mxu0 0
        %1640 = vmatprep.subr.bf16.mxu0 0
        %1641 = vmatpush1.bf16.msra.mxu0 0
        %1642 = vmatprep.subr.bf16.mxu0 0
        %1643 = vmatpush1.bf16.msra.mxu0 0
        %1644 = vmatprep.subr.bf16.mxu0 0
        %1645 = vmatpush1.bf16.msra.mxu0 0
        %1646 = vmatprep.subr.bf16.mxu0 0
        %1647 = vmatpush1.bf16.msra.mxu0 0
        %1648 = vmatprep.subr.bf16.mxu0 0
        %1649 = vmatpush1.bf16.msra.mxu0 0
        %1650 = vmatprep.subr.bf16.mxu0 0
        %1651 = vmatpush1.bf16.msra.mxu0 0
        %1652 = vmatprep.subr.bf16.mxu0 0
        %1653 = vmatpush1.bf16.msra.mxu0 0
        %1654 = vmatprep.subr.bf16.mxu0 0
        %1655 = vmatpush1.bf16.msra.mxu0 0
        %1656 = vmatprep.mubr.bf16.mxu0 0
        %1657 = vmatmul.mubr.bf16.gmra.mrb[0].mxu0 %v1622
        %v1658 = vpop.f32.mrb[0].mxu0
        %v1659 = vadd.f32 %v1607, %v1658
        %v1660 = vpop.f32.mrb[0].mxu0
        %v1661 = vpop.f32.mrb[0].mxu0
        %v1662 = vpop.f32.mrb[0].mxu0
        %1663 = vdwg.mxu0
        %v1664 = vmax.f32 %v1659, 0.0
        %v1665 = vpack.c.bf16 %v1664, %v1664
        %v1666 = vld [vmem:[#allocation23] sm:$0xf]
        %v1667 = vld [vmem:[#allocation23 + $0x4] sm:$0xf]
        %v1668 = vld [vmem:[#allocation23 + $0x8] sm:$0xf]
        %v1669 = vld [vmem:[#allocation23 + $0xc] sm:$0xf]
        %v1670 = vld [vmem:[#allocation23 + $0x10] sm:$0xf]
        %v1671 = vld [vmem:[#allocation23 + $0x14] sm:$0xf]
        %v1672 = vld [vmem:[#allocation23 + $0x18] sm:$0xf]
        %v1673 = vld [vmem:[#allocation23 + $0x1c] sm:$0xf]
        %v1674 = vld [vmem:[#allocation23 + $0x20] sm:$0xf]
        %v1675 = vld [vmem:[#allocation23 + $0x24] sm:$0xf]
        %v1676 = vld [vmem:[#allocation23 + $0x28] sm:$0xf]
        %v1677 = vld [vmem:[#allocation23 + $0x2c] sm:$0xf]
        %v1678 = vld [vmem:[#allocation23 + $0x30] sm:$0xf]
        %v1679 = vld [vmem:[#allocation23 + $0x34] sm:$0xf]
        %v1680 = vld [vmem:[#allocation23 + $0x38] sm:$0xf]
        %v1681 = vld [vmem:[#allocation23 + $0x3c] sm:$0xf]
        %v1682 = vld [vmem:[#allocation24] sm:$0x1]
        %v1684 = vlaneseq
        %v1685 = vshrl.u32 %v1684, 7
        %v1686 = vsub.s32 0, %v1685
        %v1687 = vrot.slane %v1682, %v1686
        %v1705 = vunpack.c.l.b16 %v1666
        %v1706 = vunpack.c.l.b16 %v1667
        %v1707 = vunpack.c.l.b16 %v1668
        %v1708 = vunpack.c.l.b16 %v1669
        %v1709 = vunpack.c.l.b16 %v1670
        %v1710 = vunpack.c.l.b16 %v1671
        %v1711 = vunpack.c.l.b16 %v1672
        %v1712 = vunpack.c.l.b16 %v1673
        %v1713 = vunpack.c.l.b16 %v1674
        %v1714 = vunpack.c.l.b16 %v1675
        %v1715 = vunpack.c.l.b16 %v1676
        %v1716 = vunpack.c.l.b16 %v1677
        %v1717 = vunpack.c.l.b16 %v1678
        %v1718 = vunpack.c.l.b16 %v1679
        %v1719 = vunpack.c.l.b16 %v1680
        %v1720 = vunpack.c.l.b16 %v1681
        %v1721 = vpack.c.b16 %v1706, %v1705
        %v1722 = vpack.c.b16 %v1708, %v1707
        %v1723 = vpack.c.b16 %v1710, %v1709
        %v1724 = vpack.c.b16 %v1712, %v1711
        %v1725 = vpack.c.b16 %v1714, %v1713
        %v1726 = vpack.c.b16 %v1716, %v1715
        %v1727 = vpack.c.b16 %v1718, %v1717
        %v1728 = vpack.c.b16 %v1720, %v1719
        %1737 = vmatprep.subr.bf16.mxu0 0
        %1738 = vmatpush1.bf16.msra.mxu0 %v1721
        %1739 = vmatprep.subr.bf16.mxu0 0
        %1740 = vmatpush1.bf16.msra.mxu0 %v1722
        %1741 = vmatprep.subr.bf16.mxu0 0
        %1742 = vmatpush1.bf16.msra.mxu0 %v1723
        %1743 = vmatprep.subr.bf16.mxu0 0
        %1744 = vmatpush1.bf16.msra.mxu0 %v1724
        %1745 = vmatprep.subr.bf16.mxu0 0
        %1746 = vmatpush1.bf16.msra.mxu0 %v1725
        %1747 = vmatprep.subr.bf16.mxu0 0
        %1748 = vmatpush1.bf16.msra.mxu0 %v1726
        %1749 = vmatprep.subr.bf16.mxu0 0
        %1750 = vmatpush1.bf16.msra.mxu0 %v1727
        %1751 = vmatprep.subr.bf16.mxu0 0
        %1752 = vmatpush1.bf16.msra.mxu0 %v1728
        %1753 = vmatprep.subr.bf16.mxu0 0
        %1754 = vmatpush1.bf16.msra.mxu0 0
        %1755 = vmatprep.subr.bf16.mxu0 0
        %1756 = vmatpush1.bf16.msra.mxu0 0
        %1757 = vmatprep.subr.bf16.mxu0 0
        %1758 = vmatpush1.bf16.msra.mxu0 0
        %1759 = vmatprep.subr.bf16.mxu0 0
        %1760 = vmatpush1.bf16.msra.mxu0 0
        %1761 = vmatprep.subr.bf16.mxu0 0
        %1762 = vmatpush1.bf16.msra.mxu0 0
        %1763 = vmatprep.subr.bf16.mxu0 0
        %1764 = vmatpush1.bf16.msra.mxu0 0
        %1765 = vmatprep.subr.bf16.mxu0 0
        %1766 = vmatpush1.bf16.msra.mxu0 0
        %1767 = vmatprep.subr.bf16.mxu0 0
        %1768 = vmatpush1.bf16.msra.mxu0 0
        %1769 = vmatprep.mubr.bf16.mxu0 0
        %1770 = vmatmul.mubr.bf16.gmra.mrb[0].mxu0 %v1665
        %v1771 = vpop.f32.mrb[0].mxu0
        %v1772 = vadd.f32 %v1687, %v1771
        %v1773 = vpop.f32.mrb[0].mxu0
        %v1774 = vpop.f32.mrb[0].mxu0
        %v1775 = vpop.f32.mrb[0].mxu0
        %1776 = vdwg.mxu0
        %v1777 = vadd.f32 %v1772, %v1596
        %v1778 = vsel %vm1501, %v1777, 0.0
        %1779 = vadd.xlane.f32.xlu0 %v1778
        %v1780 = vpop.xlane.xlu0 %1779
        %v1781 = vmul.f32 %v1780, %v1570
        %v1782 = vsub.f32 %v1777, %v1781
        %v1783 = vmul.f32 %v1782, %v1782
        %v1784 = vsel %vm1501, %v1783, 0.0
        %1785 = vadd.xlane.f32.xlu0 %v1784
        %v1786 = vpop.xlane.xlu0 %1785
        %v1787 = vmul.f32 %v1786, %v1570
        %v1788 = vadd.f32 %v1787, 1e-05
        %v1789 = vrsqrt.pop %v1788
        %v1790 = vmul.f32 %v1782, %v1789
        %v1791 = vld [vmem:[#allocation26] sm:$0x1]
        %v1793 = vlaneseq
        %v1794 = vshrl.u32 %v1793, 7
        %v1795 = vsub.s32 0, %v1794
        %v1796 = vrot.slane %v1791, %v1795
        %v1798 = vmul.f32 %v1790, %v1796
        %v1799 = vld [vmem:[#allocation27] sm:$0x1]
        %v1801 = vlaneseq
        %v1802 = vshrl.u32 %v1801, 7
        %v1803 = vsub.s32 0, %v1802
        %v1804 = vrot.slane %v1799, %v1803
        %v1806 = vadd.f32 %v1798, %v1804
        %1807 = vst.msk [vmem:[%s802] sm:$0xff] %vm1501, %v1806
        %s1808 = sand.u32 %s418, 1
        %s1809 = scalar_lea.sflag [#allocation5], %s1808
        %s1810 = sand.u32 %s418, 1
        %s1811 = smul.addr %s1810, 8
        %s1812 = scalar_lea.vmem [#allocation29], %s1811
        // Predicated region
        $region149: #{tpu_custom_call.1} parent=83 // pred_check
          %p1813 = pneg %p428
        $region150: #{tpu_custom_call.1} parent=83 // pred_check_branch
          %1815 = sbr.rel (%p1813) target = $region152
        $region151: #{tpu_custom_call.1} parent=83 // pred_region
          %s1817 = ssub.s32 128, 128
          %1818 = vsyncadd %s1809, %s1817
          %s1819 = sadd.s32 %s48, %s47
          %s1820 = smul.addr %s1819, 128
          %s1821 = scalar_lea.hbm %s16, %s1820
          %s1823 = sshll.u32 %s1812, 4
          %s1824 = int_to_ptr.vmem [resolvable:$true] %s1823
          %1826 = dma.vmem_to_hbm [thread:$0]  %s1824, 128, %s1821, %s1809
        $region152: #{tpu_custom_call.1} parent=83 // pred_fallthru
          _
      $region84: #{tpu_custom_call.1} parent=5 // pred_fallthru
        _
      %p1827 = scmp.le.s32.totalorder 2, %s38
      // Predicated region
      $region153: #{tpu_custom_call.1} parent=5 // pred_check
        %p1828 = pneg %p1827
      $region154: #{tpu_custom_call.1} parent=5 // pred_check_branch
        %1830 = sbr.rel (%p1828) target = $region156
      $region155: #{tpu_custom_call.1} parent=5 // pred_region
        %s1831 = ssub.s32 %s38, 2
        // Predicated region
        $region157: #{tpu_custom_call.1} parent=155 // pred_check
          %p1832 = pneg %p434
        $region158: #{tpu_custom_call.1} parent=155 // pred_check_branch
          %1834 = sbr.rel (%p1832) target = $region160
        $region159: #{tpu_custom_call.1} parent=155 // pred_region
          %s1835 = sand.u32 %s419, 1
          %s1836 = scalar_lea.sflag [#allocation5], %s1835
          %s1837 = sand.u32 %s419, 1
          %s1838 = smul.addr %s1837, 8
          %s1839 = scalar_lea.vmem [#allocation29], %s1838
          %1840 = dma.done %s1836, 128
        $region160: #{tpu_custom_call.1} parent=155 // pred_fallthru
          _
      $region156: #{tpu_custom_call.1} parent=5 // pred_fallthru
        _
    $region6: #{tpu_custom_call.1} parent=1 // loop_footer
      %s42 = sadd.s32 1, %s38
    $region7: #{tpu_custom_call.1} parent=1 // loop_footer_branch
      %37 = sbr.rel target = $region3
    $region8: #{tpu_custom_call.1} parent=1 // loop_exit
      _
    %1841 = vsyncpa [#allocation4], 1
    %s1842 = scalar_lea.sflag [#allocation4], 1
    %1843 = vsyncpa %s1842, 1
    %1844 = vsyncpa [#allocation7], 1
    %s1845 = scalar_lea.sflag [#allocation7], 1
    %1846 = vsyncpa %s1845, 1
    %1847 = vsyncpa [#allocation10], 1
    %1848 = vsyncpa [#allocation13], 1
    %1849 = vsyncpa [#allocation16], 1
    %1850 = vsyncpa [#allocation19], 1
    %1851 = vsyncpa [#allocation22], 1
    %1852 = vsyncpa [#allocation25], 1
    %1853 = vsyncpa [#allocation28], 1
    %1854 = vsyncpa [#allocation5], 1
    %s1855 = scalar_lea.sflag [#allocation5], 1
    %1856 = vsyncpa %s1855, 1

// kernel: tpu_custom_call.1
$region0: #{tpu_custom_call.1}
  #allocation0 [shape = 'u32[]', space=smem, size = 0x4, offset = 0x4, fixed_abs, tag = 'smem constant byte address 0x4 - core index']
  #allocation1 [shape = 'u32[144,128]{1,0:T(1,128)}', space=vmem, size = 0x12000, scoped, tag = 'internal scratch']
  #allocation2 [shape = 'f32[8,32]{1,0:T(8,128)}', space=vmem, size = 0x1000, scoped, tag = 'scratch operand']
  %s0 = inlined_call_operand.hbm [shape: bf16[2,4,8,8], index: 0, kind: input, shape index: {}]
  %s1 = inlined_call_operand.hbm [shape: bf16[2,4,8,8], index: 1, kind: input, shape index: {}]
  %s2 = inlined_call_operand.hbm [shape: bf16[2,4,8,8], index: 2, kind: input, shape index: {}]
  %s3 = inlined_call_operand.hbm [shape: bf16[8,8], index: 3, kind: input, shape index: {}]
  %s4 = inlined_call_operand.hbm [shape: bf16[8,8], index: 4, kind: input, shape index: {}]
  %s5 = inlined_call_operand.hbm [shape: bf16[8,8], index: 5, kind: input, shape index: {}]
  %s6 = inlined_call_operand.hbm [shape: bf16[32,32], index: 6, kind: input, shape index: {}]
  %s7 = inlined_call_operand.hbm [shape: f32[1,32], index: 7, kind: input, shape index: {}]
  %s8 = inlined_call_operand.hbm [shape: f32[1,32], index: 8, kind: input, shape index: {}]
  %s9 = inlined_call_operand.hbm [shape: f32[1,32], index: 9, kind: input, shape index: {}]
  %s10 = inlined_call_operand.hbm [shape: bf16[32,128], index: 10, kind: input, shape index: {}]
  %s11 = inlined_call_operand.hbm [shape: f32[1,128], index: 11, kind: input, shape index: {}]
  %s12 = inlined_call_operand.hbm [shape: bf16[128,32], index: 12, kind: input, shape index: {}]
  %s13 = inlined_call_operand.hbm [shape: f32[1,32], index: 13, kind: input, shape index: {}]
  %s14 = inlined_call_operand.hbm [shape: f32[1,32], index: 14, kind: input, shape index: {}]
  %s15 = inlined_call_operand.hbm [shape: f32[1,32], index: 15, kind: input, shape index: {}]
  %s16 = inlined_call_operand.hbm [shape: f32[2,8,32], index: 16, kind: output, shape index: {}]
  %s17 = sld [smem:[#allocation0]]
  $region161: #{tpu_custom_call.1} parent=0
    _
  %s19 = ssub.s32 1, %s17
  %s20 = scalar_select 0, %s19, %s17
  $region1: #{tpu_custom_call.1} parent=0
    #allocation3 [shape = 'u8[16384]{0}', space=vmem, size = 0x4000, scoped, tag = 'input window, operand 0']
    #allocation4 [shape = 's32[2]{0}', space=sflag, size = 0x8, scoped, tag = 'scoped memory for tpu_custom_call.1']
    #allocation5 [shape = 's32[2]{0}', space=sflag, size = 0x8, scoped, tag = 'scoped memory for tpu_custom_call.1']
    #allocation6 [shape = 'u8[16384]{0}', space=vmem, size = 0x4000, scoped, tag = 'input window, operand 1']
    #allocation7 [shape = 's32[2]{0}', space=sflag, size = 0x8, scoped, tag = 'scoped memory for tpu_custom_call.1']
    #allocation8 [shape = 'u8[16384]{0}', space=vmem, size = 0x4000, scoped, tag = 'input window, operand 2']
    #allocation9 [shape = 'u8[2048]{0}', space=vmem, size = 0x800, scoped, tag = 'input window, operand 3, single buffered']
    #allocation10 [shape = 's32[1]{0}', space=sflag, size = 0x4, scoped, tag = 'scoped memory for tpu_custom_call.1']
    #allocation11 [shape = 'u8[2048]{0}', space=vmem, size = 0x800, scoped, tag = 'input window, operand 4, single buffered']
    #allocation12 [shape = 'u8[2048]{0}', space=vmem, size = 0x800, scoped, tag = 'input window, operand 5, single buffered']
    #allocation13 [shape = 's32[1]{0}', space=sflag, size = 0x4, scoped, tag = 'scoped memory for tpu_custom_call.1']
    #allocation14 [shape = 'u8[8192]{0}', space=vmem, size = 0x2000, scoped, tag = 'input window, operand 6, single buffered']
    #allocation15 [shape = 'u8[512]{0}', space=vmem, size = 0x400, scoped, tag = 'input window, operand 7, single buffered']
    #allocation16 [shape = 's32[1]{0}', space=sflag, size = 0x4, scoped, tag = 'scoped memory for tpu_custom_call.1']
    #allocation17 [shape = 'u8[512]{0}', space=vmem, size = 0x400, scoped, tag = 'input window, operand 8, single buffered']
    #allocation18 [shape = 'u8[512]{0}', space=vmem, size = 0x400, scoped, tag = 'input window, operand 9, single buffered']
    #allocation19 [shape = 's32[1]{0}', space=sflag, size = 0x4, scoped, tag = 'scoped memory for tpu_custom_call.1']
    #allocation20 [shape = 'u8[8192]{0}', space=vmem, size = 0x2000, scoped, tag = 'input window, operand 10, single buffered']
    #allocation21 [shape = 'u8[512]{0}', space=vmem, size = 0x400, scoped, tag = 'input window, operand 11, single buffered']
    #allocation22 [shape = 's32[1]{0}', space=sflag, size = 0x4, scoped, tag = 'scoped memory for tpu_custom_call.1']
    #allocation23 [shape = 'u8[32768]{0}', space=vmem, size = 0x8000, scoped, tag = 'input window, operand 12, single buffered']
    #allocation24 [shape = 'u8[512]{0}', space=vmem, size = 0x400, scoped, tag = 'input window, operand 13, single buffered']
    #allocation25 [shape = 's32[1]{0}', space=sflag, size = 0x4, scoped, tag = 'scoped memory for tpu_custom_call.1']
    #allocation26 [shape = 'u8[512]{0}', space=vmem, size = 0x400, scoped, tag = 'input window, operand 14, single buffered']
    #allocation27 [shape = 'u8[512]{0}', space=vmem, size = 0x400, scoped, tag = 'input window, operand 15, single buffered']
    #allocation28 [shape = 's32[1]{0}', space=sflag, size = 0x4, scoped, tag = 'scoped memory for tpu_custom_call.1']
    #allocation29 [shape = 'u8[8192]{0}', space=vmem, size = 0x2000, scoped, tag = 'output window, operand 0']
    %21 = vsyncpa [#allocation4], 0
    %s22 = scalar_lea.sflag [#allocation4], 1
    %23 = vsyncpa %s22, 0
    %24 = vsyncpa [#allocation7], 0
    %s25 = scalar_lea.sflag [#allocation7], 1
    %26 = vsyncpa %s25, 0
    %27 = vsyncpa [#allocation10], 0
    %28 = vsyncpa [#allocation13], 0
    %29 = vsyncpa [#allocation16], 0
    %30 = vsyncpa [#allocation19], 0
    %31 = vsyncpa [#allocation22], 0
    %32 = vsyncpa [#allocation25], 0
    %33 = vsyncpa [#allocation28], 0
    %34 = vsyncpa [#allocation5], 0
    %s35 = scalar_lea.sflag [#allocation5], 1
    %36 = vsyncpa %s35, 0
    loop: start=0, step=1, limit=4
    $region2: #{tpu_custom_call.1} parent=1 // loop_pre_header
      _
    $region3: #{tpu_custom_call.1} parent=1 // loop_header
      %s38 = sphi 0, %s42
      %p39 = scmp.ge.s32.totalorder %s38, 4
      %s45 = sphi 0, %s57
      %s46 = sphi 0, %s53
      %s47 = sphi 0, %s45
      %s48 = sphi 0, %s46
      %s49 = sphi 0, %s47
      %s50 = sphi 0, %s48
      %s60 = sphi 0, %s62
      %s63 = sphi 0, %s60
      %s64 = sphi 0, %s63
      %s80 = sphi 0, %s64
      %s86 = sphi 0, %s88
      %s89 = sphi 0, %s86
      %s90 = sphi 0, %s89
      %s106 = sphi 0, %s90
      %s114 = sphi 0, %s116
      %s117 = sphi 0, %s114
      %s118 = sphi 0, %s117
      %s134 = sphi 0, %s118
      %s138 = sphi 0, %s138
      %s140 = sphi 0, %s138
      %s141 = sphi 0, %s140
      %s155 = sphi 0, %s141
      %s159 = sphi 0, %s159
      %s161 = sphi 0, %s159
      %s162 = sphi 0, %s161
      %s176 = sphi 0, %s162
      %s180 = sphi 0, %s180
      %s182 = sphi 0, %s180
      %s183 = sphi 0, %s182
      %s197 = sphi 0, %s183
      %s201 = sphi 0, %s201
      %s203 = sphi 0, %s201
      %s204 = sphi 0, %s203
      %s218 = sphi 0, %s204
      %s222 = sphi 0, %s222
      %s224 = sphi 0, %s222
      %s225 = sphi 0, %s224
      %s239 = sphi 0, %s225
      %s243 = sphi 0, %s243
      %s245 = sphi 0, %s243
      %s246 = sphi 0, %s245
      %s260 = sphi 0, %s246
      %s264 = sphi 0, %s264
      %s266 = sphi 0, %s264
      %s267 = sphi 0, %s266
      %s281 = sphi 0, %s267
      %s285 = sphi 0, %s285
      %s287 = sphi 0, %s285
      %s288 = sphi 0, %s287
      %s302 = sphi 0, %s288
      %s306 = sphi 0, %s306
      %s308 = sphi 0, %s306
      %s309 = sphi 0, %s308
      %s323 = sphi 0, %s309
      %s327 = sphi 0, %s327
      %s329 = sphi 0, %s327
      %s330 = sphi 0, %s329
      %s344 = sphi 0, %s330
      %s348 = sphi 0, %s348
      %s350 = sphi 0, %s348
      %s351 = sphi 0, %s350
      %s365 = sphi 0, %s351
      %s369 = sphi 0, %s369
      %s371 = sphi 0, %s369
      %s372 = sphi 0, %s371
      %s386 = sphi 0, %s372
      %s390 = sphi 0, %s390
      %s392 = sphi 0, %s390
      %s393 = sphi 0, %s392
      %s407 = sphi 0, %s393
      %s415 = sphi 0, %s417
      %s418 = sphi 0, %s415
      %s419 = sphi 0, %s418
      %s435 = sphi 0, %s419
    $region4: #{tpu_custom_call.1} parent=1 // loop_header_branch
      %41 = sbr.rel (%p39) target = $region8
    $region5: #{tpu_custom_call.1} parent=1 // loop_body
      %s43 = ssub.s32 %s38, 1
      %s44 = ssub.s32 %s38, 2
      %s51 = sadd.s32 1, %s46
      %p52 = scmp.ge.s32.totalorder %s51, 1
      %s53 = scalar_select %p52, 0, %s51
      %s54 = sadd.s32 1, %s45
      %s55 = scalar_select %p52, %s54, %s45
      %p56 = scmp.ge.s32.totalorder %s55, 2
      %s57 = scalar_select %p56, 0, %s55
      %s58 = ssub.s32 %s45, %s57
      %p59 = scmp.eq.s32.totalorder %s58, 0
      %s61 = sadd.s32 %s60, 1
      %s62 = scalar_select %p59, %s60, %s61
      %p65 = pneg %p59
      %p66 = scmp.eq.s32.totalorder %s38, 1
      %p67 = por %p65, %p66
      %p68 = scmp.ne.s32.totalorder %s60, %s63
      %p69 = scmp.eq.s32.totalorder %s38, 0
      %p70 = por %p68, %p69
      %p71 = scmp.ne.s32.totalorder %s60, %s63
      %p72 = scmp.eq.s32.totalorder %s43, 1
      %p73 = por %p71, %p72
      %p74 = scmp.ne.s32.totalorder %s63, %s64
      %p75 = scmp.eq.s32.totalorder %s43, 0
      %p76 = por %p74, %p75
      %p77 = scmp.ne.s32.totalorder %s63, %s64
      %p78 = scmp.eq.s32.totalorder %s44, 1
      %p79 = por %p77, %p78
      %p81 = scmp.ne.s32.totalorder %s64, %s80
      %p82 = scmp.eq.s32.totalorder %s44, 0
      %p83 = por %p81, %p82
      %s84 = ssub.s32 %s45, %s57
      %p85 = scmp.eq.s32.totalorder %s84, 0
      %s87 = sadd.s32 %s86, 1
      %s88 = scalar_select %p85, %s86, %s87
      %p91 = pneg %p85
      %p92 = scmp.eq.s32.totalorder %s38, 1
      %p93 = por %p91, %p92
      %p94 = scmp.ne.s32.totalorder %s86, %s89
      %p95 = scmp.eq.s32.totalorder %s38, 0
      %p96 = por %p94, %p95
      %p97 = scmp.ne.s32.totalorder %s86, %s89
      %p98 = scmp.eq.s32.totalorder %s43, 1
      %p99 = por %p97, %p98
      %p100 = scmp.ne.s32.totalorder %s89, %s90
      %p101 = scmp.eq.s32.totalorder %s43, 0
      %p102 = por %p100, %p101
      %p103 = scmp.ne.s32.totalorder %s89, %s90
      %p104 = scmp.eq.s32.totalorder %s44, 1
      %p105 = por %p103, %p104
      %p107 = scmp.ne.s32.totalorder %s90, %s106
      %p108 = scmp.eq.s32.totalorder %s44, 0
      %p109 = por %p107, %p108
      %s110 = ssub.s32 %s45, %s57
      %s111 = ssub.s32 %s46, %s53
      %s112 = sor.u32 %s110, %s111
      %p113 = scmp.eq.s32.totalorder %s112, 0
      %s115 = sadd.s32 %s114, 1
      %s116 = scalar_select %p113, %s114, %s115
      %p119 = pneg %p113
      %p120 = scmp.eq.s32.totalorder %s38, 1
      %p121 = por %p119, %p120
      %p122 = scmp.ne.s32.totalorder %s114, %s117
      %p123 = scmp.eq.s32.totalorder %s38, 0
      %p124 = por %p122, %p123
      %p125 = scmp.ne.s32.totalorder %s114, %s117
      %p126 = scmp.eq.s32.totalorder %s43, 1
      %p127 = por %p125, %p126
      %p128 = scmp.ne.s32.totalorder %s117, %s118
      %p129 = scmp.eq.s32.totalorder %s43, 0
      %p130 = por %p128, %p129
      %p131 = scmp.ne.s32.totalorder %s117, %s118
      %p132 = scmp.eq.s32.totalorder %s44, 1
      %p133 = por %p131, %p132
      %p135 = scmp.ne.s32.totalorder %s118, %s134
      %p136 = scmp.eq.s32.totalorder %s44, 0
      %p137 = por %p135, %p136
      %s139 = sadd.s32 %s138, 1
      %p142 = scmp.eq.s32.totalorder %s38, 1
      %p143 = scmp.ne.s32.totalorder %s138, %s140
      %p144 = scmp.eq.s32.totalorder %s38, 0
      %p145 = por %p143, %p144
      %p146 = scmp.ne.s32.totalorder %s138, %s140
      %p147 = scmp.eq.s32.totalorder %s43, 1
      %p148 = por %p146, %p147
      %p149 = scmp.ne.s32.totalorder %s140, %s141
      %p150 = scmp.eq.s32.totalorder %s43, 0
      %p151 = por %p149, %p150
      %p152 = scmp.ne.s32.totalorder %s140, %s141
      %p153 = scmp.eq.s32.totalorder %s44, 1
      %p154 = por %p152, %p153
      %p156 = scmp.ne.s32.totalorder %s141, %s155
      %p157 = scmp.eq.s32.totalorder %s44, 0
      %p158 = por %p156, %p157
      %s160 = sadd.s32 %s159, 1
      %p163 = scmp.eq.s32.totalorder %s38, 1
      %p164 = scmp.ne.s32.totalorder %s159, %s161
      %p165 = scmp.eq.s32.totalorder %s38, 0
      %p166 = por %p164, %p165
      %p167 = scmp.ne.s32.totalorder %s159, %s161
      %p168 = scmp.eq.s32.totalorder %s43, 1
      %p169 = por %p167, %p168
      %p170 = scmp.ne.s32.totalorder %s161, %s162
      %p171 = scmp.eq.s32.totalorder %s43, 0
      %p172 = por %p170, %p171
      %p173 = scmp.ne.s32.totalorder %s161, %s162
      %p174 = scmp.eq.s32.totalorder %s44, 1
      %p175 = por %p173, %p174
      %p177 = scmp.ne.s32.totalorder %s162, %s176
      %p178 = scmp.eq.s32.totalorder %s44, 0
      %p179 = por %p177, %p178
      %s181 = sadd.s32 %s180, 1
      %p184 = scmp.eq.s32.totalorder %s38, 1
      %p185 = scmp.ne.s32.totalorder %s180, %s182
      %p186 = scmp.eq.s32.totalorder %s38, 0
      %p187 = por %p185, %p186
      %p188 = scmp.ne.s32.totalorder %s180, %s182
      %p189 = scmp.eq.s32.totalorder %s43, 1
      %p190 = por %p188, %p189
      %p191 = scmp.ne.s32.totalorder %s182, %s183
      %p192 = scmp.eq.s32.totalorder %s43, 0
      %p193 = por %p191, %p192
      %p194 = scmp.ne.s32.totalorder %s182, %s183
      %p195 = scmp.eq.s32.totalorder %s44, 1
      %p196 = por %p194, %p195
      %p198 = scmp.ne.s32.totalorder %s183, %s197
      %p199 = scmp.eq.s32.totalorder %s44, 0
      %p200 = por %p198, %p199
      %s202 = sadd.s32 %s201, 1
      %p205 = scmp.eq.s32.totalorder %s38, 1
      %p206 = scmp.ne.s32.totalorder %s201, %s203
      %p207 = scmp.eq.s32.totalorder %s38, 0
      %p208 = por %p206, %p207
      %p209 = scmp.ne.s32.totalorder %s201, %s203
      %p210 = scmp.eq.s32.totalorder %s43, 1
      %p211 = por %p209, %p210
      %p212 = scmp.ne.s32.totalorder %s203, %s204
      %p213 = scmp.eq.s32.totalorder %s43, 0
      %p214 = por %p212, %p213
      %p215 = scmp.ne.s32.totalorder %s203, %s204
      %p216 = scmp.eq.s32.totalorder %s44, 1
      %p217 = por %p215, %p216
      %p219 = scmp.ne.s32.totalorder %s204, %s218
      %p220 = scmp.eq.s32.totalorder %s44, 0
      %p221 = por %p219, %p220
      %s223 = sadd.s32 %s222, 1
      %p226 = scmp.eq.s32.totalorder %s38, 1
      %p227 = scmp.ne.s32.totalorder %s222, %s224
      %p228 = scmp.eq.s32.totalorder %s38, 0
      %p229 = por %p227, %p228
      %p230 = scmp.ne.s32.totalorder %s222, %s224
      %p231 = scmp.eq.s32.totalorder %s43, 1
      %p232 = por %p230, %p231
      %p233 = scmp.ne.s32.totalorder %s224, %s225
      %p234 = scmp.eq.s32.totalorder %s43, 0
      %p235 = por %p233, %p234
      %p236 = scmp.ne.s32.totalorder %s224, %s225
      %p237 = scmp.eq.s32.totalorder %s44, 1
      %p238 = por %p236, %p237
      %p240 = scmp.ne.s32.totalorder %s225, %s239
      %p241 = scmp.eq.s32.totalorder %s44, 0
      %p242 = por %p240, %p241
      %s244 = sadd.s32 %s243, 1
      %p247 = scmp.eq.s32.totalorder %s38, 1
      %p248 = scmp.ne.s32.totalorder %s243, %s245
      %p249 = scmp.eq.s32.totalorder %s38, 0
      %p250 = por %p248, %p249
      %p251 = scmp.ne.s32.totalorder %s243, %s245
      %p252 = scmp.eq.s32.totalorder %s43, 1
      %p253 = por %p251, %p252
      %p254 = scmp.ne.s32.totalorder %s245, %s246
      %p255 = scmp.eq.s32.totalorder %s43, 0
      %p256 = por %p254, %p255
      %p257 = scmp.ne.s32.totalorder %s245, %s246
      %p258 = scmp.eq.s32.totalorder %s44, 1
      %p259 = por %p257, %p258
      %p261 = scmp.ne.s32.totalorder %s246, %s260
      %p262 = scmp.eq.s32.totalorder %s44, 0
      %p263 = por %p261, %p262
      %s265 = sadd.s32 %s264, 1
      %p268 = scmp.eq.s32.totalorder %s38, 1
      %p269 = scmp.ne.s32.totalorder %s264, %s266
      %p270 = scmp.eq.s32.totalorder %s38, 0
      %p271 = por %p269, %p270
      %p272 = scmp.ne.s32.totalorder %s264, %s266
      %p273 = scmp.eq.s32.totalorder %s43, 1
      %p274 = por %p272, %p273
      %p275 = scmp.ne.s32.totalorder %s266, %s267
      %p276 = scmp.eq.s32.totalorder %s43, 0
      %p277 = por %p275, %p276
      %p278 = scmp.ne.s32.totalorder %s266, %s267
      %p279 = scmp.eq.s32.totalorder %s44, 1
      %p280 = por %p278, %p279
      %p282 = scmp.ne.s32.totalorder %s267, %s281
      %p283 = scmp.eq.s32.totalorder %s44, 0
      %p284 = por %p282, %p283
      %s286 = sadd.s32 %s285, 1
      %p289 = scmp.eq.s32.totalorder %s38, 1
      %p290 = scmp.ne.s32.totalorder %s285, %s287
      %p291 = scmp.eq.s32.totalorder %s38, 0
      %p292 = por %p290, %p291
      %p293 = scmp.ne.s32.totalorder %s285, %s287
      %p294 = scmp.eq.s32.totalorder %s43, 1
      %p295 = por %p293, %p294
      %p296 = scmp.ne.s32.totalorder %s287, %s288
      %p297 = scmp.eq.s32.totalorder %s43, 0
      %p298 = por %p296, %p297
      %p299 = scmp.ne.s32.totalorder %s287, %s288
      %p300 = scmp.eq.s32.totalorder %s44, 1
      %p301 = por %p299, %p300
      %p303 = scmp.ne.s32.totalorder %s288, %s302
      %p304 = scmp.eq.s32.totalorder %s44, 0
      %p305 = por %p303, %p304
      %s307 = sadd.s32 %s306, 1
      %p310 = scmp.eq.s32.totalorder %s38, 1
      %p311 = scmp.ne.s32.totalorder %s306, %s308
      %p312 = scmp.eq.s32.totalorder %s38, 0
      %p313 = por %p311, %p312
      %p314 = scmp.ne.s32.totalorder %s306, %s308
      %p315 = scmp.eq.s32.totalorder %s43, 1
      %p316 = por %p314, %p315
      %p317 = scmp.ne.s32.totalorder %s308, %s309
      %p318 = scmp.eq.s32.totalorder %s43, 0
      %p319 = por %p317, %p318
      %p320 = scmp.ne.s32.totalorder %s308, %s309
      %p321 = scmp.eq.s32.totalorder %s44, 1
      %p322 = por %p320, %p321
      %p324 = scmp.ne.s32.totalorder %s309, %s323
      %p325 = scmp.eq.s32.totalorder %s44, 0
      %p326 = por %p324, %p325
      %s328 = sadd.s32 %s327, 1
      %p331 = scmp.eq.s32.totalorder %s38, 1
      %p332 = scmp.ne.s32.totalorder %s327, %s329
      %p333 = scmp.eq.s32.totalorder %s38, 0
      %p334 = por %p332, %p333
      %p335 = scmp.ne.s32.totalorder %s327, %s329
      %p336 = scmp.eq.s32.totalorder %s43, 1
      %p337 = por %p335, %p336
      %p338 = scmp.ne.s32.totalorder %s329, %s330
      %p339 = scmp.eq.s32.totalorder %s43, 0
      %p340 = por %p338, %p339
      %p341 = scmp.ne.s32.totalorder %s329, %s330
      %p342 = scmp.eq.s32.totalorder %s44, 1
      %p343 = por %p341, %p342
      %p345 = scmp.ne.s32.totalorder %s330, %s344
      %p346 = scmp.eq.s32.totalorder %s44, 0
      %p347 = por %p345, %p346
      %s349 = sadd.s32 %s348, 1
      %p352 = scmp.eq.s32.totalorder %s38, 1
      %p353 = scmp.ne.s32.totalorder %s348, %s350
      %p354 = scmp.eq.s32.totalorder %s38, 0
      %p355 = por %p353, %p354
      %p356 = scmp.ne.s32.totalorder %s348, %s350
      %p357 = scmp.eq.s32.totalorder %s43, 1
      %p358 = por %p356, %p357
      %p359 = scmp.ne.s32.totalorder %s350, %s351
      %p360 = scmp.eq.s32.totalorder %s43, 0
      %p361 = por %p359, %p360
      %p362 = scmp.ne.s32.totalorder %s350, %s351
      %p363 = scmp.eq.s32.totalorder %s44, 1
      %p364 = por %p362, %p363
      %p366 = scmp.ne.s32.totalorder %s351, %s365
      %p367 = scmp.eq.s32.totalorder %s44, 0
      %p368 = por %p366, %p367
      %s370 = sadd.s32 %s369, 1
      %p373 = scmp.eq.s32.totalorder %s38, 1
      %p374 = scmp.ne.s32.totalorder %s369, %s371
      %p375 = scmp.eq.s32.totalorder %s38, 0
      %p376 = por %p374, %p375
      %p377 = scmp.ne.s32.totalorder %s369, %s371
      %p378 = scmp.eq.s32.totalorder %s43, 1
      %p379 = por %p377, %p378
      %p380 = scmp.ne.s32.totalorder %s371, %s372
      %p381 = scmp.eq.s32.totalorder %s43, 0
      %p382 = por %p380, %p381
      %p383 = scmp.ne.s32.totalorder %s371, %s372
      %p384 = scmp.eq.s32.totalorder %s44, 1
      %p385 = por %p383, %p384
      %p387 = scmp.ne.s32.totalorder %s372, %s386
      %p388 = scmp.eq.s32.totalorder %s44, 0
      %p389 = por %p387, %p388
      %s391 = sadd.s32 %s390, 1
      %p394 = scmp.eq.s32.totalorder %s38, 1
      %p395 = scmp.ne.s32.totalorder %s390, %s392
      %p396 = scmp.eq.s32.totalorder %s38, 0
      %p397 = por %p395, %p396
      %p398 = scmp.ne.s32.totalorder %s390, %s392
      %p399 = scmp.eq.s32.totalorder %s43, 1
      %p400 = por %p398, %p399
      %p401 = scmp.ne.s32.totalorder %s392, %s393
      %p402 = scmp.eq.s32.totalorder %s43, 0
      %p403 = por %p401, %p402
      %p404 = scmp.ne.s32.totalorder %s392, %s393
      %p405 = scmp.eq.s32.totalorder %s44, 1
      %p406 = por %p404, %p405
      %p408 = scmp.ne.s32.totalorder %s393, %s407
      %p409 = scmp.eq.s32.totalorder %s44, 0
      %p410 = por %p408, %p409
      %s411 = ssub.s32 %s45, %s57
      %s412 = ssub.s32 %s46, %s53
      %s413 = sor.u32 %s411, %s412
      %p414 = scmp.eq.s32.totalorder %s413, 0
      %s416 = sadd.s32 %s415, 1
      %s417 = scalar_select %p414, %s415, %s416
      %p420 = pneg %p414
      %p421 = scmp.eq.s32.totalorder %s38, 1
      %p422 = por %p420, %p421
      %p423 = scmp.ne.s32.totalorder %s415, %s418
      %p424 = scmp.eq.s32.totalorder %s38, 0
      %p425 = por %p423, %p424
      %p426 = scmp.ne.s32.totalorder %s415, %s418
      %p427 = scmp.eq.s32.totalorder %s43, 1
      %p428 = por %p426, %p427
      %p429 = scmp.ne.s32.totalorder %s418, %s419
      %p430 = scmp.eq.s32.totalorder %s43, 0
      %p431 = por %p429, %p430
      %p432 = scmp.ne.s32.totalorder %s418, %s419
      %p433 = scmp.eq.s32.totalorder %s44, 1
      %p434 = por %p432, %p433
      %p436 = scmp.ne.s32.totalorder %s419, %s435
      %p437 = scmp.eq.s32.totalorder %s44, 0
      %p438 = por %p436, %p437
      %p439 = scmp.le.s32.totalorder 1, %s38
      %p440 = scmp.lt.s32.totalorder %s38, 3
      %p441 = pnand %p439, %p440
      %p442 = pneg %p441
      // Predicated region
      $region9: #{tpu_custom_call.1} parent=5 // pred_check
        _
      $region10: #{tpu_custom_call.1} parent=5 // pred_check_branch
        %444 = sbr.rel (%p441) target = $region12
      $region11: #{tpu_custom_call.1} parent=5 // pred_region
        %s445 = ssub.s32 %s38, 1
        // Predicated region
        $region13: #{tpu_custom_call.1} parent=11 // pred_check
          %p446 = pneg %p151
        $region14: #{tpu_custom_call.1} parent=11 // pred_check_branch
          %448 = sbr.rel (%p446) target = $region16
        $region15: #{tpu_custom_call.1} parent=11 // pred_region
          %s450 = ssub.s32 64, 64
          %451 = vsyncadd [#allocation10], %s450
          %s453 = sshll.u32 [#allocation9], 4
          %s454 = int_to_ptr.vmem [resolvable:$true] %s453
          %456 = dma.hbm_to_vmem [thread:$0]  %s3, 64, %s454, [#allocation10]
        $region16: #{tpu_custom_call.1} parent=11 // pred_fallthru
          _
        // Predicated region
        $region17: #{tpu_custom_call.1} parent=11 // pred_check
          %p457 = pneg %p172
        $region18: #{tpu_custom_call.1} parent=11 // pred_check_branch
          %459 = sbr.rel (%p457) target = $region20
        $region19: #{tpu_custom_call.1} parent=11 // pred_region
          %s461 = ssub.s32 64, 64
          %462 = vsyncadd [#allocation10], %s461
          %s464 = sshll.u32 [#allocation11], 4
          %s465 = int_to_ptr.vmem [resolvable:$true] %s464
          %467 = dma.hbm_to_vmem [thread:$0]  %s4, 64, %s465, [#allocation10]
        $region20: #{tpu_custom_call.1} parent=11 // pred_fallthru
          _
        // Predicated region
        $region21: #{tpu_custom_call.1} parent=11 // pred_check
          %p468 = pneg %p193
        $region22: #{tpu_custom_call.1} parent=11 // pred_check_branch
          %470 = sbr.rel (%p468) target = $region24
        $region23: #{tpu_custom_call.1} parent=11 // pred_region
          %s472 = ssub.s32 64, 64
          %473 = vsyncadd [#allocation13], %s472
          %s475 = sshll.u32 [#allocation12], 4
          %s476 = int_to_ptr.vmem [resolvable:$true] %s475
          %478 = dma.hbm_to_vmem [thread:$0]  %s5, 64, %s476, [#allocation13]
        $region24: #{tpu_custom_call.1} parent=11 // pred_fallthru
          _
        // Predicated region
        $region25: #{tpu_custom_call.1} parent=11 // pred_check
          %p479 = pneg %p214
        $region26: #{tpu_custom_call.1} parent=11 // pred_check_branch
          %481 = sbr.rel (%p479) target = $region28
        $region27: #{tpu_custom_call.1} parent=11 // pred_region
          %s483 = ssub.s32 256, 256
          %484 = vsyncadd [#allocation13], %s483
          %s485 = sshll.u32 [#allocation14], 4
          %s486 = int_to_ptr.vmem [resolvable:$true] %s485
          %491 = dma.hbm_to_vmem [thread:$0]  %s6, 256, %s486, [#allocation13], 64, 64, 4
        $region28: #{tpu_custom_call.1} parent=11 // pred_fallthru
          _
        // Predicated region
        $region29: #{tpu_custom_call.1} parent=11 // pred_check
          %p492 = pneg %p235
        $region30: #{tpu_custom_call.1} parent=11 // pred_check_branch
          %494 = sbr.rel (%p492) target = $region32
        $region31: #{tpu_custom_call.1} parent=11 // pred_region
          %s496 = ssub.s32 16, 16
          %497 = vsyncadd [#allocation16], %s496
          %s499 = sshll.u32 [#allocation15], 4
          %s500 = int_to_ptr.vmem [resolvable:$true] %s499
          %502 = dma.hbm_to_vmem [thread:$0]  %s7, 16, %s500, [#allocation16]
        $region32: #{tpu_custom_call.1} parent=11 // pred_fallthru
          _
        // Predicated region
        $region33: #{tpu_custom_call.1} parent=11 // pred_check
          %p503 = pneg %p256
        $region34: #{tpu_custom_call.1} parent=11 // pred_check_branch
          %505 = sbr.rel (%p503) target = $region36
        $region35: #{tpu_custom_call.1} parent=11 // pred_region
          %s507 = ssub.s32 16, 16
          %508 = vsyncadd [#allocation16], %s507
          %s510 = sshll.u32 [#allocation17], 4
          %s511 = int_to_ptr.vmem [resolvable:$true] %s510
          %513 = dma.hbm_to_vmem [thread:$0]  %s8, 16, %s511, [#allocation16]
        $region36: #{tpu_custom_call.1} parent=11 // pred_fallthru
          _
        // Predicated region
        $region37: #{tpu_custom_call.1} parent=11 // pred_check
          %p514 = pneg %p277
        $region38: #{tpu_custom_call.1} parent=11 // pred_check_branch
          %516 = sbr.rel (%p514) target = $region40
        $region39: #{tpu_custom_call.1} parent=11 // pred_region
          %s518 = ssub.s32 16, 16
          %519 = vsyncadd [#allocation19], %s518
          %s521 = sshll.u32 [#allocation18], 4
          %s522 = int_to_ptr.vmem [resolvable:$true] %s521
          %524 = dma.hbm_to_vmem [thread:$0]  %s9, 16, %s522, [#allocation19]
        $region40: #{tpu_custom_call.1} parent=11 // pred_fallthru
          _
        // Predicated region
        $region41: #{tpu_custom_call.1} parent=11 // pred_check
          %p525 = pneg %p298
        $region42: #{tpu_custom_call.1} parent=11 // pred_check_branch
          %527 = sbr.rel (%p525) target = $region44
        $region43: #{tpu_custom_call.1} parent=11 // pred_region
          %s529 = ssub.s32 256, 256
          %530 = vsyncadd [#allocation19], %s529
          %s531 = sshll.u32 [#allocation20], 4
          %s532 = int_to_ptr.vmem [resolvable:$true] %s531
          %537 = dma.hbm_to_vmem [thread:$0]  %s10, 256, %s532, [#allocation19], 64, 64, 4
        $region44: #{tpu_custom_call.1} parent=11 // pred_fallthru
          _
        // Predicated region
        $region45: #{tpu_custom_call.1} parent=11 // pred_check
          %p538 = pneg %p319
        $region46: #{tpu_custom_call.1} parent=11 // pred_check_branch
          %540 = sbr.rel (%p538) target = $region48
        $region47: #{tpu_custom_call.1} parent=11 // pred_region
          %s542 = ssub.s32 16, 16
          %543 = vsyncadd [#allocation22], %s542
          %s545 = sshll.u32 [#allocation21], 4
          %s546 = int_to_ptr.vmem [resolvable:$true] %s545
          %548 = dma.hbm_to_vmem [thread:$0]  %s11, 16, %s546, [#allocation22]
        $region48: #{tpu_custom_call.1} parent=11 // pred_fallthru
          _
        // Predicated region
        $region49: #{tpu_custom_call.1} parent=11 // pred_check
          %p549 = pneg %p340
        $region50: #{tpu_custom_call.1} parent=11 // pred_check_branch
          %551 = sbr.rel (%p549) target = $region52
        $region51: #{tpu_custom_call.1} parent=11 // pred_region
          %s553 = ssub.s32 1024, 1024
          %554 = vsyncadd [#allocation22], %s553
          %s555 = sshll.u32 [#allocation23], 4
          %s556 = int_to_ptr.vmem [resolvable:$true] %s555
          %561 = dma.hbm_to_vmem [thread:$0]  %s12, 1024, %s556, [#allocation22], 64, 64, 4
        $region52: #{tpu_custom_call.1} parent=11 // pred_fallthru
          _
        // Predicated region
        $region53: #{tpu_custom_call.1} parent=11 // pred_check
          %p562 = pneg %p361
        $region54: #{tpu_custom_call.1} parent=11 // pred_check_branch
          %564 = sbr.rel (%p562) target = $region56
        $region55: #{tpu_custom_call.1} parent=11 // pred_region
          %s566 = ssub.s32 16, 16
          %567 = vsyncadd [#allocation25], %s566
          %s569 = sshll.u32 [#allocation24], 4
          %s570 = int_to_ptr.vmem [resolvable:$true] %s569
          %572 = dma.hbm_to_vmem [thread:$0]  %s13, 16, %s570, [#allocation25]
        $region56: #{tpu_custom_call.1} parent=11 // pred_fallthru
          _
        // Predicated region
        $region57: #{tpu_custom_call.1} parent=11 // pred_check
          %p573 = pneg %p382
        $region58: #{tpu_custom_call.1} parent=11 // pred_check_branch
          %575 = sbr.rel (%p573) target = $region60
        $region59: #{tpu_custom_call.1} parent=11 // pred_region
          %s577 = ssub.s32 16, 16
          %578 = vsyncadd [#allocation25], %s577
          %s580 = sshll.u32 [#allocation26], 4
          %s581 = int_to_ptr.vmem [resolvable:$true] %s580
          %583 = dma.hbm_to_vmem [thread:$0]  %s14, 16, %s581, [#allocation25]
        $region60: #{tpu_custom_call.1} parent=11 // pred_fallthru
          _
        // Predicated region
        $region61: #{tpu_custom_call.1} parent=11 // pred_check
          %p584 = pneg %p403
        $region62: #{tpu_custom_call.1} parent=11 // pred_check_branch
          %586 = sbr.rel (%p584) target = $region64
        $region63: #{tpu_custom_call.1} parent=11 // pred_region
          %s588 = ssub.s32 16, 16
          %589 = vsyncadd [#allocation28], %s588
          %s591 = sshll.u32 [#allocation27], 4
          %s592 = int_to_ptr.vmem [resolvable:$true] %s591
          %594 = dma.hbm_to_vmem [thread:$0]  %s15, 16, %s592, [#allocation28]
        $region64: #{tpu_custom_call.1} parent=11 // pred_fallthru
          _
      $region12: #{tpu_custom_call.1} parent=5 // pred_fallthru
        _
      %p595 = scmp.lt.s32.totalorder %s38, 2
      // Predicated region
      $region65: #{tpu_custom_call.1} parent=5 // pred_check
        %p596 = pneg %p595
      $region66: #{tpu_custom_call.1} parent=5 // pred_check_branch
        %598 = sbr.rel (%p596) target = $region68
      $region67: #{tpu_custom_call.1} parent=5 // pred_region
        // Predicated region
        $region69: #{tpu_custom_call.1} parent=67 // pred_check
          %p599 = pneg %p70
        $region70: #{tpu_custom_call.1} parent=67 // pred_check_branch
          %601 = sbr.rel (%p599) target = $region72
        $region71: #{tpu_custom_call.1} parent=67 // pred_region
          %s602 = sand.u32 %s60, 1
          %s603 = scalar_lea.sflag [#allocation4], %s602
          %s604 = sand.u32 %s60, 1
          %s605 = smul.addr %s604, 16
          %s606 = scalar_lea.vmem [#allocation3], %s605
          %s608 = ssub.s32 256, 256
          %609 = vsyncadd %s603, %s608
          %s610 = smul.addr %s45, 4
          %s611 = smul.addr %s610, 64
          %s612 = scalar_lea.hbm %s0, %s611
          %s613 = sshll.u32 %s606, 4
          %s614 = int_to_ptr.vmem [resolvable:$true] %s613
          %619 = dma.hbm_to_vmem [thread:$0]  %s612, 256, %s614, %s603, 64, 64, 4
        $region72: #{tpu_custom_call.1} parent=67 // pred_fallthru
          _
        // Predicated region
        $region73: #{tpu_custom_call.1} parent=67 // pred_check
          %p620 = pneg %p96
        $region74: #{tpu_custom_call.1} parent=67 // pred_check_branch
          %622 = sbr.rel (%p620) target = $region76
        $region75: #{tpu_custom_call.1} parent=67 // pred_region
          %s623 = sand.u32 %s38, 1
          %s624 = scalar_lea.sflag [#allocation7], %s623
          %s625 = sand.u32 %s86, 1
          %s626 = smul.addr %s625, 16
          %s627 = scalar_lea.vmem [#allocation6], %s626
          %s629 = ssub.s32 256, 256
          %630 = vsyncadd %s624, %s629
          %s631 = smul.addr %s45, 4
          %s632 = smul.addr %s631, 64
          %s633 = scalar_lea.hbm %s1, %s632
          %s634 = sshll.u32 %s627, 4
          %s635 = int_to_ptr.vmem [resolvable:$true] %s634
          %640 = dma.hbm_to_vmem [thread:$0]  %s633, 256, %s635, %s624, 64, 64, 4
        $region76: #{tpu_custom_call.1} parent=67 // pred_fallthru
          _
        // Predicated region
        $region77: #{tpu_custom_call.1} parent=67 // pred_check
          %p641 = pneg %p124
        $region78: #{tpu_custom_call.1} parent=67 // pred_check_branch
          %643 = sbr.rel (%p641) target = $region80
        $region79: #{tpu_custom_call.1} parent=67 // pred_region
          %s644 = sand.u32 %s38, 1
          %s645 = scalar_lea.sflag [#allocation7], %s644
          %s646 = sand.u32 %s114, 1
          %s647 = smul.addr %s646, 16
          %s648 = scalar_lea.vmem [#allocation8], %s647
          %s650 = ssub.s32 256, 256
          %651 = vsyncadd %s645, %s650
          %s652 = smul.addr %s45, 4
          %s653 = sadd.s32 %s46, %s652
          %s654 = smul.addr %s653, 64
          %s655 = scalar_lea.hbm %s2, %s654
          %s656 = sshll.u32 %s648, 4
          %s657 = int_to_ptr.vmem [resolvable:$true] %s656
          %662 = dma.hbm_to_vmem [thread:$0]  %s655, 256, %s657, %s645, 64, 64, 4
        $region80: #{tpu_custom_call.1} parent=67 // pred_fallthru
          _
      $region68: #{tpu_custom_call.1} parent=5 // pred_fallthru
        _
      %p663 = scmp.le.s32.totalorder 1, %s38
      %p664 = scmp.lt.s32.totalorder %s38, 3
      %p665 = pnand %p663, %p664
      %p666 = pneg %p665
      // Predicated region
      $region81: #{tpu_custom_call.1} parent=5 // pred_check
        _
      $region82: #{tpu_custom_call.1} parent=5 // pred_check_branch
        %668 = sbr.rel (%p665) target = $region84
      $region83: #{tpu_custom_call.1} parent=5 // pred_region
        %s669 = ssub.s32 %s38, 1
        %s670 = sand.u32 %s63, 1
        %s671 = scalar_lea.sflag [#allocation4], %s670
        %s672 = sand.u32 %s63, 1
        %s673 = smul.addr %s672, 16
        %s674 = scalar_lea.vmem [#allocation3], %s673
        // Predicated region
        $region85: #{tpu_custom_call.1} parent=83 // pred_check
          %p675 = pneg %p76
        $region86: #{tpu_custom_call.1} parent=83 // pred_check_branch
          %677 = sbr.rel (%p675) target = $region88
        $region87: #{tpu_custom_call.1} parent=83 // pred_region
          %678 = dma.done %s671, 256
        $region88: #{tpu_custom_call.1} parent=83 // pred_fallthru
          _
        %s679 = sand.u32 %s43, 1
        %s680 = scalar_lea.sflag [#allocation7], %s679
        %s681 = sand.u32 %s89, 1
        %s682 = smul.addr %s681, 16
        %s683 = scalar_lea.vmem [#allocation6], %s682
        // Predicated region
        $region89: #{tpu_custom_call.1} parent=83 // pred_check
          %p684 = pneg %p102
        $region90: #{tpu_custom_call.1} parent=83 // pred_check_branch
          %686 = sbr.rel (%p684) target = $region92
        $region91: #{tpu_custom_call.1} parent=83 // pred_region
          %687 = dma.done %s680, 256
        $region92: #{tpu_custom_call.1} parent=83 // pred_fallthru
          _
        %s688 = sand.u32 %s43, 1
        %s689 = scalar_lea.sflag [#allocation7], %s688
        %s690 = sand.u32 %s117, 1
        %s691 = smul.addr %s690, 16
        %s692 = scalar_lea.vmem [#allocation8], %s691
        // Predicated region
        $region93: #{tpu_custom_call.1} parent=83 // pred_check
          %p693 = pneg %p130
        $region94: #{tpu_custom_call.1} parent=83 // pred_check_branch
          %695 = sbr.rel (%p693) target = $region96
        $region95: #{tpu_custom_call.1} parent=83 // pred_region
          %696 = dma.done %s689, 256
        $region96: #{tpu_custom_call.1} parent=83 // pred_fallthru
          _
        // Predicated region
        $region97: #{tpu_custom_call.1} parent=83 // pred_check
          %p697 = pneg %p151
        $region98: #{tpu_custom_call.1} parent=83 // pred_check_branch
          %699 = sbr.rel (%p697) target = $region100
        $region99: #{tpu_custom_call.1} parent=83 // pred_region
          %700 = dma.done [#allocation10], 64
        $region100: #{tpu_custom_call.1} parent=83 // pred_fallthru
          _
        // Predicated region
        $region101: #{tpu_custom_call.1} parent=83 // pred_check
          %p701 = pneg %p172
        $region102: #{tpu_custom_call.1} parent=83 // pred_check_branch
          %703 = sbr.rel (%p701) target = $region104
        $region103: #{tpu_custom_call.1} parent=83 // pred_region
          %704 = dma.done [#allocation10], 64
        $region104: #{tpu_custom_call.1} parent=83 // pred_fallthru
          _
        // Predicated region
        $region105: #{tpu_custom_call.1} parent=83 // pred_check
          %p705 = pneg %p193
        $region106: #{tpu_custom_call.1} parent=83 // pred_check_branch
          %707 = sbr.rel (%p705) target = $region108
        $region107: #{tpu_custom_call.1} parent=83 // pred_region
          %708 = dma.done [#allocation13], 64
        $region108: #{tpu_custom_call.1} parent=83 // pred_fallthru
          _
        // Predicated region
        $region109: #{tpu_custom_call.1} parent=83 // pred_check
          %p709 = pneg %p214
        $region110: #{tpu_custom_call.1} parent=83 // pred_check_branch
          %711 = sbr.rel (%p709) target = $region112
        $region111: #{tpu_custom_call.1} parent=83 // pred_region
          %712 = dma.done [#allocation13], 256
        $region112: #{tpu_custom_call.1} parent=83 // pred_fallthru
          _
        // Predicated region
        $region113: #{tpu_custom_call.1} parent=83 // pred_check
          %p713 = pneg %p235
        $region114: #{tpu_custom_call.1} parent=83 // pred_check_branch
          %715 = sbr.rel (%p713) target = $region116
        $region115: #{tpu_custom_call.1} parent=83 // pred_region
          %716 = dma.done [#allocation16], 16
        $region116: #{tpu_custom_call.1} parent=83 // pred_fallthru
          _
        // Predicated region
        $region117: #{tpu_custom_call.1} parent=83 // pred_check
          %p717 = pneg %p256
        $region118: #{tpu_custom_call.1} parent=83 // pred_check_branch
          %719 = sbr.rel (%p717) target = $region120
        $region119: #{tpu_custom_call.1} parent=83 // pred_region
          %720 = dma.done [#allocation16], 16
        $region120: #{tpu_custom_call.1} parent=83 // pred_fallthru
          _
        // Predicated region
        $region121: #{tpu_custom_call.1} parent=83 // pred_check
          %p721 = pneg %p277
        $region122: #{tpu_custom_call.1} parent=83 // pred_check_branch
          %723 = sbr.rel (%p721) target = $region124
        $region123: #{tpu_custom_call.1} parent=83 // pred_region
          %724 = dma.done [#allocation19], 16
        $region124: #{tpu_custom_call.1} parent=83 // pred_fallthru
          _
        // Predicated region
        $region125: #{tpu_custom_call.1} parent=83 // pred_check
          %p725 = pneg %p298
        $region126: #{tpu_custom_call.1} parent=83 // pred_check_branch
          %727 = sbr.rel (%p725) target = $region128
        $region127: #{tpu_custom_call.1} parent=83 // pred_region
          %728 = dma.done [#allocation19], 256
        $region128: #{tpu_custom_call.1} parent=83 // pred_fallthru
          _
        // Predicated region
        $region129: #{tpu_custom_call.1} parent=83 // pred_check
          %p729 = pneg %p319
        $region130: #{tpu_custom_call.1} parent=83 // pred_check_branch
          %731 = sbr.rel (%p729) target = $region132
        $region131: #{tpu_custom_call.1} parent=83 // pred_region
          %732 = dma.done [#allocation22], 16
        $region132: #{tpu_custom_call.1} parent=83 // pred_fallthru
          _
        // Predicated region
        $region133: #{tpu_custom_call.1} parent=83 // pred_check
          %p733 = pneg %p340
        $region134: #{tpu_custom_call.1} parent=83 // pred_check_branch
          %735 = sbr.rel (%p733) target = $region136
        $region135: #{tpu_custom_call.1} parent=83 // pred_region
          %736 = dma.done [#allocation22], 1024
        $region136: #{tpu_custom_call.1} parent=83 // pred_fallthru
          _
        // Predicated region
        $region137: #{tpu_custom_call.1} parent=83 // pred_check
          %p737 = pneg %p361
        $region138: #{tpu_custom_call.1} parent=83 // pred_check_branch
          %739 = sbr.rel (%p737) target = $region140
        $region139: #{tpu_custom_call.1} parent=83 // pred_region
          %740 = dma.done [#allocation25], 16
        $region140: #{tpu_custom_call.1} parent=83 // pred_fallthru
          _
        // Predicated region
        $region141: #{tpu_custom_call.1} parent=83 // pred_check
          %p741 = pneg %p382
        $region142: #{tpu_custom_call.1} parent=83 // pred_check_branch
          %743 = sbr.rel (%p741) target = $region144
        $region143: #{tpu_custom_call.1} parent=83 // pred_region
          %744 = dma.done [#allocation25], 16
        $region144: #{tpu_custom_call.1} parent=83 // pred_fallthru
          _
        // Predicated region
        $region145: #{tpu_custom_call.1} parent=83 // pred_check
          %p745 = pneg %p403
        $region146: #{tpu_custom_call.1} parent=83 // pred_check_branch
          %747 = sbr.rel (%p745) target = $region148
        $region147: #{tpu_custom_call.1} parent=83 // pred_region
          %748 = dma.done [#allocation28], 16
        $region148: #{tpu_custom_call.1} parent=83 // pred_fallthru
          _
        %s749 = sand.u32 %s63, 1
        %s750 = scalar_lea.sflag [#allocation4], %s749
        %s751 = sand.u32 %s63, 1
        %s752 = smul.addr %s751, 16
        %s753 = scalar_lea.vmem [#allocation3], %s752
        %p754 = pneg %p76
        %p755 = pneg %p73
        %s756 = sand.u32 %s43, 1
        %s757 = scalar_lea.sflag [#allocation7], %s756
        %s758 = sand.u32 %s89, 1
        %s759 = smul.addr %s758, 16
        %s760 = scalar_lea.vmem [#allocation6], %s759
        %p761 = pneg %p102
        %p762 = pneg %p99
        %s763 = sand.u32 %s43, 1
        %s764 = scalar_lea.sflag [#allocation7], %s763
        %s765 = sand.u32 %s117, 1
        %s766 = smul.addr %s765, 16
        %s767 = scalar_lea.vmem [#allocation8], %s766
        %p768 = pneg %p130
        %p769 = pneg %p127
        %p770 = pneg %p151
        %p771 = pneg %p148
        %p772 = pneg %p172
        %p773 = pneg %p169
        %p774 = pneg %p193
        %p775 = pneg %p190
        %p776 = pneg %p214
        %p777 = pneg %p211
        %p778 = pneg %p235
        %p779 = pneg %p232
        %p780 = pneg %p256
        %p781 = pneg %p253
        %p782 = pneg %p277
        %p783 = pneg %p274
        %p784 = pneg %p298
        %p785 = pneg %p295
        %p786 = pneg %p319
        %p787 = pneg %p316
        %p788 = pneg %p340
        %p789 = pneg %p337
        %p790 = pneg %p361
        %p791 = pneg %p358
        %p792 = pneg %p382
        %p793 = pneg %p379
        %p794 = pneg %p403
        %p795 = pneg %p400
        %p796 = pneg %p431
        %p797 = pneg %p428
        %s798 = sand.u32 %s418, 1
        %s799 = scalar_lea.sflag [#allocation5], %s798
        %s800 = sand.u32 %s418, 1
        %s801 = smul.addr %s800, 8
        %s802 = scalar_lea.vmem [#allocation29], %s801
        %v804 = vld [vmem:[%s692] sm:$0xf]
        %v805 = vld [vmem:[%s692 + $0x4] sm:$0xf]
        %v806 = vld [vmem:[%s692 + $0x8] sm:$0xf]
        %v807 = vld [vmem:[%s692 + $0xc] sm:$0xf]
        %v808 = vld [vmem:[%s674] sm:$0xf]
        %v809 = vld [vmem:[%s674 + $0x4] sm:$0xf]
        %v810 = vld [vmem:[%s674 + $0x8] sm:$0xf]
        %v811 = vld [vmem:[%s674 + $0xc] sm:$0xf]
        %v812 = vld [vmem:[#allocation9] sm:$0xf]
        %v817 = vunpack.c.l.b16 %v808
        %v818 = vunpack.c.l.b16 %v809
        %v819 = vunpack.c.l.b16 %v810
        %v820 = vunpack.c.l.b16 %v811
        %v821 = vpack.c.b16 %v818, %v817
        %v822 = vpack.c.b16 %v820, %v819
        %vm823 = vcmask 64512
        %v825 = vsel %vm823, %v821, 0
        %v828 = vsel %vm823, %v822, 0
        %vm830 = vcmask 1043456
        %v832 = vsel %vm830, %v812, 0
        %834 = vmatprep.subr.bf16.mxu0 0
        %835 = vmatpush1.bf16.msra.mxu0 %v832
        %836 = vmatprep.subr.bf16.mxu0 0
        %837 = vmatpush1.bf16.msra.mxu0 0
        %838 = vmatprep.subr.bf16.mxu0 0
        %839 = vmatpush1.bf16.msra.mxu0 0
        %840 = vmatprep.subr.bf16.mxu0 0
        %841 = vmatpush1.bf16.msra.mxu0 0
        %842 = vmatprep.subr.bf16.mxu0 0
        %843 = vmatpush1.bf16.msra.mxu0 0
        %844 = vmatprep.subr.bf16.mxu0 0
        %845 = vmatpush1.bf16.msra.mxu0 0
        %846 = vmatprep.subr.bf16.mxu0 0
        %847 = vmatpush1.bf16.msra.mxu0 0
        %848 = vmatprep.subr.bf16.mxu0 0
        %849 = vmatpush1.bf16.msra.mxu0 0
        %850 = vmatprep.subr.bf16.mxu0 0
        %851 = vmatpush1.bf16.msra.mxu0 0
        %852 = vmatprep.subr.bf16.mxu0 0
        %853 = vmatpush1.bf16.msra.mxu0 0
        %854 = vmatprep.subr.bf16.mxu0 0
        %855 = vmatpush1.bf16.msra.mxu0 0
        %856 = vmatprep.subr.bf16.mxu0 0
        %857 = vmatpush1.bf16.msra.mxu0 0
        %858 = vmatprep.subr.bf16.mxu0 0
        %859 = vmatpush1.bf16.msra.mxu0 0
        %860 = vmatprep.subr.bf16.mxu0 0
        %861 = vmatpush1.bf16.msra.mxu0 0
        %862 = vmatprep.subr.bf16.mxu0 0
        %863 = vmatpush1.bf16.msra.mxu0 0
        %864 = vmatprep.subr.bf16.mxu0 0
        %865 = vmatpush1.bf16.msra.mxu0 0
        %866 = vmatprep.mubr.bf16.mxu0 0
        %867 = vmatmul.mubr.bf16.gmra.mrb[0].mxu0 %v825
        %v868 = vpop.f32.mrb[0].mxu0
        %v869 = vadd.f32 0.0, %v868
        %v870 = vpop.f32.mrb[0].mxu0
        %v871 = vpop.f32.mrb[0].mxu0
        %v872 = vadd.f32 0.0, %v871
        %v873 = vpop.f32.mrb[0].mxu0
        %874 = vmatprep.mubr.bf16.mxu0 0
        %875 = vmatmul.mubr.bf16.gmra.mrb[0].mxu0 %v828
        %v876 = vpop.f32.mrb[0].mxu0
        %v877 = vadd.f32 0.0, %v876
        %v878 = vpop.f32.mrb[0].mxu0
        %v879 = vpop.f32.mrb[0].mxu0
        %v880 = vadd.f32 0.0, %v879
        %v881 = vpop.f32.mrb[0].mxu0
        %882 = vdwg.mxu0
        %v883 = vpack.c.bf16 %v869, %v869
        %v884 = vpack.c.bf16 %v872, %v872
        %v885 = vpack.c.bf16 %v877, %v877
        %v886 = vpack.c.bf16 %v880, %v880
        %v887 = vld [vmem:[%s683] sm:$0xf]
        %v888 = vld [vmem:[%s683 + $0x4] sm:$0xf]
        %v889 = vld [vmem:[%s683 + $0x8] sm:$0xf]
        %v890 = vld [vmem:[%s683 + $0xc] sm:$0xf]
        %v891 = vld [vmem:[#allocation11] sm:$0xf]
        %v896 = vunpack.c.l.b16 %v887
        %v897 = vunpack.c.l.b16 %v888
        %v898 = vunpack.c.l.b16 %v889
        %v899 = vunpack.c.l.b16 %v890
        %v900 = vpack.c.b16 %v897, %v896
        %v901 = vpack.c.b16 %v899, %v898
        %v903 = vsel %vm823, %v900, 0
        %v906 = vsel %vm823, %v901, 0
        %v909 = vsel %vm830, %v891, 0
        %911 = vmatprep.subr.bf16.mxu0 0
        %912 = vmatpush1.bf16.msra.mxu0 %v909
        %913 = vmatprep.subr.bf16.mxu0 0
        %914 = vmatpush1.bf16.msra.mxu0 0
        %915 = vmatprep.subr.bf16.mxu0 0
        %916 = vmatpush1.bf16.msra.mxu0 0
        %917 = vmatprep.subr.bf16.mxu0 0
        %918 = vmatpush1.bf16.msra.mxu0 0
        %919 = vmatprep.subr.bf16.mxu0 0
        %920 = vmatpush1.bf16.msra.mxu0 0
        %921 = vmatprep.subr.bf16.mxu0 0
        %922 = vmatpush1.bf16.msra.mxu0 0
        %923 = vmatprep.subr.bf16.mxu0 0
        %924 = vmatpush1.bf16.msra.mxu0 0
        %925 = vmatprep.subr.bf16.mxu0 0
        %926 = vmatpush1.bf16.msra.mxu0 0
        %927 = vmatprep.subr.bf16.mxu0 0
        %928 = vmatpush1.bf16.msra.mxu0 0
        %929 = vmatprep.subr.bf16.mxu0 0
        %930 = vmatpush1.bf16.msra.mxu0 0
        %931 = vmatprep.subr.bf16.mxu0 0
        %932 = vmatpush1.bf16.msra.mxu0 0
        %933 = vmatprep.subr.bf16.mxu0 0
        %934 = vmatpush1.bf16.msra.mxu0 0
        %935 = vmatprep.subr.bf16.mxu0 0
        %936 = vmatpush1.bf16.msra.mxu0 0
        %937 = vmatprep.subr.bf16.mxu0 0
        %938 = vmatpush1.bf16.msra.mxu0 0
        %939 = vmatprep.subr.bf16.mxu0 0
        %940 = vmatpush1.bf16.msra.mxu0 0
        %941 = vmatprep.subr.bf16.mxu0 0
        %942 = vmatpush1.bf16.msra.mxu0 0
        %943 = vmatprep.mubr.bf16.mxu0 0
        %944 = vmatmul.mubr.bf16.gmra.mrb[0].mxu0 %v903
        %v945 = vpop.f32.mrb[0].mxu0
        %v946 = vadd.f32 0.0, %v945
        %v947 = vpop.f32.mrb[0].mxu0
        %v948 = vpop.f32.mrb[0].mxu0
        %v949 = vadd.f32 0.0, %v948
        %v950 = vpop.f32.mrb[0].mxu0
        %951 = vmatprep.mubr.bf16.mxu0 0
        %952 = vmatmul.mubr.bf16.gmra.mrb[0].mxu0 %v906
        %v953 = vpop.f32.mrb[0].mxu0
        %v954 = vadd.f32 0.0, %v953
        %v955 = vpop.f32.mrb[0].mxu0
        %v956 = vpop.f32.mrb[0].mxu0
        %v957 = vadd.f32 0.0, %v956
        %v958 = vpop.f32.mrb[0].mxu0
        %959 = vdwg.mxu0
        %v960 = vpack.c.bf16 %v946, %v946
        %v961 = vpack.c.bf16 %v949, %v949
        %v962 = vpack.c.bf16 %v954, %v954
        %v963 = vpack.c.bf16 %v957, %v957
        %v964 = vld [vmem:[#allocation12] sm:$0xf]
        %v969 = vunpack.c.l.b16 %v804
        %v970 = vunpack.c.l.b16 %v805
        %v971 = vunpack.c.l.b16 %v806
        %v972 = vunpack.c.l.b16 %v807
        %v973 = vpack.c.b16 %v970, %v969
        %v974 = vpack.c.b16 %v972, %v971
        %v976 = vsel %vm823, %v973, 0
        %v979 = vsel %vm823, %v974, 0
        %v982 = vsel %vm830, %v964, 0
        %984 = vmatprep.subr.bf16.mxu0 0
        %985 = vmatpush1.bf16.msra.mxu0 %v982
        %986 = vmatprep.subr.bf16.mxu0 0
        %987 = vmatpush1.bf16.msra.mxu0 0
        %988 = vmatprep.subr.bf16.mxu0 0
        %989 = vmatpush1.bf16.msra.mxu0 0
        %990 = vmatprep.subr.bf16.mxu0 0
        %991 = vmatpush1.bf16.msra.mxu0 0
        %992 = vmatprep.subr.bf16.mxu0 0
        %993 = vmatpush1.bf16.msra.mxu0 0
        %994 = vmatprep.subr.bf16.mxu0 0
        %995 = vmatpush1.bf16.msra.mxu0 0
        %996 = vmatprep.subr.bf16.mxu0 0
        %997 = vmatpush1.bf16.msra.mxu0 0
        %998 = vmatprep.subr.bf16.mxu0 0
        %999 = vmatpush1.bf16.msra.mxu0 0
        %1000 = vmatprep.subr.bf16.mxu0 0
        %1001 = vmatpush1.bf16.msra.mxu0 0
        %1002 = vmatprep.subr.bf16.mxu0 0
        %1003 = vmatpush1.bf16.msra.mxu0 0
        %1004 = vmatprep.subr.bf16.mxu0 0
        %1005 = vmatpush1.bf16.msra.mxu0 0
        %1006 = vmatprep.subr.bf16.mxu0 0
        %1007 = vmatpush1.bf16.msra.mxu0 0
        %1008 = vmatprep.subr.bf16.mxu0 0
        %1009 = vmatpush1.bf16.msra.mxu0 0
        %1010 = vmatprep.subr.bf16.mxu0 0
        %1011 = vmatpush1.bf16.msra.mxu0 0
        %1012 = vmatprep.subr.bf16.mxu0 0
        %1013 = vmatpush1.bf16.msra.mxu0 0
        %1014 = vmatprep.subr.bf16.mxu0 0
        %1015 = vmatpush1.bf16.msra.mxu0 0
        %1016 = vmatprep.mubr.bf16.mxu0 0
        %1017 = vmatmul.mubr.bf16.gmra.mrb[0].mxu0 %v976
        %v1018 = vpop.f32.mrb[0].mxu0
        %v1019 = vadd.f32 0.0, %v1018
        %v1020 = vpop.f32.mrb[0].mxu0
        %v1021 = vpop.f32.mrb[0].mxu0
        %v1022 = vadd.f32 0.0, %v1021
        %v1023 = vpop.f32.mrb[0].mxu0
        %1024 = vmatprep.mubr.bf16.mxu0 0
        %1025 = vmatmul.mubr.bf16.gmra.mrb[0].mxu0 %v979
        %v1026 = vpop.f32.mrb[0].mxu0
        %v1027 = vadd.f32 0.0, %v1026
        %v1028 = vpop.f32.mrb[0].mxu0
        %v1029 = vpop.f32.mrb[0].mxu0
        %v1030 = vadd.f32 0.0, %v1029
        %v1031 = vpop.f32.mrb[0].mxu0
        %1032 = vdwg.mxu0
        %v1033 = vmul.f32 %v1019, 0.17677669
        %v1034 = vmul.f32 %v1022, 0.17677669
        %v1035 = vmul.f32 %v1027, 0.17677669
        %v1036 = vmul.f32 %v1030, 0.17677669
        %v1037 = vpack.c.bf16 %v1033, %v1033
        %v1038 = vpack.c.bf16 %v1034, %v1034
        %v1039 = vpack.c.bf16 %v1035, %v1035
        %v1040 = vpack.c.bf16 %v1036, %v1036
        %v1042 = vsel %vm823, %v1037, 0
        %v1045 = vsel %vm823, %v960, 0
        %1047 = vmatprep.subr.bf16.mxu0 0
        %1048 = vmatpush1.bf16.xpose.msra.mxu0 %v1045
        %1049 = vmatprep.subr.bf16.mxu0 0
        %1050 = vmatpush1.bf16.xpose.msra.mxu0 0
        %1051 = vmatprep.subr.bf16.mxu0 0
        %1052 = vmatpush1.bf16.xpose.msra.mxu0 0
        %1053 = vmatprep.subr.bf16.mxu0 0
        %1054 = vmatpush1.bf16.xpose.msra.mxu0 0
        %1055 = vmatprep.subr.bf16.mxu0 0
        %1056 = vmatpush1.bf16.xpose.msra.mxu0 0
        %1057 = vmatprep.subr.bf16.mxu0 0
        %1058 = vmatpush1.bf16.xpose.msra.mxu0 0
        %1059 = vmatprep.subr.bf16.mxu0 0
        %1060 = vmatpush1.bf16.xpose.msra.mxu0 0
        %1061 = vmatprep.subr.bf16.mxu0 0
        %1062 = vmatpush1.bf16.xpose.msra.mxu0 0
        %1063 = vmatprep.subr.bf16.mxu0 0
        %1064 = vmatpush1.bf16.xpose.msra.mxu0 0
        %1065 = vmatprep.subr.bf16.mxu0 0
        %1066 = vmatpush1.bf16.xpose.msra.mxu0 0
        %1067 = vmatprep.subr.bf16.mxu0 0
        %1068 = vmatpush1.bf16.xpose.msra.mxu0 0
        %1069 = vmatprep.subr.bf16.mxu0 0
        %1070 = vmatpush1.bf16.xpose.msra.mxu0 0
        %1071 = vmatprep.subr.bf16.mxu0 0
        %1072 = vmatpush1.bf16.xpose.msra.mxu0 0
        %1073 = vmatprep.subr.bf16.mxu0 0
        %1074 = vmatpush1.bf16.xpose.msra.mxu0 0
        %1075 = vmatprep.subr.bf16.mxu0 0
        %1076 = vmatpush1.bf16.xpose.msra.mxu0 0
        %1077 = vmatprep.subr.bf16.mxu0 0
        %1078 = vmatpush1.bf16.xpose.msra.mxu0 0
        %1079 = vmatprep.mubr.bf16.mxu0 0
        %1080 = vmatmul.mubr.bf16.gmra.mrb[0].mxu0 %v1042
        %v1081 = vpop.f32.mrb[0].mxu0
        %v1082 = vadd.f32 0.0, %v1081
        %v1083 = vpop.f32.mrb[0].mxu0
        %v1084 = vpop.f32.mrb[0].mxu0
        %v1085 = vpop.f32.mrb[0].mxu0
        %1086 = vdwg.mxu0
        %v1088 = vsel %vm823, %v1038, 0
        %v1091 = vsel %vm823, %v961, 0
        %1093 = vmatprep.subr.bf16.mxu0 0
        %1094 = vmatpush1.bf16.xpose.msra.mxu0 %v1091
        %1095 = vmatprep.subr.bf16.mxu0 0
        %1096 = vmatpush1.bf16.xpose.msra.mxu0 0
        %1097 = vmatprep.subr.bf16.mxu0 0
        %1098 = vmatpush1.bf16.xpose.msra.mxu0 0
        %1099 = vmatprep.subr.bf16.mxu0 0
        %1100 = vmatpush1.bf16.xpose.msra.mxu0 0
        %1101 = vmatprep.subr.bf16.mxu0 0
        %1102 = vmatpush1.bf16.xpose.msra.mxu0 0
        %1103 = vmatprep.subr.bf16.mxu0 0
        %1104 = vmatpush1.bf16.xpose.msra.mxu0 0
        %1105 = vmatprep.subr.bf16.mxu0 0
        %1106 = vmatpush1.bf16.xpose.msra.mxu0 0
        %1107 = vmatprep.subr.bf16.mxu0 0
        %1108 = vmatpush1.bf16.xpose.msra.mxu0 0
        %1109 = vmatprep.subr.bf16.mxu0 0
        %1110 = vmatpush1.bf16.xpose.msra.mxu0 0
        %1111 = vmatprep.subr.bf16.mxu0 0
        %1112 = vmatpush1.bf16.xpose.msra.mxu0 0
        %1113 = vmatprep.subr.bf16.mxu0 0
        %1114 = vmatpush1.bf16.xpose.msra.mxu0 0
        %1115 = vmatprep.subr.bf16.mxu0 0
        %1116 = vmatpush1.bf16.xpose.msra.mxu0 0
        %1117 = vmatprep.subr.bf16.mxu0 0
        %1118 = vmatpush1.bf16.xpose.msra.mxu0 0
        %1119 = vmatprep.subr.bf16.mxu0 0
        %1120 = vmatpush1.bf16.xpose.msra.mxu0 0
        %1121 = vmatprep.subr.bf16.mxu0 0
        %1122 = vmatpush1.bf16.xpose.msra.mxu0 0
        %1123 = vmatprep.subr.bf16.mxu0 0
        %1124 = vmatpush1.bf16.xpose.msra.mxu0 0
        %1125 = vmatprep.mubr.bf16.mxu0 0
        %1126 = vmatmul.mubr.bf16.gmra.mrb[0].mxu0 %v1088
        %v1127 = vpop.f32.mrb[0].mxu0
        %v1128 = vadd.f32 0.0, %v1127
        %v1129 = vpop.f32.mrb[0].mxu0
        %v1130 = vpop.f32.mrb[0].mxu0
        %v1131 = vpop.f32.mrb[0].mxu0
        %1132 = vdwg.mxu0
        %v1134 = vsel %vm823, %v1039, 0
        %v1137 = vsel %vm823, %v962, 0
        %1139 = vmatprep.subr.bf16.mxu0 0
        %1140 = vmatpush1.bf16.xpose.msra.mxu0 %v1137
        %1141 = vmatprep.subr.bf16.mxu0 0
        %1142 = vmatpush1.bf16.xpose.msra.mxu0 0
        %1143 = vmatprep.subr.bf16.mxu0 0
        %1144 = vmatpush1.bf16.xpose.msra.mxu0 0
        %1145 = vmatprep.subr.bf16.mxu0 0
        %1146 = vmatpush1.bf16.xpose.msra.mxu0 0
        %1147 = vmatprep.subr.bf16.mxu0 0
        %1148 = vmatpush1.bf16.xpose.msra.mxu0 0
        %1149 = vmatprep.subr.bf16.mxu0 0
        %1150 = vmatpush1.bf16.xpose.msra.mxu0 0
        %1151 = vmatprep.subr.bf16.mxu0 0
        %1152 = vmatpush1.bf16.xpose.msra.mxu0 0
        %1153 = vmatprep.subr.bf16.mxu0 0
        %1154 = vmatpush1.bf16.xpose.msra.mxu0 0
        %1155 = vmatprep.subr.bf16.mxu0 0
        %1156 = vmatpush1.bf16.xpose.msra.mxu0 0
        %1157 = vmatprep.subr.bf16.mxu0 0
        %1158 = vmatpush1.bf16.xpose.msra.mxu0 0
        %1159 = vmatprep.subr.bf16.mxu0 0
        %1160 = vmatpush1.bf16.xpose.msra.mxu0 0
        %1161 = vmatprep.subr.bf16.mxu0 0
        %1162 = vmatpush1.bf16.xpose.msra.mxu0 0
        %1163 = vmatprep.subr.bf16.mxu0 0
        %1164 = vmatpush1.bf16.xpose.msra.mxu0 0
        %1165 = vmatprep.subr.bf16.mxu0 0
        %1166 = vmatpush1.bf16.xpose.msra.mxu0 0
        %1167 = vmatprep.subr.bf16.mxu0 0
        %1168 = vmatpush1.bf16.xpose.msra.mxu0 0
        %1169 = vmatprep.subr.bf16.mxu0 0
        %1170 = vmatpush1.bf16.xpose.msra.mxu0 0
        %1171 = vmatprep.mubr.bf16.mxu0 0
        %1172 = vmatmul.mubr.bf16.gmra.mrb[0].mxu0 %v1134
        %v1173 = vpop.f32.mrb[0].mxu0
        %v1174 = vadd.f32 0.0, %v1173
        %v1175 = vpop.f32.mrb[0].mxu0
        %v1176 = vpop.f32.mrb[0].mxu0
        %v1177 = vpop.f32.mrb[0].mxu0
        %1178 = vdwg.mxu0
        %v1180 = vsel %vm823, %v1040, 0
        %v1183 = vsel %vm823, %v963, 0
        %1185 = vmatprep.subr.bf16.mxu0 0
        %1186 = vmatpush1.bf16.xpose.msra.mxu0 %v1183
        %1187 = vmatprep.subr.bf16.mxu0 0
        %1188 = vmatpush1.bf16.xpose.msra.mxu0 0
        %1189 = vmatprep.subr.bf16.mxu0 0
        %1190 = vmatpush1.bf16.xpose.msra.mxu0 0
        %1191 = vmatprep.subr.bf16.mxu0 0
        %1192 = vmatpush1.bf16.xpose.msra.mxu0 0
        %1193 = vmatprep.subr.bf16.mxu0 0
        %1194 = vmatpush1.bf16.xpose.msra.mxu0 0
        %1195 = vmatprep.subr.bf16.mxu0 0
        %1196 = vmatpush1.bf16.xpose.msra.mxu0 0
        %1197 = vmatprep.subr.bf16.mxu0 0
        %1198 = vmatpush1.bf16.xpose.msra.mxu0 0
        %1199 = vmatprep.subr.bf16.mxu0 0
        %1200 = vmatpush1.bf16.xpose.msra.mxu0 0
        %1201 = vmatprep.subr.bf16.mxu0 0
        %1202 = vmatpush1.bf16.xpose.msra.mxu0 0
        %1203 = vmatprep.subr.bf16.mxu0 0
        %1204 = vmatpush1.bf16.xpose.msra.mxu0 0
        %1205 = vmatprep.subr.bf16.mxu0 0
        %1206 = vmatpush1.bf16.xpose.msra.mxu0 0
        %1207 = vmatprep.subr.bf16.mxu0 0
        %1208 = vmatpush1.bf16.xpose.msra.mxu0 0
        %1209 = vmatprep.subr.bf16.mxu0 0
        %1210 = vmatpush1.bf16.xpose.msra.mxu0 0
        %1211 = vmatprep.subr.bf16.mxu0 0
        %1212 = vmatpush1.bf16.xpose.msra.mxu0 0
        %1213 = vmatprep.subr.bf16.mxu0 0
        %1214 = vmatpush1.bf16.xpose.msra.mxu0 0
        %1215 = vmatprep.subr.bf16.mxu0 0
        %1216 = vmatpush1.bf16.xpose.msra.mxu0 0
        %1217 = vmatprep.mubr.bf16.mxu0 0
        %1218 = vmatmul.mubr.bf16.gmra.mrb[0].mxu0 %v1180
        %v1219 = vpop.f32.mrb[0].mxu0
        %v1220 = vadd.f32 0.0, %v1219
        %v1221 = vpop.f32.mrb[0].mxu0
        %v1222 = vpop.f32.mrb[0].mxu0
        %v1223 = vpop.f32.mrb[0].mxu0
        %1224 = vdwg.mxu0
        %v1225 = vsel %vm823, %v1082, -inf
        %1226 = vmax.xlane.f32.xlu0 %v1225
        %v1227 = vpop.xlane.xlu0 %1226
        %v1228 = vsel %vm823, %v1128, -inf
        %1229 = vmax.xlane.f32.xlu0 %v1228
        %v1230 = vpop.xlane.xlu0 %1229
        %v1231 = vsel %vm823, %v1174, -inf
        %1232 = vmax.xlane.f32.xlu0 %v1231
        %v1233 = vpop.xlane.xlu0 %1232
        %v1234 = vsel %vm823, %v1220, -inf
        %1235 = vmax.xlane.f32.xlu0 %v1234
        %v1236 = vpop.xlane.xlu0 %1235
        %v1237 = vsub.f32 %v1082, %v1227
        %v1238 = vsub.f32 %v1128, %v1230
        %v1239 = vsub.f32 %v1174, %v1233
        %v1240 = vsub.f32 %v1220, %v1236
        %v1241 = vmul.f32 %v1237, 1.442695
        %v1242 = vpow.pop %v1241
        %v1243 = vmul.f32 %v1238, 1.442695
        %v1244 = vpow.pop %v1243
        %v1245 = vmul.f32 %v1239, 1.442695
        %v1246 = vpow.pop %v1245
        %v1247 = vmul.f32 %v1240, 1.442695
        %v1248 = vpow.pop %v1247
        %v1249 = vsel %vm823, %v1242, 0.0
        %1250 = vadd.xlane.f32.xlu0 %v1249
        %v1251 = vpop.xlane.xlu0 %1250
        %v1252 = vsel %vm823, %v1244, 0.0
        %1253 = vadd.xlane.f32.xlu0 %v1252
        %v1254 = vpop.xlane.xlu0 %1253
        %v1255 = vsel %vm823, %v1246, 0.0
        %1256 = vadd.xlane.f32.xlu0 %v1255
        %v1257 = vpop.xlane.xlu0 %1256
        %v1258 = vsel %vm823, %v1248, 0.0
        %1259 = vadd.xlane.f32.xlu0 %v1258
        %v1260 = vpop.xlane.xlu0 %1259
        %v1261 = vpack.c.bf16 %v1242, %v1242
        %v1262 = vpack.c.bf16 %v1244, %v1244
        %v1263 = vpack.c.bf16 %v1246, %v1246
        %v1264 = vpack.c.bf16 %v1248, %v1248
        %v1266 = vsel %vm823, %v1261, 0
        %v1269 = vsel %vm830, %v883, 0
        %1271 = vmatprep.subr.bf16.mxu0 0
        %1272 = vmatpush1.bf16.msra.mxu0 %v1269
        %1273 = vmatprep.subr.bf16.mxu0 0
        %1274 = vmatpush1.bf16.msra.mxu0 0
        %1275 = vmatprep.subr.bf16.mxu0 0
        %1276 = vmatpush1.bf16.msra.mxu0 0
        %1277 = vmatprep.subr.bf16.mxu0 0
        %1278 = vmatpush1.bf16.msra.mxu0 0
        %1279 = vmatprep.subr.bf16.mxu0 0
        %1280 = vmatpush1.bf16.msra.mxu0 0
        %1281 = vmatprep.subr.bf16.mxu0 0
        %1282 = vmatpush1.bf16.msra.mxu0 0
        %1283 = vmatprep.subr.bf16.mxu0 0
        %1284 = vmatpush1.bf16.msra.mxu0 0
        %1285 = vmatprep.subr.bf16.mxu0 0
        %1286 = vmatpush1.bf16.msra.mxu0 0
        %1287 = vmatprep.subr.bf16.mxu0 0
        %1288 = vmatpush1.bf16.msra.mxu0 0
        %1289 = vmatprep.subr.bf16.mxu0 0
        %1290 = vmatpush1.bf16.msra.mxu0 0
        %1291 = vmatprep.subr.bf16.mxu0 0
        %1292 = vmatpush1.bf16.msra.mxu0 0
        %1293 = vmatprep.subr.bf16.mxu0 0
        %1294 = vmatpush1.bf16.msra.mxu0 0
        %1295 = vmatprep.subr.bf16.mxu0 0
        %1296 = vmatpush1.bf16.msra.mxu0 0
        %1297 = vmatprep.subr.bf16.mxu0 0
        %1298 = vmatpush1.bf16.msra.mxu0 0
        %1299 = vmatprep.subr.bf16.mxu0 0
        %1300 = vmatpush1.bf16.msra.mxu0 0
        %1301 = vmatprep.subr.bf16.mxu0 0
        %1302 = vmatpush1.bf16.msra.mxu0 0
        %1303 = vmatprep.mubr.bf16.mxu0 0
        %1304 = vmatmul.mubr.bf16.gmra.mrb[0].mxu0 %v1266
        %v1305 = vpop.f32.mrb[0].mxu0
        %v1306 = vadd.f32 0.0, %v1305
        %v1307 = vpop.f32.mrb[0].mxu0
        %v1308 = vpop.f32.mrb[0].mxu0
        %v1309 = vpop.f32.mrb[0].mxu0
        %1310 = vdwg.mxu0
        %v1312 = vsel %vm823, %v1262, 0
        %v1315 = vsel %vm830, %v884, 0
        %1317 = vmatprep.subr.bf16.mxu0 0
        %1318 = vmatpush1.bf16.msra.mxu0 %v1315
        %1319 = vmatprep.subr.bf16.mxu0 0
        %1320 = vmatpush1.bf16.msra.mxu0 0
        %1321 = vmatprep.subr.bf16.mxu0 0
        %1322 = vmatpush1.bf16.msra.mxu0 0
        %1323 = vmatprep.subr.bf16.mxu0 0
        %1324 = vmatpush1.bf16.msra.mxu0 0
        %1325 = vmatprep.subr.bf16.mxu0 0
        %1326 = vmatpush1.bf16.msra.mxu0 0
        %1327 = vmatprep.subr.bf16.mxu0 0
        %1328 = vmatpush1.bf16.msra.mxu0 0
        %1329 = vmatprep.subr.bf16.mxu0 0
        %1330 = vmatpush1.bf16.msra.mxu0 0
        %1331 = vmatprep.subr.bf16.mxu0 0
        %1332 = vmatpush1.bf16.msra.mxu0 0
        %1333 = vmatprep.subr.bf16.mxu0 0
        %1334 = vmatpush1.bf16.msra.mxu0 0
        %1335 = vmatprep.subr.bf16.mxu0 0
        %1336 = vmatpush1.bf16.msra.mxu0 0
        %1337 = vmatprep.subr.bf16.mxu0 0
        %1338 = vmatpush1.bf16.msra.mxu0 0
        %1339 = vmatprep.subr.bf16.mxu0 0
        %1340 = vmatpush1.bf16.msra.mxu0 0
        %1341 = vmatprep.subr.bf16.mxu0 0
        %1342 = vmatpush1.bf16.msra.mxu0 0
        %1343 = vmatprep.subr.bf16.mxu0 0
        %1344 = vmatpush1.bf16.msra.mxu0 0
        %1345 = vmatprep.subr.bf16.mxu0 0
        %1346 = vmatpush1.bf16.msra.mxu0 0
        %1347 = vmatprep.subr.bf16.mxu0 0
        %1348 = vmatpush1.bf16.msra.mxu0 0
        %1349 = vmatprep.mubr.bf16.mxu0 0
        %1350 = vmatmul.mubr.bf16.gmra.mrb[0].mxu0 %v1312
        %v1351 = vpop.f32.mrb[0].mxu0
        %v1352 = vadd.f32 0.0, %v1351
        %v1353 = vpop.f32.mrb[0].mxu0
        %v1354 = vpop.f32.mrb[0].mxu0
        %v1355 = vpop.f32.mrb[0].mxu0
        %1356 = vdwg.mxu0
        %v1358 = vsel %vm823, %v1263, 0
        %v1361 = vsel %vm830, %v885, 0
        %1363 = vmatprep.subr.bf16.mxu0 0
        %1364 = vmatpush1.bf16.msra.mxu0 %v1361
        %1365 = vmatprep.subr.bf16.mxu0 0
        %1366 = vmatpush1.bf16.msra.mxu0 0
        %1367 = vmatprep.subr.bf16.mxu0 0
        %1368 = vmatpush1.bf16.msra.mxu0 0
        %1369 = vmatprep.subr.bf16.mxu0 0
        %1370 = vmatpush1.bf16.msra.mxu0 0
        %1371 = vmatprep.subr.bf16.mxu0 0
        %1372 = vmatpush1.bf16.msra.mxu0 0
        %1373 = vmatprep.subr.bf16.mxu0 0
        %1374 = vmatpush1.bf16.msra.mxu0 0
        %1375 = vmatprep.subr.bf16.mxu0 0
        %1376 = vmatpush1.bf16.msra.mxu0 0
        %1377 = vmatprep.subr.bf16.mxu0 0
        %1378 = vmatpush1.bf16.msra.mxu0 0
        %1379 = vmatprep.subr.bf16.mxu0 0
        %1380 = vmatpush1.bf16.msra.mxu0 0
        %1381 = vmatprep.subr.bf16.mxu0 0
        %1382 = vmatpush1.bf16.msra.mxu0 0
        %1383 = vmatprep.subr.bf16.mxu0 0
        %1384 = vmatpush1.bf16.msra.mxu0 0
        %1385 = vmatprep.subr.bf16.mxu0 0
        %1386 = vmatpush1.bf16.msra.mxu0 0
        %1387 = vmatprep.subr.bf16.mxu0 0
        %1388 = vmatpush1.bf16.msra.mxu0 0
        %1389 = vmatprep.subr.bf16.mxu0 0
        %1390 = vmatpush1.bf16.msra.mxu0 0
        %1391 = vmatprep.subr.bf16.mxu0 0
        %1392 = vmatpush1.bf16.msra.mxu0 0
        %1393 = vmatprep.subr.bf16.mxu0 0
        %1394 = vmatpush1.bf16.msra.mxu0 0
        %1395 = vmatprep.mubr.bf16.mxu0 0
        %1396 = vmatmul.mubr.bf16.gmra.mrb[0].mxu0 %v1358
        %v1397 = vpop.f32.mrb[0].mxu0
        %v1398 = vadd.f32 0.0, %v1397
        %v1399 = vpop.f32.mrb[0].mxu0
        %v1400 = vpop.f32.mrb[0].mxu0
        %v1401 = vpop.f32.mrb[0].mxu0
        %1402 = vdwg.mxu0
        %v1404 = vsel %vm823, %v1264, 0
        %v1407 = vsel %vm830, %v886, 0
        %1409 = vmatprep.subr.bf16.mxu0 0
        %1410 = vmatpush1.bf16.msra.mxu0 %v1407
        %1411 = vmatprep.subr.bf16.mxu0 0
        %1412 = vmatpush1.bf16.msra.mxu0 0
        %1413 = vmatprep.subr.bf16.mxu0 0
        %1414 = vmatpush1.bf16.msra.mxu0 0
        %1415 = vmatprep.subr.bf16.mxu0 0
        %1416 = vmatpush1.bf16.msra.mxu0 0
        %1417 = vmatprep.subr.bf16.mxu0 0
        %1418 = vmatpush1.bf16.msra.mxu0 0
        %1419 = vmatprep.subr.bf16.mxu0 0
        %1420 = vmatpush1.bf16.msra.mxu0 0
        %1421 = vmatprep.subr.bf16.mxu0 0
        %1422 = vmatpush1.bf16.msra.mxu0 0
        %1423 = vmatprep.subr.bf16.mxu0 0
        %1424 = vmatpush1.bf16.msra.mxu0 0
        %1425 = vmatprep.subr.bf16.mxu0 0
        %1426 = vmatpush1.bf16.msra.mxu0 0
        %1427 = vmatprep.subr.bf16.mxu0 0
        %1428 = vmatpush1.bf16.msra.mxu0 0
        %1429 = vmatprep.subr.bf16.mxu0 0
        %1430 = vmatpush1.bf16.msra.mxu0 0
        %1431 = vmatprep.subr.bf16.mxu0 0
        %1432 = vmatpush1.bf16.msra.mxu0 0
        %1433 = vmatprep.subr.bf16.mxu0 0
        %1434 = vmatpush1.bf16.msra.mxu0 0
        %1435 = vmatprep.subr.bf16.mxu0 0
        %1436 = vmatpush1.bf16.msra.mxu0 0
        %1437 = vmatprep.subr.bf16.mxu0 0
        %1438 = vmatpush1.bf16.msra.mxu0 0
        %1439 = vmatprep.subr.bf16.mxu0 0
        %1440 = vmatpush1.bf16.msra.mxu0 0
        %1441 = vmatprep.mubr.bf16.mxu0 0
        %1442 = vmatmul.mubr.bf16.gmra.mrb[0].mxu0 %v1404
        %v1443 = vpop.f32.mrb[0].mxu0
        %v1444 = vadd.f32 0.0, %v1443
        %v1445 = vpop.f32.mrb[0].mxu0
        %v1446 = vpop.f32.mrb[0].mxu0
        %v1447 = vpop.f32.mrb[0].mxu0
        %1448 = vdwg.mxu0
        %v1449 = vrcp.pop %v1251
        %v1450 = vrcp.pop %v1254
        %v1451 = vrcp.pop %v1257
        %v1452 = vrcp.pop %v1260
        %v1453 = vmul.f32 %v1306, %v1449
        %v1454 = vmul.f32 %v1352, %v1450
        %v1455 = vmul.f32 %v1398, %v1451
        %v1456 = vmul.f32 %v1444, %v1452
        %1457 = vst.msk [vmem:[#allocation2] sm:$0xff] %vm823, %v1453
        %1459 = vrot.lane.b32.xlu0 %v1454, 8
        %v1460 = vpop.permute.xlu0 %1459
        %vm1462 = vcmask 130112
        %1463 = vst.msk [vmem:[#allocation2] sm:$0xff] %vm1462, %v1460
        %1465 = vrot.lane.b32.xlu0 %v1455, 16
        %v1466 = vpop.permute.xlu0 %1465
        %vm1468 = vcmask 195712
        %1469 = vst.msk [vmem:[#allocation2] sm:$0xff] %vm1468, %v1466
        %1471 = vrot.lane.b32.xlu0 %v1456, 24
        %v1472 = vpop.permute.xlu0 %1471
        %vm1474 = vcmask 261312
        %1475 = vst.msk [vmem:[#allocation2] sm:$0xff] %vm1474, %v1472
        %v1476 = vld [vmem:[#allocation2] sm:$0xff]
        %v1477 = vpack.c.bf16 %v1476, %v1476
        %v1478 = vld [vmem:[#allocation14] sm:$0xf]
        %v1479 = vld [vmem:[#allocation14 + $0x4] sm:$0xf]
        %v1480 = vld [vmem:[#allocation14 + $0x8] sm:$0xf]
        %v1481 = vld [vmem:[#allocation14 + $0xc] sm:$0xf]
        %v1482 = vld [vmem:[#allocation15] sm:$0x1]
        %v1484 = vlaneseq
        %v1485 = vshrl.u32 %v1484, 7
        %v1486 = vsub.s32 0, %v1485
        %v1487 = vrot.slane %v1482, %v1486
        %v1493 = vunpack.c.l.b16 %v1478
        %v1494 = vunpack.c.l.b16 %v1479
        %v1495 = vunpack.c.l.b16 %v1480
        %v1496 = vunpack.c.l.b16 %v1481
        %v1497 = vpack.c.b16 %v1494, %v1493
        %v1498 = vpack.c.b16 %v1496, %v1495
        %vm1501 = vcmask 261120
        %v1503 = vsel %vm1501, %v1477, 0
        %1505 = vmatprep.subr.bf16.mxu0 0
        %1506 = vmatpush1.bf16.msra.mxu0 %v1497
        %1507 = vmatprep.subr.bf16.mxu0 0
        %1508 = vmatpush1.bf16.msra.mxu0 %v1498
        %1509 = vmatprep.subr.bf16.mxu0 0
        %1510 = vmatpush1.bf16.msra.mxu0 0
        %1511 = vmatprep.subr.bf16.mxu0 0
        %1512 = vmatpush1.bf16.msra.mxu0 0
        %1513 = vmatprep.subr.bf16.mxu0 0
        %1514 = vmatpush1.bf16.msra.mxu0 0
        %1515 = vmatprep.subr.bf16.mxu0 0
        %1516 = vmatpush1.bf16.msra.mxu0 0
        %1517 = vmatprep.subr.bf16.mxu0 0
        %1518 = vmatpush1.bf16.msra.mxu0 0
        %1519 = vmatprep.subr.bf16.mxu0 0
        %1520 = vmatpush1.bf16.msra.mxu0 0
        %1521 = vmatprep.subr.bf16.mxu0 0
        %1522 = vmatpush1.bf16.msra.mxu0 0
        %1523 = vmatprep.subr.bf16.mxu0 0
        %1524 = vmatpush1.bf16.msra.mxu0 0
        %1525 = vmatprep.subr.bf16.mxu0 0
        %1526 = vmatpush1.bf16.msra.mxu0 0
        %1527 = vmatprep.subr.bf16.mxu0 0
        %1528 = vmatpush1.bf16.msra.mxu0 0
        %1529 = vmatprep.subr.bf16.mxu0 0
        %1530 = vmatpush1.bf16.msra.mxu0 0
        %1531 = vmatprep.subr.bf16.mxu0 0
        %1532 = vmatpush1.bf16.msra.mxu0 0
        %1533 = vmatprep.subr.bf16.mxu0 0
        %1534 = vmatpush1.bf16.msra.mxu0 0
        %1535 = vmatprep.subr.bf16.mxu0 0
        %1536 = vmatpush1.bf16.msra.mxu0 0
        %1537 = vmatprep.mubr.bf16.mxu0 0
        %1538 = vmatmul.mubr.bf16.gmra.mrb[0].mxu0 %v1503
        %v1539 = vpop.f32.mrb[0].mxu0
        %v1540 = vadd.f32 %v1487, %v1539
        %v1541 = vpop.f32.mrb[0].mxu0
        %v1542 = vpop.f32.mrb[0].mxu0
        %v1543 = vpop.f32.mrb[0].mxu0
        %1544 = vdwg.mxu0
        %v1545 = vunpack.c.l.bf16 %v804
        %1546 = vst.msk [vmem:[#allocation2] sm:$0xff] %vm823, %v1545
        %v1547 = vunpack.c.l.bf16 %v805
        %1549 = vrot.lane.b32.xlu0 %v1547, 8
        %v1550 = vpop.permute.xlu0 %1549
        %1552 = vst.msk [vmem:[#allocation2] sm:$0xff] %vm1462, %v1550
        %v1553 = vunpack.c.l.bf16 %v806
        %1555 = vrot.lane.b32.xlu0 %v1553, 16
        %v1556 = vpop.permute.xlu0 %1555
        %1558 = vst.msk [vmem:[#allocation2] sm:$0xff] %vm1468, %v1556
        %v1559 = vunpack.c.l.bf16 %v807
        %1561 = vrot.lane.b32.xlu0 %v1559, 24
        %v1562 = vpop.permute.xlu0 %1561
        %1564 = vst.msk [vmem:[#allocation2] sm:$0xff] %vm1474, %v1562
        %v1565 = vld [vmem:[#allocation2] sm:$0xff]
        %v1566 = vadd.f32 %v1540, %v1565
        %v1567 = vsel %vm1501, %v1566, 0.0
        %1568 = vadd.xlane.f32.xlu0 %v1567
        %v1569 = vpop.xlane.xlu0 %1568
        %v1570 = vrcp.pop 32.0
        %v1571 = vmul.f32 %v1569, %v1570
        %v1572 = vsub.f32 %v1566, %v1571
        %v1573 = vmul.f32 %v1572, %v1572
        %v1574 = vsel %vm1501, %v1573, 0.0
        %1575 = vadd.xlane.f32.xlu0 %v1574
        %v1576 = vpop.xlane.xlu0 %1575
        %v1577 = vmul.f32 %v1576, %v1570
        %v1578 = vadd.f32 %v1577, 1e-05
        %v1579 = vrsqrt.pop %v1578
        %v1580 = vmul.f32 %v1572, %v1579
        %v1581 = vld [vmem:[#allocation17] sm:$0x1]
        %v1583 = vlaneseq
        %v1584 = vshrl.u32 %v1583, 7
        %v1585 = vsub.s32 0, %v1584
        %v1586 = vrot.slane %v1581, %v1585
        %v1588 = vmul.f32 %v1580, %v1586
        %v1589 = vld [vmem:[#allocation18] sm:$0x1]
        %v1591 = vlaneseq
        %v1592 = vshrl.u32 %v1591, 7
        %v1593 = vsub.s32 0, %v1592
        %v1594 = vrot.slane %v1589, %v1593
        %v1596 = vadd.f32 %v1588, %v1594
        %v1597 = vpack.c.bf16 %v1596, %v1596
        %v1598 = vld [vmem:[#allocation20] sm:$0xf]
        %v1599 = vld [vmem:[#allocation20 + $0x4] sm:$0xf]
        %v1600 = vld [vmem:[#allocation20 + $0x8] sm:$0xf]
        %v1601 = vld [vmem:[#allocation20 + $0xc] sm:$0xf]
        %v1602 = vld [vmem:[#allocation21] sm:$0x1]
        %v1604 = vlaneseq
        %v1605 = vshrl.u32 %v1604, 7
        %v1606 = vsub.s32 0, %v1605
        %v1607 = vrot.slane %v1602, %v1606
        %v1613 = vunpack.c.l.b16 %v1598
        %v1614 = vunpack.c.l.b16 %v1599
        %v1615 = vunpack.c.l.b16 %v1600
        %v1616 = vunpack.c.l.b16 %v1601
        %v1617 = vpack.c.b16 %v1614, %v1613
        %v1618 = vpack.c.b16 %v1616, %v1615
        %v1622 = vsel %vm1501, %v1597, 0
        %1624 = vmatprep.subr.bf16.mxu0 0
        %1625 = vmatpush1.bf16.msra.mxu0 %v1617
        %1626 = vmatprep.subr.bf16.mxu0 0
        %1627 = vmatpush1.bf16.msra.mxu0 %v1618
        %1628 = vmatprep.subr.bf16.mxu0 0
        %1629 = vmatpush1.bf16.msra.mxu0 0
        %1630 = vmatprep.subr.bf16.mxu0 0
        %1631 = vmatpush1.bf16.msra.mxu0 0
        %1632 = vmatprep.subr.bf16.mxu0 0
        %1633 = vmatpush1.bf16.msra.mxu0 0
        %1634 = vmatprep.subr.bf16.mxu0 0
        %1635 = vmatpush1.bf16.msra.mxu0 0
        %1636 = vmatprep.subr.bf16.mxu0 0
        %1637 = vmatpush1.bf16.msra.mxu0 0
        %1638 = vmatprep.subr.bf16.mxu0 0
        %1639 = vmatpush1.bf16.msra.mxu0 0
        %1640 = vmatprep.subr.bf16.mxu0 0
        %1641 = vmatpush1.bf16.msra.mxu0 0
        %1642 = vmatprep.subr.bf16.mxu0 0
        %1643 = vmatpush1.bf16.msra.mxu0 0
        %1644 = vmatprep.subr.bf16.mxu0 0
        %1645 = vmatpush1.bf16.msra.mxu0 0
        %1646 = vmatprep.subr.bf16.mxu0 0
        %1647 = vmatpush1.bf16.msra.mxu0 0
        %1648 = vmatprep.subr.bf16.mxu0 0
        %1649 = vmatpush1.bf16.msra.mxu0 0
        %1650 = vmatprep.subr.bf16.mxu0 0
        %1651 = vmatpush1.bf16.msra.mxu0 0
        %1652 = vmatprep.subr.bf16.mxu0 0
        %1653 = vmatpush1.bf16.msra.mxu0 0
        %1654 = vmatprep.subr.bf16.mxu0 0
        %1655 = vmatpush1.bf16.msra.mxu0 0
        %1656 = vmatprep.mubr.bf16.mxu0 0
        %1657 = vmatmul.mubr.bf16.gmra.mrb[0].mxu0 %v1622
        %v1658 = vpop.f32.mrb[0].mxu0
        %v1659 = vadd.f32 %v1607, %v1658
        %v1660 = vpop.f32.mrb[0].mxu0
        %v1661 = vpop.f32.mrb[0].mxu0
        %v1662 = vpop.f32.mrb[0].mxu0
        %1663 = vdwg.mxu0
        %v1664 = vmax.f32 %v1659, 0.0
        %v1665 = vpack.c.bf16 %v1664, %v1664
        %v1666 = vld [vmem:[#allocation23] sm:$0xf]
        %v1667 = vld [vmem:[#allocation23 + $0x4] sm:$0xf]
        %v1668 = vld [vmem:[#allocation23 + $0x8] sm:$0xf]
        %v1669 = vld [vmem:[#allocation23 + $0xc] sm:$0xf]
        %v1670 = vld [vmem:[#allocation23 + $0x10] sm:$0xf]
        %v1671 = vld [vmem:[#allocation23 + $0x14] sm:$0xf]
        %v1672 = vld [vmem:[#allocation23 + $0x18] sm:$0xf]
        %v1673 = vld [vmem:[#allocation23 + $0x1c] sm:$0xf]
        %v1674 = vld [vmem:[#allocation23 + $0x20] sm:$0xf]
        %v1675 = vld [vmem:[#allocation23 + $0x24] sm:$0xf]
        %v1676 = vld [vmem:[#allocation23 + $0x28] sm:$0xf]
        %v1677 = vld [vmem:[#allocation23 + $0x2c] sm:$0xf]
        %v1678 = vld [vmem:[#allocation23 + $0x30] sm:$0xf]
        %v1679 = vld [vmem:[#allocation23 + $0x34] sm:$0xf]
        %v1680 = vld [vmem:[#allocation23 + $0x38] sm:$0xf]
        %v1681 = vld [vmem:[#allocation23 + $0x3c] sm:$0xf]
        %v1682 = vld [vmem:[#allocation24] sm:$0x1]
        %v1684 = vlaneseq
        %v1685 = vshrl.u32 %v1684, 7
        %v1686 = vsub.s32 0, %v1685
        %v1687 = vrot.slane %v1682, %v1686
        %v1705 = vunpack.c.l.b16 %v1666
        %v1706 = vunpack.c.l.b16 %v1667
        %v1707 = vunpack.c.l.b16 %v1668
        %v1708 = vunpack.c.l.b16 %v1669
        %v1709 = vunpack.c.l.b16 %v1670
        %v1710 = vunpack.c.l.b16 %v1671
        %v1711 = vunpack.c.l.b16 %v1672
        %v1712 = vunpack.c.l.b16 %v1673
        %v1713 = vunpack.c.l.b16 %v1674
        %v1714 = vunpack.c.l.b16 %v1675
        %v1715 = vunpack.c.l.b16 %v1676
        %v1716 = vunpack.c.l.b16 %v1677
        %v1717 = vunpack.c.l.b16 %v1678
        %v1718 = vunpack.c.l.b16 %v1679
        %v1719 = vunpack.c.l.b16 %v1680
        %v1720 = vunpack.c.l.b16 %v1681
        %v1721 = vpack.c.b16 %v1706, %v1705
        %v1722 = vpack.c.b16 %v1708, %v1707
        %v1723 = vpack.c.b16 %v1710, %v1709
        %v1724 = vpack.c.b16 %v1712, %v1711
        %v1725 = vpack.c.b16 %v1714, %v1713
        %v1726 = vpack.c.b16 %v1716, %v1715
        %v1727 = vpack.c.b16 %v1718, %v1717
        %v1728 = vpack.c.b16 %v1720, %v1719
        %1737 = vmatprep.subr.bf16.mxu0 0
        %1738 = vmatpush1.bf16.msra.mxu0 %v1721
        %1739 = vmatprep.subr.bf16.mxu0 0
        %1740 = vmatpush1.bf16.msra.mxu0 %v1722
        %1741 = vmatprep.subr.bf16.mxu0 0
        %1742 = vmatpush1.bf16.msra.mxu0 %v1723
        %1743 = vmatprep.subr.bf16.mxu0 0
        %1744 = vmatpush1.bf16.msra.mxu0 %v1724
        %1745 = vmatprep.subr.bf16.mxu0 0
        %1746 = vmatpush1.bf16.msra.mxu0 %v1725
        %1747 = vmatprep.subr.bf16.mxu0 0
        %1748 = vmatpush1.bf16.msra.mxu0 %v1726
        %1749 = vmatprep.subr.bf16.mxu0 0
        %1750 = vmatpush1.bf16.msra.mxu0 %v1727
        %1751 = vmatprep.subr.bf16.mxu0 0
        %1752 = vmatpush1.bf16.msra.mxu0 %v1728
        %1753 = vmatprep.subr.bf16.mxu0 0
        %1754 = vmatpush1.bf16.msra.mxu0 0
        %1755 = vmatprep.subr.bf16.mxu0 0
        %1756 = vmatpush1.bf16.msra.mxu0 0
        %1757 = vmatprep.subr.bf16.mxu0 0
        %1758 = vmatpush1.bf16.msra.mxu0 0
        %1759 = vmatprep.subr.bf16.mxu0 0
        %1760 = vmatpush1.bf16.msra.mxu0 0
        %1761 = vmatprep.subr.bf16.mxu0 0
        %1762 = vmatpush1.bf16.msra.mxu0 0
        %1763 = vmatprep.subr.bf16.mxu0 0
        %1764 = vmatpush1.bf16.msra.mxu0 0
        %1765 = vmatprep.subr.bf16.mxu0 0
        %1766 = vmatpush1.bf16.msra.mxu0 0
        %1767 = vmatprep.subr.bf16.mxu0 0
        %1768 = vmatpush1.bf16.msra.mxu0 0
        %1769 = vmatprep.mubr.bf16.mxu0 0
        %1770 = vmatmul.mubr.bf16.gmra.mrb[0].mxu0 %v1665
        %v1771 = vpop.f32.mrb[0].mxu0
        %v1772 = vadd.f32 %v1687, %v1771
        %v1773 = vpop.f32.mrb[0].mxu0
        %v1774 = vpop.f32.mrb[0].mxu0
        %v1775 = vpop.f32.mrb[0].mxu0
        %1776 = vdwg.mxu0
        %v1777 = vadd.f32 %v1772, %v1596
        %v1778 = vsel %vm1501, %v1777, 0.0
        %1779 = vadd.xlane.f32.xlu0 %v1778
        %v1780 = vpop.xlane.xlu0 %1779
        %v1781 = vmul.f32 %v1780, %v1570
        %v1782 = vsub.f32 %v1777, %v1781
        %v1783 = vmul.f32 %v1782, %v1782
        %v1784 = vsel %vm1501, %v1783, 0.0
        %1785 = vadd.xlane.f32.xlu0 %v1784
        %v1786 = vpop.xlane.xlu0 %1785
        %v1787 = vmul.f32 %v1786, %v1570
        %v1788 = vadd.f32 %v1787, 1e-05
        %v1789 = vrsqrt.pop %v1788
        %v1790 = vmul.f32 %v1782, %v1789
        %v1791 = vld [vmem:[#allocation26] sm:$0x1]
        %v1793 = vlaneseq
        %v1794 = vshrl.u32 %v1793, 7
        %v1795 = vsub.s32 0, %v1794
        %v1796 = vrot.slane %v1791, %v1795
        %v1798 = vmul.f32 %v1790, %v1796
        %v1799 = vld [vmem:[#allocation27] sm:$0x1]
        %v1801 = vlaneseq
        %v1802 = vshrl.u32 %v1801, 7
        %v1803 = vsub.s32 0, %v1802
        %v1804 = vrot.slane %v1799, %v1803
        %v1806 = vadd.f32 %v1798, %v1804
        %1807 = vst.msk [vmem:[%s802] sm:$0xff] %vm1501, %v1806
        %s1808 = sand.u32 %s418, 1
        %s1809 = scalar_lea.sflag [#allocation5], %s1808
        %s1810 = sand.u32 %s418, 1
        %s1811 = smul.addr %s1810, 8
        %s1812 = scalar_lea.vmem [#allocation29], %s1811
        // Predicated region
        $region149: #{tpu_custom_call.1} parent=83 // pred_check
          %p1813 = pneg %p428
        $region150: #{tpu_custom_call.1} parent=83 // pred_check_branch
          %1815 = sbr.rel (%p1813) target = $region152
        $region151: #{tpu_custom_call.1} parent=83 // pred_region
          %s1817 = ssub.s32 128, 128
          %1818 = vsyncadd %s1809, %s1817
          %s1819 = sadd.s32 %s48, %s47
          %s1820 = smul.addr %s1819, 128
          %s1821 = scalar_lea.hbm %s16, %s1820
          %s1823 = sshll.u32 %s1812, 4
          %s1824 = int_to_ptr.vmem [resolvable:$true] %s1823
          %1826 = dma.vmem_to_hbm [thread:$0]  %s1824, 128, %s1821, %s1809
        $region152: #{tpu_custom_call.1} parent=83 // pred_fallthru
          _
      $region84: #{tpu_custom_call.1} parent=5 // pred_fallthru
        _
      %p1827 = scmp.le.s32.totalorder 2, %s38
      // Predicated region
      $region153: #{tpu_custom_call.1} parent=5 // pred_check
        %p1828 = pneg %p1827
      $region154: #{tpu_custom_call.1} parent=5 // pred_check_branch
        %1830 = sbr.rel (%p1828) target = $region156
      $region155: #{tpu_custom_call.1} parent=5 // pred_region
        %s1831 = ssub.s32 %s38, 2
        // Predicated region
        $region157: #{tpu_custom_call.1} parent=155 // pred_check
          %p1832 = pneg %p434
        $region158: #{tpu_custom_call.1} parent=155 // pred_check_branch
          %1834 = sbr.rel (%p1832) target = $region160
        $region159: #{tpu_custom_call.1} parent=155 // pred_region
          %s1835 = sand.u32 %s419, 1
          %s1836 = scalar_lea.sflag [#allocation5], %s1835
          %s1837 = sand.u32 %s419, 1
          %s1838 = smul.addr %s1837, 8
          %s1839 = scalar_lea.vmem [#allocation29], %s1838
          %1840 = dma.done %s1836, 128
        $region160: #{tpu_custom_call.1} parent=155 // pred_fallthru
          _
      $region156: #{tpu_custom_call.1} parent=5 // pred_fallthru
        _
    $region6: #{tpu_custom_call.1} parent=1 // loop_footer
      %s42 = sadd.s32 1, %s38
    $region7: #{tpu_custom_call.1} parent=1 // loop_footer_branch
      %37 = sbr.rel target = $region3
    $region8: #{tpu_custom_call.1} parent=1 // loop_exit
      _
    %1841 = vsyncpa [#allocation4], 1
    %s1842 = scalar_lea.sflag [#allocation4], 1
    %1843 = vsyncpa %s1842, 1
    %1844 = vsyncpa [#allocation7], 1
    %s1845 = scalar_lea.sflag [#allocation7], 1
    %1846 = vsyncpa %s1845, 1
    %1847 = vsyncpa [#allocation10], 1
    %1848 = vsyncpa [#allocation13], 1
    %1849 = vsyncpa [#allocation16], 1
    %1850 = vsyncpa [#allocation19], 1
    %1851 = vsyncpa [#allocation22], 1
    %1852 = vsyncpa [#allocation25], 1
    %1853 = vsyncpa [#allocation28], 1
    %1854 = vsyncpa [#allocation5], 1
    %s1855 = scalar_lea.sflag [#allocation5], 1
    %1856 = vsyncpa %s1855, 1

</llo_original>
